<compile_context>
chip_gen: v7x
topology: tpu7x:2x2x1
jax: 0.10.0
libtpu: 0.0.40
codegen_flags: <defaults>
</compile_context>

<pallas_src>
import functools
import math

import jax
import jax.numpy as jnp
from jax.experimental import pallas as pl
from jax.experimental.pallas import tpu as pltpu


# Attention probabilities emitted in bf16 (halves HBM writeback, biggest win on v5e).
# Switch to jnp.float32 if an exact-f32 softmax output is required.
_PROBS_DTYPE = jnp.bfloat16


@functools.lru_cache(maxsize=None)
def _vmem_limit_bytes():
    """Generation-aware scoped-VMEM budget (~0.75x physical VMEM capacity)."""
    try:
        cap = getattr(pltpu.get_tpu_info(), "vmem_capacity_bytes", None)
    except Exception:
        cap = None
    if not cap:
        return 32 * 1024 * 1024            # conservative fallback, safe on every generation
    return int(min(cap * 3 // 4, 100 * 1024 * 1024))   # 48 MiB on v7x, 96 MiB on v5e/v6e


def _pick_tile(dim, target, unit):
    """Largest multiple of `unit` that divides `dim` and is <= target; else full dim."""
    if dim <= target:
        return dim
    t = (target // unit) * unit
    while t >= unit:
        if dim % t == 0:
            return t
        t -= unit
    return dim


def _pick_row_tile(dim, target):
    # bf16 packs 16 rows per sublane group -> prefer 16-row-aligned tiles.
    return _pick_tile(dim, target, 16 if dim % 16 == 0 else 8)


# --------------------------------------------------------------------------
# Linear: tiled matmul with K-accumulation, fused bias (+ReLU) (+residual add)
# --------------------------------------------------------------------------
def _linear_kernel(*refs, activation, has_residual):
    if has_residual:
        x_ref, w_ref, b_ref, r_ref, o_ref, acc_ref = refs
    else:
        x_ref, w_ref, b_ref, o_ref, acc_ref = refs
        r_ref = None

    @pl.when(pl.program_id(2) == 0)
    def _():
        acc_ref[...] = jnp.zeros_like(acc_ref)

    acc_ref[...] += jnp.dot(x_ref[...], w_ref[...],
                            preferred_element_type=jnp.float32)

    @pl.when(pl.program_id(2) == pl.num_programs(2) - 1)
    def _():
        y = acc_ref[...] + b_ref[...].astype(jnp.float32)
        if activation == "relu":
            y = jnp.maximum(y, 0.0)
        if has_residual:
            y = y + r_ref[...].astype(jnp.float32)
        o_ref[...] = y.astype(o_ref.dtype)


def linear(x, w, b, activation=None, residual=None, out_dtype=jnp.bfloat16):
    # x: (M, K) bf16, w: (K, N) bf16, b: (1, N) f32, residual: optional (M, N)
    M, K = x.shape
    N = w.shape[1]
    tm = _pick_row_tile(M, 512)
    tn = _pick_tile(N, 512, 128)
    tk = _pick_tile(K, 1024, 128)
    grid = (M // tm, N // tn, K // tk)
    has_residual = residual is not None

    in_specs = [
        pl.BlockSpec((tm, tk), lambda i, j, k: (i, k)),
        pl.BlockSpec((tk, tn), lambda i, j, k: (k, j)),
        pl.BlockSpec((1, tn), lambda i, j, k: (0, j)),
    ]
    inputs = [x.astype(jnp.bfloat16), w.astype(jnp.bfloat16), b.astype(jnp.float32)]
    if has_residual:
        # Block index constant across k -> fetched once per (i, j) output tile.
        in_specs.append(pl.BlockSpec((tm, tn), lambda i, j, k: (i, j)))
        inputs.append(residual)

    return pl.pallas_call(
        functools.partial(_linear_kernel, activation=activation,
                          has_residual=has_residual),
        out_shape=jax.ShapeDtypeStruct((M, N), out_dtype),
        grid=grid,
        in_specs=in_specs,
        out_specs=pl.BlockSpec((tm, tn), lambda i, j, k: (i, j)),
        scratch_shapes=[pltpu.VMEM((tm, tn), jnp.float32)],
        compiler_params=pltpu.CompilerParams(
            dimension_semantics=("parallel", "parallel", "arbitrary"),
            vmem_limit_bytes=_vmem_limit_bytes()),
    )(*inputs)


# --------------------------------------------------------------------------
# Fused feed-forward: relu(x@W1 + b1) @ W2 + b2 (+ residual), d_ff chunked in-kernel
# --------------------------------------------------------------------------
def _ffn_kernel(*refs, dff_chunk, n_chunks, has_residual):
    if has_residual:
        x_ref, w1_ref, b1_ref, w2_ref, b2_ref, r_ref, o_ref = refs
    else:
        x_ref, w1_ref, b1_ref, w2_ref, b2_ref, o_ref = refs
        r_ref = None
    x = x_ref[...]
    acc = jnp.zeros((x.shape[0], o_ref.shape[-1]), jnp.float32)
    # Chunk d_ff so the (tm, chunk) intermediate stays small instead of one big
    # (tm, d_ff) live range (static unroll: all indices are compile-time constants).
    for c in range(n_chunks):
        lo = c * dff_chunk
        h = jnp.dot(x, w1_ref[:, lo:lo + dff_chunk],
                    preferred_element_type=jnp.float32)
        h = h + b1_ref[:, lo:lo + dff_chunk].astype(jnp.float32)
        h = jnp.maximum(h, 0.0).astype(jnp.bfloat16)   # bf16 feed to second MXU matmul
        acc = acc + jnp.dot(h, w2_ref[lo:lo + dff_chunk, :],
                            preferred_element_type=jnp.float32)
    y = acc + b2_ref[...].astype(jnp.float32)
    if has_residual:
        y = y + r_ref[...].astype(jnp.float32)
    o_ref[...] = y.astype(o_ref.dtype)


def ffn(p, x2d, residual=None):
    M, D = x2d.shape
    dff = p["ff1"]["w"].shape[1]
    tm = _pick_row_tile(M, 512)
    dff_chunk = _pick_tile(dff, 512, 128)
    n_chunks = dff // dff_chunk
    vlim = _vmem_limit_bytes()
    has_residual = residual is not None

    # VMEM footprint of the fused path: double-buffered weights and activation tiles,
    # f32 output accumulator, and the f32+bf16 intermediate chunk.
    n_act_tiles = 3 if has_residual else 2
    fused_bytes = (2 * 2 * (2 * D * dff)            # bf16 W1+W2, double-buffered
                   + n_act_tiles * 2 * tm * D * 2   # x / out (/ residual) tiles, double-buffered
                   + tm * D * 4                     # f32 output accumulator
                   + tm * dff_chunk * 6)            # f32 + bf16 intermediate chunk
    if fused_bytes > vlim // 2:
        # Fallback: two tiled linears (residual fused into the second one's epilogue).
        h = linear(x2d, p["ff1"]["w"], p["ff1"]["b"], activation="relu")
        return linear(h, p["ff2"]["w"], p["ff2"]["b"], residual=residual)

    in_specs = [
        pl.BlockSpec((tm, D), lambda i: (i, 0)),
        pl.BlockSpec((D, dff), lambda i: (0, 0)),
        pl.BlockSpec((1, dff), lambda i: (0, 0)),
        pl.BlockSpec((dff, D), lambda i: (0, 0)),
        pl.BlockSpec((1, D), lambda i: (0, 0)),
    ]
    inputs = [x2d.astype(jnp.bfloat16),
              p["ff1"]["w"].astype(jnp.bfloat16), p["ff1"]["b"].astype(jnp.float32),
              p["ff2"]["w"].astype(jnp.bfloat16), p["ff2"]["b"].astype(jnp.float32)]
    if has_residual:
        in_specs.append(pl.BlockSpec((tm, D), lambda i: (i, 0)))
        inputs.append(residual)

    # TODO(synk): weight/bias blocks have constant index maps; single-buffering them
    # (pipeline_mode=pl.Buffered(1)) would halve resident-weight VMEM once that path
    # is verified stable on all target jax versions.
    return pl.pallas_call(
        functools.partial(_ffn_kernel, dff_chunk=dff_chunk, n_chunks=n_chunks,
                          has_residual=has_residual),
        out_shape=jax.ShapeDtypeStruct((M, D), jnp.bfloat16),
        grid=(M // tm,),
        in_specs=in_specs,
        out_specs=pl.BlockSpec((tm, D), lambda i: (i, 0)),
        compiler_params=pltpu.CompilerParams(
            dimension_semantics=("parallel",),
            vmem_limit_bytes=vlim),
    )(*inputs)


# --------------------------------------------------------------------------
# LayerNorm (residual add is fused into the producing linear/FFN epilogue)
# --------------------------------------------------------------------------
def _ln_kernel(x_ref, g_ref, b_ref, o_ref, *, eps):
    h = x_ref[...].astype(jnp.float32)
    mu = jnp.mean(h, axis=-1, keepdims=True)
    var = jnp.mean((h - mu) ** 2, axis=-1, keepdims=True)
    n = (h - mu) * jax.lax.rsqrt(var + eps)
    o_ref[...] = (n * g_ref[...] + b_ref[...]).astype(o_ref.dtype)


def layernorm(x, gamma, beta, eps=1e-5):
    M, D = x.shape
    tm = _pick_row_tile(M, 2048)   # HBM-bound: big row tiles amortize per-step overhead
    return pl.pallas_call(
        functools.partial(_ln_kernel, eps=eps),
        out_shape=jax.ShapeDtypeStruct((M, D), jnp.bfloat16),
        grid=(M // tm,),
        in_specs=[
            pl.BlockSpec((tm, D), lambda i: (i, 0)),
            pl.BlockSpec((1, D), lambda i: (0, 0)),
            pl.BlockSpec((1, D), lambda i: (0, 0)),
        ],
        out_specs=pl.BlockSpec((tm, D), lambda i: (i, 0)),
        compiler_params=pltpu.CompilerParams(
            dimension_semantics=("parallel",),
            vmem_limit_bytes=_vmem_limit_bytes()),
    )(x, gamma.astype(jnp.float32), beta.astype(jnp.float32))


# --------------------------------------------------------------------------
# Multi-head attention core: grid over (batch*head, q-tiles), head-major slabs
# --------------------------------------------------------------------------
def _mha_kernel(*refs, scale, causal, has_mask, tq):
    if has_mask:
        q_ref, k_ref, v_ref, m_ref, o_ref, p_ref = refs
    else:
        q_ref, k_ref, v_ref, o_ref, p_ref = refs
        m_ref = None

    q = q_ref[0]                               # (tq, Dh) bf16
    k = k_ref[0]                               # (Sk, Dh) bf16
    v = v_ref[0]                               # (Sk, Dh) bf16

    s = jax.lax.dot_general(q, k, (((1,), (1,)), ((), ())),
                            preferred_element_type=jnp.float32) * scale   # (tq, Sk)
    if causal:
        q0 = pl.program_id(1) * tq
        rows = jax.lax.broadcasted_iota(jnp.int32, s.shape, 0) + q0
        cols = jax.lax.broadcasted_iota(jnp.int32, s.shape, 1)
        s = jnp.where(rows >= cols, s, -1e9)
    elif has_mask:
        s = s + m_ref[...].astype(jnp.float32)

    s_max = jnp.max(s, axis=-1, keepdims=True)
    e = jnp.exp(s - s_max)
    denom = jnp.sum(e, axis=-1, keepdims=True)
    p = e / denom                              # exact divide: probability rows sum to 1
    o = jnp.dot(p.astype(v.dtype), v, preferred_element_type=jnp.float32)

    # Eager per-(head, q-tile) stores: no list accumulation / concat / stack.
    o_ref[0] = o.astype(o_ref.dtype)
    p_ref[0] = p.astype(p_ref.dtype)


def mha_core(q, k, v, mask):
    # q: (B*H, Sq, Dh), k/v: (B*H, Sk, Dh)  -> out (B*H, Sq, Dh), probs (B*H, Sq, Sk)
    BH, Sq, Dh = q.shape
    Sk = k.shape[1]
    tq = _pick_row_tile(Sq, 256)
    causal = isinstance(mask, str) and mask == "causal"
    has_mask = (mask is not None) and (not causal)

    inputs = [q, k, v]
    in_specs = [
        pl.BlockSpec((1, tq, Dh), lambda bh, qi: (bh, qi, 0)),
        pl.BlockSpec((1, Sk, Dh), lambda bh, qi: (bh, 0, 0)),
        pl.BlockSpec((1, Sk, Dh), lambda bh, qi: (bh, 0, 0)),
    ]
    if has_mask:
        # TODO(synk): only a shared additive (Sq, Sk) mask is supported here; per-batch
        # boolean padding masks would need an extra (B, Sq, Sk) input.
        m = jnp.asarray(mask, jnp.float32)
        inputs.append(m)
        in_specs.append(pl.BlockSpec((tq, Sk), lambda bh, qi: (qi, 0)))

    scale = 1.0 / math.sqrt(Dh)
    # TODO(synk): for long Sk, tile Sk with online softmax and skip fully-masked causal
    # key tiles — incompatible with returning the full attention-probability tensor.
    out, probs = pl.pallas_call(
        functools.partial(_mha_kernel, scale=scale, causal=causal,
                          has_mask=has_mask, tq=tq),
        out_shape=(jax.ShapeDtypeStruct((BH, Sq, Dh), jnp.bfloat16),
                   jax.ShapeDtypeStruct((BH, Sq, Sk), _PROBS_DTYPE)),
        grid=(BH, Sq // tq),
        in_specs=in_specs,
        out_specs=(pl.BlockSpec((1, tq, Dh), lambda bh, qi: (bh, qi, 0)),
                   pl.BlockSpec((1, tq, Sk), lambda bh, qi: (bh, qi, 0))),
        compiler_params=pltpu.CompilerParams(
            dimension_semantics=("parallel", "parallel"),
            vmem_limit_bytes=_vmem_limit_bytes()),
    )(*inputs)
    return out, probs


def _to_head_major(x, B, S, n_heads):
    # (B, S, n_heads, Dh) -> (B*H, S, Dh); DMA-side head slicing for the attention kernel.
    return x.transpose(0, 2, 1, 3).reshape(B * n_heads, S, x.shape[-1])


def _merge_heads(x, B, n_heads):
    # (B*H, S, Dh) -> (B*S, H*Dh)
    BH, S, Dh = x.shape
    return x.reshape(B, n_heads, S, Dh).transpose(0, 2, 1, 3).reshape(B * S, n_heads * Dh)


def multi_head_self_attention(p, x, mask, n_heads, residual):
    B, S, D = x.shape
    Dh = D // n_heads
    # Fused QKV projection: one read of x, one (B*S, 3D) write.
    qkv = linear(x.reshape(B * S, D), p["wqkv"]["w"], p["wqkv"]["b"])
    qkv = qkv.reshape(B, S, 3, n_heads, Dh)
    q = _to_head_major(qkv[:, :, 0], B, S, n_heads)
    k = _to_head_major(qkv[:, :, 1], B, S, n_heads)
    v = _to_head_major(qkv[:, :, 2], B, S, n_heads)
    out, probs = mha_core(q, k, v, mask)
    out = linear(_merge_heads(out, B, n_heads), p["wo"]["w"], p["wo"]["b"],
                 residual=residual)                        # residual fused into epilogue
    return out, probs.reshape(B, n_heads, S, S)


def multi_head_cross_attention(p, x_q, x_kv, mask, n_heads, residual):
    B, Sq, D = x_q.shape
    Sk = x_kv.shape[1]
    Dh = D // n_heads
    q = linear(x_q.reshape(B * Sq, D), p["wq"]["w"], p["wq"]["b"])
    kv = linear(x_kv.reshape(B * Sk, D), p["wkv"]["w"], p["wkv"]["b"])
    q = _to_head_major(q.reshape(B, Sq, n_heads, Dh), B, Sq, n_heads)
    kv = kv.reshape(B, Sk, 2, n_heads, Dh)
    k = _to_head_major(kv[:, :, 0], B, Sk, n_heads)
    v = _to_head_major(kv[:, :, 1], B, Sk, n_heads)
    out, probs = mha_core(q, k, v, mask)
    out = linear(_merge_heads(out, B, n_heads), p["wo"]["w"], p["wo"]["b"],
                 residual=residual)
    return out, probs.reshape(B, n_heads, Sq, Sk)


# --------------------------------------------------------------------------
# Model glue (plain JAX): embeddings, layer wiring, parameter init
# --------------------------------------------------------------------------
def sinusoidal_pe(max_len, d):
    pos = jnp.arange(max_len, dtype=jnp.float32)[:, None]
    i = jnp.arange(0, d, 2, dtype=jnp.float32)
    div = jnp.exp(-math.log(10000.0) * i / d)
    pe = jnp.zeros((max_len, d), jnp.float32)
    pe = pe.at[:, 0::2].set(jnp.sin(pos * div))
    pe = pe.at[:, 1::2].set(jnp.cos(pos * div))
    return pe


def embed(table, tokens, pe):
    # TODO(synk): data-dependent token gather stays in plain JAX (would need a manual DMA gather).
    d = table.shape[1]
    S = tokens.shape[1]
    x = jnp.take(table, tokens, axis=0) * math.sqrt(d) + pe[None, :S, :]
    return x.astype(jnp.bfloat16)   # dropout in the reference is identity in eval mode


def encoder_layer(p, x, mask, n_heads):
    B, S, D = x.shape
    x2d = x.reshape(B * S, D)
    attn_res, probs = multi_head_self_attention(p["attn"], x, mask, n_heads, residual=x2d)
    h1 = layernorm(attn_res, p["ln1"]["g"], p["ln1"]["b"])
    ff_res = ffn(p, h1, residual=h1)
    h2 = layernorm(ff_res, p["ln2"]["g"], p["ln2"]["b"])
    return h2.reshape(B, S, D), probs


def decoder_layer(p, x, enc, self_mask, n_heads):
    B, S, D = x.shape
    x2d = x.reshape(B * S, D)
    self_res, _ = multi_head_self_attention(p["self_attn"], x, self_mask, n_heads, residual=x2d)
    h1 = layernorm(self_res, p["ln1"]["g"], p["ln1"]["b"])
    cross_res, cross_probs = multi_head_cross_attention(
        p["cross_attn"], h1.reshape(B, S, D), enc, None, n_heads, residual=h1)
    h2 = layernorm(cross_res, p["ln2"]["g"], p["ln2"]["b"])
    ff_res = ffn(p, h2, residual=h2)
    h3 = layernorm(ff_res, p["ln3"]["g"], p["ln3"]["b"])
    return h3.reshape(B, S, D), cross_probs


def vanilla_transformer_forward(params, x_tokens, target_tokens,
                                encoder_mask=None, decoder_mask=None, *, n_heads):
    # ---- encode ----
    e = embed(params["enc_emb"], x_tokens, params["pe"])
    enc_attns = []
    for lp in params["encoder"]:
        e, a = encoder_layer(lp, e, encoder_mask, n_heads)
        enc_attns.append(a)
    # ---- decode ----
    d = embed(params["dec_emb"], target_tokens, params["pe"])
    dec_attns = []
    for lp in params["decoder"]:
        d, a = decoder_layer(lp, d, e, decoder_mask, n_heads)
        dec_attns.append(a)
    B, S, D = d.shape
    logits = linear(d.reshape(B * S, D), params["out"]["w"], params["out"]["b"],
                    out_dtype=jnp.float32).reshape(B, S, -1)
    attention = {"encoder": jnp.stack(enc_attns), "decoder": jnp.stack(dec_attns)}
    return logits, attention


# --------------------------------------------------------------------------
# Deterministic parameter init (weights bf16; biases / LN / tables f32)
# --------------------------------------------------------------------------
def _init_linear(key, din, dout):
    w = (jax.random.normal(key, (din, dout), jnp.float32) * 0.02).astype(jnp.bfloat16)
    return {"w": w, "b": jnp.zeros((1, dout), jnp.float32)}


def _init_ln(d):
    return {"g": jnp.ones((1, d), jnp.float32), "b": jnp.zeros((1, d), jnp.float32)}


def _init_self_attn(key, d):
    ks = jax.random.split(key, 2)
    return {"wqkv": _init_linear(ks[0], d, 3 * d), "wo": _init_linear(ks[1], d, d)}


def _init_cross_attn(key, d):
    # q / kv weights stored pre-split (avoids per-call weight slicing inside the jit).
    ks = jax.random.split(key, 3)
    return {"wq": _init_linear(ks[0], d, d),
            "wkv": _init_linear(ks[1], d, 2 * d),
            "wo": _init_linear(ks[2], d, d)}


def init_params(key, cfg):
    d, dff = cfg["d_embed"], cfg["d_ff"]
    keys = jax.random.split(key, 4 + 2 * cfg["n_layers"])
    params = {
        "enc_emb": jax.random.normal(keys[0], (cfg["input_vocab_size"], d), jnp.float32) * 0.02,
        "dec_emb": jax.random.normal(keys[1], (cfg["output_vocab_size"], d), jnp.float32) * 0.02,
        "pe": sinusoidal_pe(cfg["max_len"], d),
        "out": _init_linear(keys[2], d, cfg["output_vocab_size"]),
        "encoder": [],
        "decoder": [],
    }
    for li in range(cfg["n_layers"]):
        ek = jax.random.split(keys[3 + li], 3)
        params["encoder"].append({
            "attn": _init_self_attn(ek[0], d),
            "ff1": _init_linear(ek[1], d, dff), "ff2": _init_linear(ek[2], dff, d),
            "ln1": _init_ln(d), "ln2": _init_ln(d),
        })
        dk = jax.random.split(keys[3 + cfg["n_layers"] + li], 4)
        params["decoder"].append({
            "self_attn": _init_self_attn(dk[0], d), "cross_attn": _init_cross_attn(dk[1], d),
            "ff1": _init_linear(dk[2], d, dff), "ff2": _init_linear(dk[3], dff, d),
            "ln1": _init_ln(d), "ln2": _init_ln(d), "ln3": _init_ln(d),
        })
    return params


# --------------------------------------------------------------------------
if __name__ == "__main__":
    cfg = dict(d_embed=32, n_heads=4, d_ff=64, n_layers=2,
               input_vocab_size=50, output_vocab_size=40, max_len=16)
    key = jax.random.PRNGKey(0)
    pkey, xkey, tkey = jax.random.split(key, 3)
    params = init_params(pkey, cfg)

    B, S_in, S_out = 2, 8, 8
    x = jax.random.randint(xkey, (B, S_in), 0, cfg["input_vocab_size"], dtype=jnp.int32)
    targets = jax.random.randint(tkey, (B, S_out), 0, cfg["output_vocab_size"], dtype=jnp.int32)

    # Causal decoder self-attention mask is generated inside the attention kernel
    # (no mask array is materialized or DMA'd); encoder runs unmasked.
    fwd = jax.jit(functools.partial(vanilla_transformer_forward,
                                    n_heads=cfg["n_heads"],
                                    encoder_mask=None,
                                    decoder_mask="causal"))
    logits, attention = fwd(params, x, targets)
    jax.block_until_ready(logits)

    assert logits.shape == (B, S_out, cfg["output_vocab_size"])
    assert attention["encoder"].shape == (cfg["n_layers"], B, cfg["n_heads"], S_in, S_in)
    assert attention["decoder"].shape == (cfg["n_layers"], B, cfg["n_heads"], S_out, S_in)
    assert bool(jnp.all(jnp.isfinite(logits)))
    print("KERNEL_OK")
</pallas_src>

<mosaic_0001>
module attributes {stable_mosaic.version = 11 : i64} {
  func.func @_linear_kernel(%arg0: i32, %arg1: i32, %arg2: i32, %arg3: memref<16x32xbf16, #tpu.memory_space<vmem>>, %arg4: memref<32x96xbf16, #tpu.memory_space<vmem>>, %arg5: memref<1x96xf32, #tpu.memory_space<vmem>>, %arg6: memref<16x96xbf16, #tpu.memory_space<vmem>>, %arg7: memref<16x96xf32, #tpu.memory_space<vmem>>) attributes {dimension_semantics = [#tpu.dimension_semantics<parallel>, #tpu.dimension_semantics<parallel>, #tpu.dimension_semantics<arbitrary>], iteration_bounds = array<i64: 1, 1, 1>, scalar_prefetch = 0 : i64, scratch_operands = 1 : i64, tpu.core_type = #tpu.core_type<tc>, window_params = [{transform_indices = @transform_0, window_bounds = array<i64: 16, 32>}, {transform_indices = @transform_1, window_bounds = array<i64: 32, 96>}, {transform_indices = @transform_2, window_bounds = array<i64: 1, 96>}, {transform_indices = @transform_3, window_bounds = array<i64: 16, 96>}]} {
    %c0_i32 = arith.constant 0 : i32
    %0 = arith.cmpi eq, %arg2, %c0_i32 : i32
    %1 = arith.extui %0 : i1 to i32
    %c0_i32_0 = arith.constant 0 : i32
    %2 = arith.cmpi ne, %1, %c0_i32_0 : i32
    scf.if %2 {
      %cst_10 = arith.constant 0.000000e+00 : f32
      %12 = vector.broadcast %cst_10 : f32 to vector<16x96xf32>
      %c0_11 = arith.constant 0 : index
      %c0_12 = arith.constant 0 : index
      %13 = vector.load %arg7[%c0_11, %c0_12] : memref<16x96xf32, #tpu.memory_space<vmem>>, vector<16x96xf32>
      tpu.vector_store %arg7[%c0_11, %c0_12], %12 {strides = array<i32>} : memref<16x96xf32, #tpu.memory_space<vmem>>, vector<16x96xf32>,
    } else {
    }
    %c0 = arith.constant 0 : index
    %c0_1 = arith.constant 0 : index
    %3 = vector.load %arg7[%c0, %c0_1] : memref<16x96xf32, #tpu.memory_space<vmem>>, vector<16x96xf32>
    %c0_2 = arith.constant 0 : index
    %c0_3 = arith.constant 0 : index
    %4 = vector.load %arg3[%c0_2, %c0_3] : memref<16x32xbf16, #tpu.memory_space<vmem>>, vector<16x32xbf16>
    %c0_4 = arith.constant 0 : index
    %c0_5 = arith.constant 0 : index
    %5 = vector.load %arg4[%c0_4, %c0_5] : memref<32x96xbf16, #tpu.memory_space<vmem>>, vector<32x96xbf16>
    %cst = arith.constant dense<0.000000e+00> : vector<16x96xf32>
    %6 = tpu.matmul %4, %5, %cst {dimension_numbers = #tpu.dot_dimension_numbers<[1], [0], [0], [1], [0, 0, 1, 1], [], []>} : vector<16x32xbf16>, vector<32x96xbf16>, vector<16x96xf32> -> vector<16x96xf32>
    %7 = arith.addf %3, %6 : vector<16x96xf32>
    %c0_6 = arith.constant 0 : index
    %c0_7 = arith.constant 0 : index
    %8 = vector.load %arg7[%c0_6, %c0_7] : memref<16x96xf32, #tpu.memory_space<vmem>>, vector<16x96xf32>
    tpu.vector_store %arg7[%c0_6, %c0_7], %7 {strides = array<i32>} : memref<16x96xf32, #tpu.memory_space<vmem>>, vector<16x96xf32>,
    %c0_i32_8 = arith.constant 0 : i32
    %9 = arith.cmpi eq, %arg2, %c0_i32_8 : i32
    %10 = arith.extui %9 : i1 to i32
    %c0_i32_9 = arith.constant 0 : i32
    %11 = arith.cmpi ne, %10, %c0_i32_9 : i32
    scf.if %11 {
      %c0_10 = arith.constant 0 : index
      %c0_11 = arith.constant 0 : index
      %12 = vector.load %arg7[%c0_10, %c0_11] : memref<16x96xf32, #tpu.memory_space<vmem>>, vector<16x96xf32>
      %c0_12 = arith.constant 0 : index
      %c0_13 = arith.constant 0 : index
      %13 = vector.load %arg5[%c0_12, %c0_13] : memref<1x96xf32, #tpu.memory_space<vmem>>, vector<1x96xf32>
      %14 = vector.broadcast %13 : vector<1x96xf32> to vector<16x96xf32>
      %15 = arith.addf %12, %14 : vector<16x96xf32>
      %16 = arith.truncf %15 : vector<16x96xf32> to vector<16x96xbf16>
      %c0_14 = arith.constant 0 : index
      %c0_15 = arith.constant 0 : index
      %17 = vector.load %arg6[%c0_14, %c0_15] : memref<16x96xbf16, #tpu.memory_space<vmem>>, vector<16x96xbf16>
      tpu.vector_store %arg6[%c0_14, %c0_15], %16 {strides = array<i32>} : memref<16x96xbf16, #tpu.memory_space<vmem>>, vector<16x96xbf16>,
    } else {
    }
    return
  }
  func.func @transform_0(%arg0: i32, %arg1: i32, %arg2: i32) -> (i32, i32) {
    %c0_i32 = arith.constant 0 : i32
    return %arg0, %arg2 : i32, i32
  }
  func.func @transform_1(%arg0: i32, %arg1: i32, %arg2: i32) -> (i32, i32) {
    %c0_i32 = arith.constant 0 : i32
    return %arg2, %arg1 : i32, i32
  }
  func.func @transform_2(%arg0: i32, %arg1: i32, %arg2: i32) -> (i32, i32) {
    %c0_i32 = arith.constant 0 : i32
    %c0_i32_0 = arith.constant 0 : i32
    return %c0_i32, %arg1 : i32, i32
  }
  func.func @transform_3(%arg0: i32, %arg1: i32, %arg2: i32) -> (i32, i32) {
    %c0_i32 = arith.constant 0 : i32
    return %arg0, %arg1 : i32, i32
  }
}

module attributes {stable_mosaic.version = 11 : i64} {
  func.func @_mha_kernel(%arg0: i32, %arg1: i32, %arg2: memref<1x8x8xbf16, #tpu.memory_space<vmem>>, %arg3: memref<1x8x8xbf16, #tpu.memory_space<vmem>>, %arg4: memref<1x8x8xbf16, #tpu.memory_space<vmem>>, %arg5: memref<1x8x8xbf16, #tpu.memory_space<vmem>>, %arg6: memref<1x8x8xbf16, #tpu.memory_space<vmem>>) attributes {dimension_semantics = [#tpu.dimension_semantics<parallel>, #tpu.dimension_semantics<parallel>], iteration_bounds = array<i64: 8, 1>, scalar_prefetch = 0 : i64, scratch_operands = 0 : i64, tpu.core_type = #tpu.core_type<tc>, window_params = [{transform_indices = @transform_0, window_bounds = array<i64: 1, 8, 8>}, {transform_indices = @transform_1, window_bounds = array<i64: 1, 8, 8>}, {transform_indices = @transform_2, window_bounds = array<i64: 1, 8, 8>}, {transform_indices = @transform_3, window_bounds = array<i64: 1, 8, 8>}, {transform_indices = @transform_4, window_bounds = array<i64: 1, 8, 8>}]} {
    %c0 = arith.constant 0 : index
    %c0_0 = arith.constant 0 : index
    %c0_1 = arith.constant 0 : index
    %0 = vector.load %arg2[%c0, %c0_0, %c0_1] : memref<1x8x8xbf16, #tpu.memory_space<vmem>>, vector<1x8x8xbf16>
    %1 = vector.shape_cast %0 : vector<1x8x8xbf16> to vector<8x8xbf16>
    %c0_2 = arith.constant 0 : index
    %c0_3 = arith.constant 0 : index
    %c0_4 = arith.constant 0 : index
    %2 = vector.load %arg3[%c0_2, %c0_3, %c0_4] : memref<1x8x8xbf16, #tpu.memory_space<vmem>>, vector<1x8x8xbf16>
    %3 = vector.shape_cast %2 : vector<1x8x8xbf16> to vector<8x8xbf16>
    %c0_5 = arith.constant 0 : index
    %c0_6 = arith.constant 0 : index
    %c0_7 = arith.constant 0 : index
    %4 = vector.load %arg4[%c0_5, %c0_6, %c0_7] : memref<1x8x8xbf16, #tpu.memory_space<vmem>>, vector<1x8x8xbf16>
    %5 = vector.shape_cast %4 : vector<1x8x8xbf16> to vector<8x8xbf16>
    %cst = arith.constant dense<0.000000e+00> : vector<8x8xf32>
    %6 = tpu.matmul %1, %3, %cst {dimension_numbers = #tpu.dot_dimension_numbers<[1], [1], [0], [0], [0, 0, 1, 0], [], []>} : vector<8x8xbf16>, vector<8x8xbf16>, vector<8x8xf32> -> vector<8x8xf32>
    %cst_8 = arith.constant 0.353553385 : f32
    %7 = vector.broadcast %cst_8 : f32 to vector<8x8xf32>
    %8 = arith.mulf %6, %7 : vector<8x8xf32>
    %c8_i32 = arith.constant 8 : i32
    %9 = arith.muli %arg1, %c8_i32 : i32
    %10 = tpu.iota {dimensions = array<i32: 0>} : vector<8x8xi32>
    %11 = vector.broadcast %9 : i32 to vector<8x8xi32>
    %12 = arith.addi %10, %11 : vector<8x8xi32>
    %13 = tpu.iota {dimensions = array<i32: 1>} : vector<8x8xi32>
    %14 = arith.cmpi sge, %12, %13 : vector<8x8xi32>
    %cst_9 = arith.constant -1.000000e+09 : f32
    %15 = vector.broadcast %cst_9 : f32 to vector<8x8xf32>
    %16 = arith.select %14, %8, %15 : vector<8x8xi1>, vector<8x8xf32>
    %cst_10 = arith.constant dense<0xFF800000> : vector<8xf32>
    %17 = vector.multi_reduction <maximumf>, %16, %cst_10 [1] : vector<8x8xf32> to vector<8xf32>
    %18 = vector.shape_cast %17 : vector<8xf32> to vector<8x1xf32>
    %19 = vector.broadcast %18 : vector<8x1xf32> to vector<8x8xf32>
    %20 = arith.subf %16, %19 : vector<8x8xf32>
    %21 = math.exp %20 : vector<8x8xf32>
    %cst_11 = arith.constant dense<0.000000e+00> : vector<8xf32>
    %22 = vector.multi_reduction <add>, %21, %cst_11 [1] : vector<8x8xf32> to vector<8xf32>
    %23 = vector.shape_cast %22 : vector<8xf32> to vector<8x1xf32>
    %24 = vector.broadcast %23 : vector<8x1xf32> to vector<8x8xf32>
    %25 = arith.divf %21, %24 : vector<8x8xf32>
    %26 = arith.truncf %25 : vector<8x8xf32> to vector<8x8xbf16>
    %cst_12 = arith.constant dense<0.000000e+00> : vector<8x8xf32>
    %27 = tpu.matmul %26, %5, %cst_12 {dimension_numbers = #tpu.dot_dimension_numbers<[1], [0], [0], [1], [0, 0, 1, 1], [], []>} : vector<8x8xbf16>, vector<8x8xbf16>, vector<8x8xf32> -> vector<8x8xf32>
    %28 = arith.truncf %27 : vector<8x8xf32> to vector<8x8xbf16>
    %c0_13 = arith.constant 0 : index
    %c0_14 = arith.constant 0 : index
    %c0_15 = arith.constant 0 : index
    %29 = vector.load %arg5[%c0_13, %c0_14, %c0_15] : memref<1x8x8xbf16, #tpu.memory_space<vmem>>, vector<1x8x8xbf16>
    %30 = vector.shape_cast %29 : vector<1x8x8xbf16> to vector<8x8xbf16>
    %31 = vector.shape_cast %28 : vector<8x8xbf16> to vector<1x8x8xbf16>
    tpu.vector_store %arg5[%c0_13, %c0_14, %c0_15], %31 {strides = array<i32>} : memref<1x8x8xbf16, #tpu.memory_space<vmem>>, vector<1x8x8xbf16>,
    %32 = arith.truncf %25 : vector<8x8xf32> to vector<8x8xbf16>
    %c0_16 = arith.constant 0 : index
    %c0_17 = arith.constant 0 : index
    %c0_18 = arith.constant 0 : index
    %33 = vector.load %arg6[%c0_16, %c0_17, %c0_18] : memref<1x8x8xbf16, #tpu.memory_space<vmem>>, vector<1x8x8xbf16>
    %34 = vector.shape_cast %33 : vector<1x8x8xbf16> to vector<8x8xbf16>
    %35 = vector.shape_cast %32 : vector<8x8xbf16> to vector<1x8x8xbf16>
    tpu.vector_store %arg6[%c0_16, %c0_17, %c0_18], %35 {strides = array<i32>} : memref<1x8x8xbf16, #tpu.memory_space<vmem>>, vector<1x8x8xbf16>,
    return
  }
  func.func @transform_0(%arg0: i32, %arg1: i32) -> (i32, i32, i32) {
    %c0_i32 = arith.constant 0 : i32
    %c0_i32_0 = arith.constant 0 : i32
    return %arg0, %arg1, %c0_i32 : i32, i32, i32
  }
  func.func @transform_1(%arg0: i32, %arg1: i32) -> (i32, i32, i32) {
    %c0_i32 = arith.constant 0 : i32
    %c0_i32_0 = arith.constant 0 : i32
    %c0_i32_1 = arith.constant 0 : i32
    return %arg0, %c0_i32, %c0_i32_0 : i32, i32, i32
  }
  func.func @transform_2(%arg0: i32, %arg1: i32) -> (i32, i32, i32) {
    %c0_i32 = arith.constant 0 : i32
    %c0_i32_0 = arith.constant 0 : i32
    %c0_i32_1 = arith.constant 0 : i32
    return %arg0, %c0_i32, %c0_i32_0 : i32, i32, i32
  }
  func.func @transform_3(%arg0: i32, %arg1: i32) -> (i32, i32, i32) {
    %c0_i32 = arith.constant 0 : i32
    %c0_i32_0 = arith.constant 0 : i32
    return %arg0, %arg1, %c0_i32 : i32, i32, i32
  }
  func.func @transform_4(%arg0: i32, %arg1: i32) -> (i32, i32, i32) {
    %c0_i32 = arith.constant 0 : i32
    %c0_i32_0 = arith.constant 0 : i32
    return %arg0, %arg1, %c0_i32 : i32, i32, i32
  }
}

module attributes {stable_mosaic.version = 11 : i64} {
  func.func @_linear_kernel(%arg0: i32, %arg1: i32, %arg2: i32, %arg3: memref<16x32xbf16, #tpu.memory_space<vmem>>, %arg4: memref<32x32xbf16, #tpu.memory_space<vmem>>, %arg5: memref<1x32xf32, #tpu.memory_space<vmem>>, %arg6: memref<16x32xbf16, #tpu.memory_space<vmem>>, %arg7: memref<16x32xbf16, #tpu.memory_space<vmem>>, %arg8: memref<16x32xf32, #tpu.memory_space<vmem>>) attributes {dimension_semantics = [#tpu.dimension_semantics<parallel>, #tpu.dimension_semantics<parallel>, #tpu.dimension_semantics<arbitrary>], iteration_bounds = array<i64: 1, 1, 1>, scalar_prefetch = 0 : i64, scratch_operands = 1 : i64, tpu.core_type = #tpu.core_type<tc>, window_params = [{transform_indices = @transform_0, window_bounds = array<i64: 16, 32>}, {transform_indices = @transform_1, window_bounds = array<i64: 32, 32>}, {transform_indices = @transform_2, window_bounds = array<i64: 1, 32>}, {transform_indices = @transform_3, window_bounds = array<i64: 16, 32>}, {transform_indices = @transform_4, window_bounds = array<i64: 16, 32>}]} {
    %c0_i32 = arith.constant 0 : i32
    %0 = arith.cmpi eq, %arg2, %c0_i32 : i32
    %1 = arith.extui %0 : i1 to i32
    %c0_i32_0 = arith.constant 0 : i32
    %2 = arith.cmpi ne, %1, %c0_i32_0 : i32
    scf.if %2 {
      %cst_10 = arith.constant 0.000000e+00 : f32
      %12 = vector.broadcast %cst_10 : f32 to vector<16x32xf32>
      %c0_11 = arith.constant 0 : index
      %c0_12 = arith.constant 0 : index
      %13 = vector.load %arg8[%c0_11, %c0_12] : memref<16x32xf32, #tpu.memory_space<vmem>>, vector<16x32xf32>
      tpu.vector_store %arg8[%c0_11, %c0_12], %12 {strides = array<i32>} : memref<16x32xf32, #tpu.memory_space<vmem>>, vector<16x32xf32>,
    } else {
    }
    %c0 = arith.constant 0 : index
    %c0_1 = arith.constant 0 : index
    %3 = vector.load %arg8[%c0, %c0_1] : memref<16x32xf32, #tpu.memory_space<vmem>>, vector<16x32xf32>
    %c0_2 = arith.constant 0 : index
    %c0_3 = arith.constant 0 : index
    %4 = vector.load %arg3[%c0_2, %c0_3] : memref<16x32xbf16, #tpu.memory_space<vmem>>, vector<16x32xbf16>
    %c0_4 = arith.constant 0 : index
    %c0_5 = arith.constant 0 : index
    %5 = vector.load %arg4[%c0_4, %c0_5] : memref<32x32xbf16, #tpu.memory_space<vmem>>, vector<32x32xbf16>
    %cst = arith.constant dense<0.000000e+00> : vector<16x32xf32>
    %6 = tpu.matmul %4, %5, %cst {dimension_numbers = #tpu.dot_dimension_numbers<[1], [0], [0], [1], [0, 0, 1, 1], [], []>} : vector<16x32xbf16>, vector<32x32xbf16>, vector<16x32xf32> -> vector<16x32xf32>
    %7 = arith.addf %3, %6 : vector<16x32xf32>
    %c0_6 = arith.constant 0 : index
    %c0_7 = arith.constant 0 : index
    %8 = vector.load %arg8[%c0_6, %c0_7] : memref<16x32xf32, #tpu.memory_space<vmem>>, vector<16x32xf32>
    tpu.vector_store %arg8[%c0_6, %c0_7], %7 {strides = array<i32>} : memref<16x32xf32, #tpu.memory_space<vmem>>, vector<16x32xf32>,
    %c0_i32_8 = arith.constant 0 : i32
    %9 = arith.cmpi eq, %arg2, %c0_i32_8 : i32
    %10 = arith.extui %9 : i1 to i32
    %c0_i32_9 = arith.constant 0 : i32
    %11 = arith.cmpi ne, %10, %c0_i32_9 : i32
    scf.if %11 {
      %c0_10 = arith.constant 0 : index
      %c0_11 = arith.constant 0 : index
      %12 = vector.load %arg8[%c0_10, %c0_11] : memref<16x32xf32, #tpu.memory_space<vmem>>, vector<16x32xf32>
      %c0_12 = arith.constant 0 : index
      %c0_13 = arith.constant 0 : index
      %13 = vector.load %arg5[%c0_12, %c0_13] : memref<1x32xf32, #tpu.memory_space<vmem>>, vector<1x32xf32>
      %14 = vector.broadcast %13 : vector<1x32xf32> to vector<16x32xf32>
      %15 = arith.addf %12, %14 : vector<16x32xf32>
      %c0_14 = arith.constant 0 : index
      %c0_15 = arith.constant 0 : index
      %16 = vector.load %arg6[%c0_14, %c0_15] : memref<16x32xbf16, #tpu.memory_space<vmem>>, vector<16x32xbf16>
      %17 = arith.extf %16 : vector<16x32xbf16> to vector<16x32xf32>
      %18 = arith.addf %15, %17 : vector<16x32xf32>
      %19 = arith.truncf %18 : vector<16x32xf32> to vector<16x32xbf16>
      %c0_16 = arith.constant 0 : index
      %c0_17 = arith.constant 0 : index
      %20 = vector.load %arg7[%c0_16, %c0_17] : memref<16x32xbf16, #tpu.memory_space<vmem>>, vector<16x32xbf16>
      tpu.vector_store %arg7[%c0_16, %c0_17], %19 {strides = array<i32>} : memref<16x32xbf16, #tpu.memory_space<vmem>>, vector<16x32xbf16>,
    } else {
    }
    return
  }
  func.func @transform_0(%arg0: i32, %arg1: i32, %arg2: i32) -> (i32, i32) {
    %c0_i32 = arith.constant 0 : i32
    return %arg0, %arg2 : i32, i32
  }
  func.func @transform_1(%arg0: i32, %arg1: i32, %arg2: i32) -> (i32, i32) {
    %c0_i32 = arith.constant 0 : i32
    return %arg2, %arg1 : i32, i32
  }
  func.func @transform_2(%arg0: i32, %arg1: i32, %arg2: i32) -> (i32, i32) {
    %c0_i32 = arith.constant 0 : i32
    %c0_i32_0 = arith.constant 0 : i32
    return %c0_i32, %arg1 : i32, i32
  }
  func.func @transform_3(%arg0: i32, %arg1: i32, %arg2: i32) -> (i32, i32) {
    %c0_i32 = arith.constant 0 : i32
    return %arg0, %arg1 : i32, i32
  }
  func.func @transform_4(%arg0: i32, %arg1: i32, %arg2: i32) -> (i32, i32) {
    %c0_i32 = arith.constant 0 : i32
    return %arg0, %arg1 : i32, i32
  }
}

module attributes {stable_mosaic.version = 11 : i64} {
  func.func @_ln_kernel(%arg0: i32, %arg1: memref<16x32xbf16, #tpu.memory_space<vmem>>, %arg2: memref<1x32xf32, #tpu.memory_space<vmem>>, %arg3: memref<1x32xf32, #tpu.memory_space<vmem>>, %arg4: memref<16x32xbf16, #tpu.memory_space<vmem>>) attributes {dimension_semantics = [#tpu.dimension_semantics<parallel>], iteration_bounds = array<i64: 1>, scalar_prefetch = 0 : i64, scratch_operands = 0 : i64, tpu.core_type = #tpu.core_type<tc>, window_params = [{transform_indices = @transform_0, window_bounds = array<i64: 16, 32>}, {pipeline_mode = #tpu.pipeline_mode<synchronous>, transform_indices = @transform_1, window_bounds = array<i64: 1, 32>}, {pipeline_mode = #tpu.pipeline_mode<synchronous>, transform_indices = @transform_2, window_bounds = array<i64: 1, 32>}, {transform_indices = @transform_3, window_bounds = array<i64: 16, 32>}]} {
    %c0 = arith.constant 0 : index
    %c0_0 = arith.constant 0 : index
    %0 = vector.load %arg1[%c0, %c0_0] : memref<16x32xbf16, #tpu.memory_space<vmem>>, vector<16x32xbf16>
    %1 = arith.extf %0 : vector<16x32xbf16> to vector<16x32xf32>
    %cst = arith.constant dense<0.000000e+00> : vector<16xf32>
    %2 = vector.multi_reduction <add>, %1, %cst [1] : vector<16x32xf32> to vector<16xf32>
    %3 = vector.shape_cast %2 : vector<16xf32> to vector<16x1xf32>
    %cst_1 = arith.constant 3.200000e+01 : f32
    %4 = vector.broadcast %cst_1 : f32 to vector<16x1xf32>
    %5 = arith.divf %3, %4 : vector<16x1xf32>
    %6 = vector.broadcast %5 : vector<16x1xf32> to vector<16x32xf32>
    %7 = arith.subf %1, %6 : vector<16x32xf32>
    %8 = arith.mulf %7, %7 : vector<16x32xf32>
    %cst_2 = arith.constant dense<0.000000e+00> : vector<16xf32>
    %9 = vector.multi_reduction <add>, %8, %cst_2 [1] : vector<16x32xf32> to vector<16xf32>
    %10 = vector.shape_cast %9 : vector<16xf32> to vector<16x1xf32>
    %cst_3 = arith.constant 3.200000e+01 : f32
    %11 = vector.broadcast %cst_3 : f32 to vector<16x1xf32>
    %12 = arith.divf %10, %11 : vector<16x1xf32>
    %13 = vector.broadcast %5 : vector<16x1xf32> to vector<16x32xf32>
    %14 = arith.subf %1, %13 : vector<16x32xf32>
    %cst_4 = arith.constant 9.99999974E-6 : f32
    %15 = vector.broadcast %cst_4 : f32 to vector<16x1xf32>
    %16 = arith.addf %12, %15 : vector<16x1xf32>
    %17 = math.rsqrt %16 : vector<16x1xf32>
    %18 = vector.broadcast %17 : vector<16x1xf32> to vector<16x32xf32>
    %19 = arith.mulf %14, %18 : vector<16x32xf32>
    %c0_5 = arith.constant 0 : index
    %c0_6 = arith.constant 0 : index
    %20 = vector.load %arg2[%c0_5, %c0_6] : memref<1x32xf32, #tpu.memory_space<vmem>>, vector<1x32xf32>
    %21 = vector.broadcast %20 : vector<1x32xf32> to vector<16x32xf32>
    %22 = arith.mulf %19, %21 : vector<16x32xf32>
    %c0_7 = arith.constant 0 : index
    %c0_8 = arith.constant 0 : index
    %23 = vector.load %arg3[%c0_7, %c0_8] : memref<1x32xf32, #tpu.memory_space<vmem>>, vector<1x32xf32>
    %24 = vector.broadcast %23 : vector<1x32xf32> to vector<16x32xf32>
    %25 = arith.addf %22, %24 : vector<16x32xf32>
    %26 = arith.truncf %25 : vector<16x32xf32> to vector<16x32xbf16>
    %c0_9 = arith.constant 0 : index
    %c0_10 = arith.constant 0 : index
    %27 = vector.load %arg4[%c0_9, %c0_10] : memref<16x32xbf16, #tpu.memory_space<vmem>>, vector<16x32xbf16>
    tpu.vector_store %arg4[%c0_9, %c0_10], %26 {strides = array<i32>} : memref<16x32xbf16, #tpu.memory_space<vmem>>, vector<16x32xbf16>,
    return
  }
  func.func @transform_0(%arg0: i32) -> (i32, i32) {
    %c0_i32 = arith.constant 0 : i32
    %c0_i32_0 = arith.constant 0 : i32
    return %arg0, %c0_i32 : i32, i32
  }
  func.func @transform_1(%arg0: i32) -> (i32, i32) {
    %c0_i32 = arith.constant 0 : i32
    %c0_i32_0 = arith.constant 0 : i32
    %c0_i32_1 = arith.constant 0 : i32
    return %c0_i32, %c0_i32_0 : i32, i32
  }
  func.func @transform_2(%arg0: i32) -> (i32, i32) {
    %c0_i32 = arith.constant 0 : i32
    %c0_i32_0 = arith.constant 0 : i32
    %c0_i32_1 = arith.constant 0 : i32
    return %c0_i32, %c0_i32_0 : i32, i32
  }
  func.func @transform_3(%arg0: i32) -> (i32, i32) {
    %c0_i32 = arith.constant 0 : i32
    %c0_i32_0 = arith.constant 0 : i32
    return %arg0, %c0_i32 : i32, i32
  }
}

module attributes {stable_mosaic.version = 11 : i64} {
  func.func @_linear_kernel(%arg0: i32, %arg1: i32, %arg2: i32, %arg3: memref<16x32xbf16, #tpu.memory_space<vmem>>, %arg4: memref<32x32xbf16, #tpu.memory_space<vmem>>, %arg5: memref<1x32xf32, #tpu.memory_space<vmem>>, %arg6: memref<16x32xbf16, #tpu.memory_space<vmem>>, %arg7: memref<16x32xf32, #tpu.memory_space<vmem>>) attributes {dimension_semantics = [#tpu.dimension_semantics<parallel>, #tpu.dimension_semantics<parallel>, #tpu.dimension_semantics<arbitrary>], iteration_bounds = array<i64: 1, 1, 1>, scalar_prefetch = 0 : i64, scratch_operands = 1 : i64, tpu.core_type = #tpu.core_type<tc>, window_params = [{transform_indices = @transform_0, window_bounds = array<i64: 16, 32>}, {transform_indices = @transform_1, window_bounds = array<i64: 32, 32>}, {transform_indices = @transform_2, window_bounds = array<i64: 1, 32>}, {transform_indices = @transform_3, window_bounds = array<i64: 16, 32>}]} {
    %c0_i32 = arith.constant 0 : i32
    %0 = arith.cmpi eq, %arg2, %c0_i32 : i32
    %1 = arith.extui %0 : i1 to i32
    %c0_i32_0 = arith.constant 0 : i32
    %2 = arith.cmpi ne, %1, %c0_i32_0 : i32
    scf.if %2 {
      %cst_10 = arith.constant 0.000000e+00 : f32
      %12 = vector.broadcast %cst_10 : f32 to vector<16x32xf32>
      %c0_11 = arith.constant 0 : index
      %c0_12 = arith.constant 0 : index
      %13 = vector.load %arg7[%c0_11, %c0_12] : memref<16x32xf32, #tpu.memory_space<vmem>>, vector<16x32xf32>
      tpu.vector_store %arg7[%c0_11, %c0_12], %12 {strides = array<i32>} : memref<16x32xf32, #tpu.memory_space<vmem>>, vector<16x32xf32>,
    } else {
    }
    %c0 = arith.constant 0 : index
    %c0_1 = arith.constant 0 : index
    %3 = vector.load %arg7[%c0, %c0_1] : memref<16x32xf32, #tpu.memory_space<vmem>>, vector<16x32xf32>
    %c0_2 = arith.constant 0 : index
    %c0_3 = arith.constant 0 : index
    %4 = vector.load %arg3[%c0_2, %c0_3] : memref<16x32xbf16, #tpu.memory_space<vmem>>, vector<16x32xbf16>
    %c0_4 = arith.constant 0 : index
    %c0_5 = arith.constant 0 : index
    %5 = vector.load %arg4[%c0_4, %c0_5] : memref<32x32xbf16, #tpu.memory_space<vmem>>, vector<32x32xbf16>
    %cst = arith.constant dense<0.000000e+00> : vector<16x32xf32>
    %6 = tpu.matmul %4, %5, %cst {dimension_numbers = #tpu.dot_dimension_numbers<[1], [0], [0], [1], [0, 0, 1, 1], [], []>} : vector<16x32xbf16>, vector<32x32xbf16>, vector<16x32xf32> -> vector<16x32xf32>
    %7 = arith.addf %3, %6 : vector<16x32xf32>
    %c0_6 = arith.constant 0 : index
    %c0_7 = arith.constant 0 : index
    %8 = vector.load %arg7[%c0_6, %c0_7] : memref<16x32xf32, #tpu.memory_space<vmem>>, vector<16x32xf32>
    tpu.vector_store %arg7[%c0_6, %c0_7], %7 {strides = array<i32>} : memref<16x32xf32, #tpu.memory_space<vmem>>, vector<16x32xf32>,
    %c0_i32_8 = arith.constant 0 : i32
    %9 = arith.cmpi eq, %arg2, %c0_i32_8 : i32
    %10 = arith.extui %9 : i1 to i32
    %c0_i32_9 = arith.constant 0 : i32
    %11 = arith.cmpi ne, %10, %c0_i32_9 : i32
    scf.if %11 {
      %c0_10 = arith.constant 0 : index
      %c0_11 = arith.constant 0 : index
      %12 = vector.load %arg7[%c0_10, %c0_11] : memref<16x32xf32, #tpu.memory_space<vmem>>, vector<16x32xf32>
      %c0_12 = arith.constant 0 : index
      %c0_13 = arith.constant 0 : index
      %13 = vector.load %arg5[%c0_12, %c0_13] : memref<1x32xf32, #tpu.memory_space<vmem>>, vector<1x32xf32>
      %14 = vector.broadcast %13 : vector<1x32xf32> to vector<16x32xf32>
      %15 = arith.addf %12, %14 : vector<16x32xf32>
      %16 = arith.truncf %15 : vector<16x32xf32> to vector<16x32xbf16>
      %c0_14 = arith.constant 0 : index
      %c0_15 = arith.constant 0 : index
      %17 = vector.load %arg6[%c0_14, %c0_15] : memref<16x32xbf16, #tpu.memory_space<vmem>>, vector<16x32xbf16>
      tpu.vector_store %arg6[%c0_14, %c0_15], %16 {strides = array<i32>} : memref<16x32xbf16, #tpu.memory_space<vmem>>, vector<16x32xbf16>,
    } else {
    }
    return
  }
  func.func @transform_0(%arg0: i32, %arg1: i32, %arg2: i32) -> (i32, i32) {
    %c0_i32 = arith.constant 0 : i32
    return %arg0, %arg2 : i32, i32
  }
  func.func @transform_1(%arg0: i32, %arg1: i32, %arg2: i32) -> (i32, i32) {
    %c0_i32 = arith.constant 0 : i32
    return %arg2, %arg1 : i32, i32
  }
  func.func @transform_2(%arg0: i32, %arg1: i32, %arg2: i32) -> (i32, i32) {
    %c0_i32 = arith.constant 0 : i32
    %c0_i32_0 = arith.constant 0 : i32
    return %c0_i32, %arg1 : i32, i32
  }
  func.func @transform_3(%arg0: i32, %arg1: i32, %arg2: i32) -> (i32, i32) {
    %c0_i32 = arith.constant 0 : i32
    return %arg0, %arg1 : i32, i32
  }
}

module attributes {stable_mosaic.version = 11 : i64} {
  func.func @_mha_kernel(%arg0: i32, %arg1: i32, %arg2: memref<1x8x8xbf16, #tpu.memory_space<vmem>>, %arg3: memref<1x8x8xbf16, #tpu.memory_space<vmem>>, %arg4: memref<1x8x8xbf16, #tpu.memory_space<vmem>>, %arg5: memref<1x8x8xbf16, #tpu.memory_space<vmem>>, %arg6: memref<1x8x8xbf16, #tpu.memory_space<vmem>>) attributes {dimension_semantics = [#tpu.dimension_semantics<parallel>, #tpu.dimension_semantics<parallel>], iteration_bounds = array<i64: 8, 1>, scalar_prefetch = 0 : i64, scratch_operands = 0 : i64, tpu.core_type = #tpu.core_type<tc>, window_params = [{transform_indices = @transform_0, window_bounds = array<i64: 1, 8, 8>}, {transform_indices = @transform_1, window_bounds = array<i64: 1, 8, 8>}, {transform_indices = @transform_2, window_bounds = array<i64: 1, 8, 8>}, {transform_indices = @transform_3, window_bounds = array<i64: 1, 8, 8>}, {transform_indices = @transform_4, window_bounds = array<i64: 1, 8, 8>}]} {
    %c0 = arith.constant 0 : index
    %c0_0 = arith.constant 0 : index
    %c0_1 = arith.constant 0 : index
    %0 = vector.load %arg2[%c0, %c0_0, %c0_1] : memref<1x8x8xbf16, #tpu.memory_space<vmem>>, vector<1x8x8xbf16>
    %1 = vector.shape_cast %0 : vector<1x8x8xbf16> to vector<8x8xbf16>
    %c0_2 = arith.constant 0 : index
    %c0_3 = arith.constant 0 : index
    %c0_4 = arith.constant 0 : index
    %2 = vector.load %arg3[%c0_2, %c0_3, %c0_4] : memref<1x8x8xbf16, #tpu.memory_space<vmem>>, vector<1x8x8xbf16>
    %3 = vector.shape_cast %2 : vector<1x8x8xbf16> to vector<8x8xbf16>
    %c0_5 = arith.constant 0 : index
    %c0_6 = arith.constant 0 : index
    %c0_7 = arith.constant 0 : index
    %4 = vector.load %arg4[%c0_5, %c0_6, %c0_7] : memref<1x8x8xbf16, #tpu.memory_space<vmem>>, vector<1x8x8xbf16>
    %5 = vector.shape_cast %4 : vector<1x8x8xbf16> to vector<8x8xbf16>
    %cst = arith.constant dense<0.000000e+00> : vector<8x8xf32>
    %6 = tpu.matmul %1, %3, %cst {dimension_numbers = #tpu.dot_dimension_numbers<[1], [1], [0], [0], [0, 0, 1, 0], [], []>} : vector<8x8xbf16>, vector<8x8xbf16>, vector<8x8xf32> -> vector<8x8xf32>
    %cst_8 = arith.constant 0.353553385 : f32
    %7 = vector.broadcast %cst_8 : f32 to vector<8x8xf32>
    %8 = arith.mulf %6, %7 : vector<8x8xf32>
    %cst_9 = arith.constant dense<0xFF800000> : vector<8xf32>
    %9 = vector.multi_reduction <maximumf>, %8, %cst_9 [1] : vector<8x8xf32> to vector<8xf32>
    %10 = vector.shape_cast %9 : vector<8xf32> to vector<8x1xf32>
    %11 = vector.broadcast %10 : vector<8x1xf32> to vector<8x8xf32>
    %12 = arith.subf %8, %11 : vector<8x8xf32>
    %13 = math.exp %12 : vector<8x8xf32>
    %cst_10 = arith.constant dense<0.000000e+00> : vector<8xf32>
    %14 = vector.multi_reduction <add>, %13, %cst_10 [1] : vector<8x8xf32> to vector<8xf32>
    %15 = vector.shape_cast %14 : vector<8xf32> to vector<8x1xf32>
    %16 = vector.broadcast %15 : vector<8x1xf32> to vector<8x8xf32>
    %17 = arith.divf %13, %16 : vector<8x8xf32>
    %18 = arith.truncf %17 : vector<8x8xf32> to vector<8x8xbf16>
    %cst_11 = arith.constant dense<0.000000e+00> : vector<8x8xf32>
    %19 = tpu.matmul %18, %5, %cst_11 {dimension_numbers = #tpu.dot_dimension_numbers<[1], [0], [0], [1], [0, 0, 1, 1], [], []>} : vector<8x8xbf16>, vector<8x8xbf16>, vector<8x8xf32> -> vector<8x8xf32>
    %20 = arith.truncf %19 : vector<8x8xf32> to vector<8x8xbf16>
    %c0_12 = arith.constant 0 : index
    %c0_13 = arith.constant 0 : index
    %c0_14 = arith.constant 0 : index
    %21 = vector.load %arg5[%c0_12, %c0_13, %c0_14] : memref<1x8x8xbf16, #tpu.memory_space<vmem>>, vector<1x8x8xbf16>
    %22 = vector.shape_cast %21 : vector<1x8x8xbf16> to vector<8x8xbf16>
    %23 = vector.shape_cast %20 : vector<8x8xbf16> to vector<1x8x8xbf16>
    tpu.vector_store %arg5[%c0_12, %c0_13, %c0_14], %23 {strides = array<i32>} : memref<1x8x8xbf16, #tpu.memory_space<vmem>>, vector<1x8x8xbf16>,
    %24 = arith.truncf %17 : vector<8x8xf32> to vector<8x8xbf16>
    %c0_15 = arith.constant 0 : index
    %c0_16 = arith.constant 0 : index
    %c0_17 = arith.constant 0 : index
    %25 = vector.load %arg6[%c0_15, %c0_16, %c0_17] : memref<1x8x8xbf16, #tpu.memory_space<vmem>>, vector<1x8x8xbf16>
    %26 = vector.shape_cast %25 : vector<1x8x8xbf16> to vector<8x8xbf16>
    %27 = vector.shape_cast %24 : vector<8x8xbf16> to vector<1x8x8xbf16>
    tpu.vector_store %arg6[%c0_15, %c0_16, %c0_17], %27 {strides = array<i32>} : memref<1x8x8xbf16, #tpu.memory_space<vmem>>, vector<1x8x8xbf16>,
    return
  }
  func.func @transform_0(%arg0: i32, %arg1: i32) -> (i32, i32, i32) {
    %c0_i32 = arith.constant 0 : i32
    %c0_i32_0 = arith.constant 0 : i32
    return %arg0, %arg1, %c0_i32 : i32, i32, i32
  }
  func.func @transform_1(%arg0: i32, %arg1: i32) -> (i32, i32, i32) {
    %c0_i32 = arith.constant 0 : i32
    %c0_i32_0 = arith.constant 0 : i32
    %c0_i32_1 = arith.constant 0 : i32
    return %arg0, %c0_i32, %c0_i32_0 : i32, i32, i32
  }
  func.func @transform_2(%arg0: i32, %arg1: i32) -> (i32, i32, i32) {
    %c0_i32 = arith.constant 0 : i32
    %c0_i32_0 = arith.constant 0 : i32
    %c0_i32_1 = arith.constant 0 : i32
    return %arg0, %c0_i32, %c0_i32_0 : i32, i32, i32
  }
  func.func @transform_3(%arg0: i32, %arg1: i32) -> (i32, i32, i32) {
    %c0_i32 = arith.constant 0 : i32
    %c0_i32_0 = arith.constant 0 : i32
    return %arg0, %arg1, %c0_i32 : i32, i32, i32
  }
  func.func @transform_4(%arg0: i32, %arg1: i32) -> (i32, i32, i32) {
    %c0_i32 = arith.constant 0 : i32
    %c0_i32_0 = arith.constant 0 : i32
    return %arg0, %arg1, %c0_i32 : i32, i32, i32
  }
}

module attributes {stable_mosaic.version = 11 : i64} {
  func.func @_ffn_kernel(%arg0: i32, %arg1: memref<16x32xbf16, #tpu.memory_space<vmem>>, %arg2: memref<32x64xbf16, #tpu.memory_space<vmem>>, %arg3: memref<1x64xf32, #tpu.memory_space<vmem>>, %arg4: memref<64x32xbf16, #tpu.memory_space<vmem>>, %arg5: memref<1x32xf32, #tpu.memory_space<vmem>>, %arg6: memref<16x32xbf16, #tpu.memory_space<vmem>>, %arg7: memref<16x32xbf16, #tpu.memory_space<vmem>>) attributes {dimension_semantics = [#tpu.dimension_semantics<parallel>], iteration_bounds = array<i64: 1>, scalar_prefetch = 0 : i64, scratch_operands = 0 : i64, tpu.core_type = #tpu.core_type<tc>, window_params = [{transform_indices = @transform_0, window_bounds = array<i64: 16, 32>}, {pipeline_mode = #tpu.pipeline_mode<synchronous>, transform_indices = @transform_1, window_bounds = array<i64: 32, 64>}, {pipeline_mode = #tpu.pipeline_mode<synchronous>, transform_indices = @transform_2, window_bounds = array<i64: 1, 64>}, {pipeline_mode = #tpu.pipeline_mode<synchronous>, transform_indices = @transform_3, window_bounds = array<i64: 64, 32>}, {pipeline_mode = #tpu.pipeline_mode<synchronous>, transform_indices = @transform_4, window_bounds = array<i64: 1, 32>}, {transform_indices = @transform_5, window_bounds = array<i64: 16, 32>}, {transform_indices = @transform_6, window_bounds = array<i64: 16, 32>}]} {
    %c0 = arith.constant 0 : index
    %c0_0 = arith.constant 0 : index
    %0 = vector.load %arg1[%c0, %c0_0] : memref<16x32xbf16, #tpu.memory_space<vmem>>, vector<16x32xbf16>
    %cst = arith.constant 0.000000e+00 : f32
    %1 = vector.broadcast %cst : f32 to vector<16x32xf32>
    %c0_1 = arith.constant 0 : index
    %c0_2 = arith.constant 0 : index
    %2 = vector.load %arg2[%c0_1, %c0_2] : memref<32x64xbf16, #tpu.memory_space<vmem>>, vector<32x64xbf16>
    %cst_3 = arith.constant dense<0.000000e+00> : vector<16x64xf32>
    %3 = tpu.matmul %0, %2, %cst_3 {dimension_numbers = #tpu.dot_dimension_numbers<[1], [0], [0], [1], [0, 0, 1, 1], [], []>} : vector<16x32xbf16>, vector<32x64xbf16>, vector<16x64xf32> -> vector<16x64xf32>
    %c0_4 = arith.constant 0 : index
    %c0_5 = arith.constant 0 : index
    %4 = vector.load %arg3[%c0_4, %c0_5] : memref<1x64xf32, #tpu.memory_space<vmem>>, vector<1x64xf32>
    %5 = vector.broadcast %4 : vector<1x64xf32> to vector<16x64xf32>
    %6 = arith.addf %3, %5 : vector<16x64xf32>
    %cst_6 = arith.constant 0.000000e+00 : f32
    %7 = vector.broadcast %cst_6 : f32 to vector<16x64xf32>
    %8 = arith.maximumf %6, %7 : vector<16x64xf32>
    %9 = arith.truncf %8 : vector<16x64xf32> to vector<16x64xbf16>
    %c0_7 = arith.constant 0 : index
    %c0_8 = arith.constant 0 : index
    %10 = vector.load %arg4[%c0_7, %c0_8] : memref<64x32xbf16, #tpu.memory_space<vmem>>, vector<64x32xbf16>
    %cst_9 = arith.constant dense<0.000000e+00> : vector<16x32xf32>
    %11 = tpu.matmul %9, %10, %cst_9 {dimension_numbers = #tpu.dot_dimension_numbers<[1], [0], [0], [1], [0, 0, 1, 1], [], []>} : vector<16x64xbf16>, vector<64x32xbf16>, vector<16x32xf32> -> vector<16x32xf32>
    %12 = arith.addf %1, %11 : vector<16x32xf32>
    %c0_10 = arith.constant 0 : index
    %c0_11 = arith.constant 0 : index
    %13 = vector.load %arg5[%c0_10, %c0_11] : memref<1x32xf32, #tpu.memory_space<vmem>>, vector<1x32xf32>
    %14 = vector.broadcast %13 : vector<1x32xf32> to vector<16x32xf32>
    %15 = arith.addf %12, %14 : vector<16x32xf32>
    %c0_12 = arith.constant 0 : index
    %c0_13 = arith.constant 0 : index
    %16 = vector.load %arg6[%c0_12, %c0_13] : memref<16x32xbf16, #tpu.memory_space<vmem>>, vector<16x32xbf16>
    %17 = arith.extf %16 : vector<16x32xbf16> to vector<16x32xf32>
    %18 = arith.addf %15, %17 : vector<16x32xf32>
    %19 = arith.truncf %18 : vector<16x32xf32> to vector<16x32xbf16>
    %c0_14 = arith.constant 0 : index
    %c0_15 = arith.constant 0 : index
    %20 = vector.load %arg7[%c0_14, %c0_15] : memref<16x32xbf16, #tpu.memory_space<vmem>>, vector<16x32xbf16>
    tpu.vector_store %arg7[%c0_14, %c0_15], %19 {strides = array<i32>} : memref<16x32xbf16, #tpu.memory_space<vmem>>, vector<16x32xbf16>,
    return
  }
  func.func @transform_0(%arg0: i32) -> (i32, i32) {
    %c0_i32 = arith.constant 0 : i32
    %c0_i32_0 = arith.constant 0 : i32
    return %arg0, %c0_i32 : i32, i32
  }
  func.func @transform_1(%arg0: i32) -> (i32, i32) {
    %c0_i32 = arith.constant 0 : i32
    %c0_i32_0 = arith.constant 0 : i32
    %c0_i32_1 = arith.constant 0 : i32
    return %c0_i32, %c0_i32_0 : i32, i32
  }
  func.func @transform_2(%arg0: i32) -> (i32, i32) {
    %c0_i32 = arith.constant 0 : i32
    %c0_i32_0 = arith.constant 0 : i32
    %c0_i32_1 = arith.constant 0 : i32
    return %c0_i32, %c0_i32_0 : i32, i32
  }
  func.func @transform_3(%arg0: i32) -> (i32, i32) {
    %c0_i32 = arith.constant 0 : i32
    %c0_i32_0 = arith.constant 0 : i32
    %c0_i32_1 = arith.constant 0 : i32
    return %c0_i32, %c0_i32_0 : i32, i32
  }
  func.func @transform_4(%arg0: i32) -> (i32, i32) {
    %c0_i32 = arith.constant 0 : i32
    %c0_i32_0 = arith.constant 0 : i32
    %c0_i32_1 = arith.constant 0 : i32
    return %c0_i32, %c0_i32_0 : i32, i32
  }
  func.func @transform_5(%arg0: i32) -> (i32, i32) {
    %c0_i32 = arith.constant 0 : i32
    %c0_i32_0 = arith.constant 0 : i32
    return %arg0, %c0_i32 : i32, i32
  }
  func.func @transform_6(%arg0: i32) -> (i32, i32) {
    %c0_i32 = arith.constant 0 : i32
    %c0_i32_0 = arith.constant 0 : i32
    return %arg0, %c0_i32 : i32, i32
  }
}

module attributes {stable_mosaic.version = 11 : i64} {
  func.func @_linear_kernel(%arg0: i32, %arg1: i32, %arg2: i32, %arg3: memref<16x32xbf16, #tpu.memory_space<vmem>>, %arg4: memref<32x64xbf16, #tpu.memory_space<vmem>>, %arg5: memref<1x64xf32, #tpu.memory_space<vmem>>, %arg6: memref<16x64xbf16, #tpu.memory_space<vmem>>, %arg7: memref<16x64xf32, #tpu.memory_space<vmem>>) attributes {dimension_semantics = [#tpu.dimension_semantics<parallel>, #tpu.dimension_semantics<parallel>, #tpu.dimension_semantics<arbitrary>], iteration_bounds = array<i64: 1, 1, 1>, scalar_prefetch = 0 : i64, scratch_operands = 1 : i64, tpu.core_type = #tpu.core_type<tc>, window_params = [{transform_indices = @transform_0, window_bounds = array<i64: 16, 32>}, {transform_indices = @transform_1, window_bounds = array<i64: 32, 64>}, {transform_indices = @transform_2, window_bounds = array<i64: 1, 64>}, {transform_indices = @transform_3, window_bounds = array<i64: 16, 64>}]} {
    %c0_i32 = arith.constant 0 : i32
    %0 = arith.cmpi eq, %arg2, %c0_i32 : i32
    %1 = arith.extui %0 : i1 to i32
    %c0_i32_0 = arith.constant 0 : i32
    %2 = arith.cmpi ne, %1, %c0_i32_0 : i32
    scf.if %2 {
      %cst_10 = arith.constant 0.000000e+00 : f32
      %12 = vector.broadcast %cst_10 : f32 to vector<16x64xf32>
      %c0_11 = arith.constant 0 : index
      %c0_12 = arith.constant 0 : index
      %13 = vector.load %arg7[%c0_11, %c0_12] : memref<16x64xf32, #tpu.memory_space<vmem>>, vector<16x64xf32>
      tpu.vector_store %arg7[%c0_11, %c0_12], %12 {strides = array<i32>} : memref<16x64xf32, #tpu.memory_space<vmem>>, vector<16x64xf32>,
    } else {
    }
    %c0 = arith.constant 0 : index
    %c0_1 = arith.constant 0 : index
    %3 = vector.load %arg7[%c0, %c0_1] : memref<16x64xf32, #tpu.memory_space<vmem>>, vector<16x64xf32>
    %c0_2 = arith.constant 0 : index
    %c0_3 = arith.constant 0 : index
    %4 = vector.load %arg3[%c0_2, %c0_3] : memref<16x32xbf16, #tpu.memory_space<vmem>>, vector<16x32xbf16>
    %c0_4 = arith.constant 0 : index
    %c0_5 = arith.constant 0 : index
    %5 = vector.load %arg4[%c0_4, %c0_5] : memref<32x64xbf16, #tpu.memory_space<vmem>>, vector<32x64xbf16>
    %cst = arith.constant dense<0.000000e+00> : vector<16x64xf32>
    %6 = tpu.matmul %4, %5, %cst {dimension_numbers = #tpu.dot_dimension_numbers<[1], [0], [0], [1], [0, 0, 1, 1], [], []>} : vector<16x32xbf16>, vector<32x64xbf16>, vector<16x64xf32> -> vector<16x64xf32>
    %7 = arith.addf %3, %6 : vector<16x64xf32>
    %c0_6 = arith.constant 0 : index
    %c0_7 = arith.constant 0 : index
    %8 = vector.load %arg7[%c0_6, %c0_7] : memref<16x64xf32, #tpu.memory_space<vmem>>, vector<16x64xf32>
    tpu.vector_store %arg7[%c0_6, %c0_7], %7 {strides = array<i32>} : memref<16x64xf32, #tpu.memory_space<vmem>>, vector<16x64xf32>,
    %c0_i32_8 = arith.constant 0 : i32
    %9 = arith.cmpi eq, %arg2, %c0_i32_8 : i32
    %10 = arith.extui %9 : i1 to i32
    %c0_i32_9 = arith.constant 0 : i32
    %11 = arith.cmpi ne, %10, %c0_i32_9 : i32
    scf.if %11 {
      %c0_10 = arith.constant 0 : index
      %c0_11 = arith.constant 0 : index
      %12 = vector.load %arg7[%c0_10, %c0_11] : memref<16x64xf32, #tpu.memory_space<vmem>>, vector<16x64xf32>
      %c0_12 = arith.constant 0 : index
      %c0_13 = arith.constant 0 : index
      %13 = vector.load %arg5[%c0_12, %c0_13] : memref<1x64xf32, #tpu.memory_space<vmem>>, vector<1x64xf32>
      %14 = vector.broadcast %13 : vector<1x64xf32> to vector<16x64xf32>
      %15 = arith.addf %12, %14 : vector<16x64xf32>
      %16 = arith.truncf %15 : vector<16x64xf32> to vector<16x64xbf16>
      %c0_14 = arith.constant 0 : index
      %c0_15 = arith.constant 0 : index
      %17 = vector.load %arg6[%c0_14, %c0_15] : memref<16x64xbf16, #tpu.memory_space<vmem>>, vector<16x64xbf16>
      tpu.vector_store %arg6[%c0_14, %c0_15], %16 {strides = array<i32>} : memref<16x64xbf16, #tpu.memory_space<vmem>>, vector<16x64xbf16>,
    } else {
    }
    return
  }
  func.func @transform_0(%arg0: i32, %arg1: i32, %arg2: i32) -> (i32, i32) {
    %c0_i32 = arith.constant 0 : i32
    return %arg0, %arg2 : i32, i32
  }
  func.func @transform_1(%arg0: i32, %arg1: i32, %arg2: i32) -> (i32, i32) {
    %c0_i32 = arith.constant 0 : i32
    return %arg2, %arg1 : i32, i32
  }
  func.func @transform_2(%arg0: i32, %arg1: i32, %arg2: i32) -> (i32, i32) {
    %c0_i32 = arith.constant 0 : i32
    %c0_i32_0 = arith.constant 0 : i32
    return %c0_i32, %arg1 : i32, i32
  }
  func.func @transform_3(%arg0: i32, %arg1: i32, %arg2: i32) -> (i32, i32) {
    %c0_i32 = arith.constant 0 : i32
    return %arg0, %arg1 : i32, i32
  }
}

module attributes {stable_mosaic.version = 11 : i64} {
  func.func @_linear_kernel(%arg0: i32, %arg1: i32, %arg2: i32, %arg3: memref<16x32xbf16, #tpu.memory_space<vmem>>, %arg4: memref<32x40xbf16, #tpu.memory_space<vmem>>, %arg5: memref<1x40xf32, #tpu.memory_space<vmem>>, %arg6: memref<16x40xf32, #tpu.memory_space<vmem>>, %arg7: memref<16x40xf32, #tpu.memory_space<vmem>>) attributes {dimension_semantics = [#tpu.dimension_semantics<parallel>, #tpu.dimension_semantics<parallel>, #tpu.dimension_semantics<arbitrary>], iteration_bounds = array<i64: 1, 1, 1>, scalar_prefetch = 0 : i64, scratch_operands = 1 : i64, tpu.core_type = #tpu.core_type<tc>, window_params = [{transform_indices = @transform_0, window_bounds = array<i64: 16, 32>}, {transform_indices = @transform_1, window_bounds = array<i64: 32, 40>}, {transform_indices = @transform_2, window_bounds = array<i64: 1, 40>}, {transform_indices = @transform_3, window_bounds = array<i64: 16, 40>}]} {
    %c0_i32 = arith.constant 0 : i32
    %0 = arith.cmpi eq, %arg2, %c0_i32 : i32
    %1 = arith.extui %0 : i1 to i32
    %c0_i32_0 = arith.constant 0 : i32
    %2 = arith.cmpi ne, %1, %c0_i32_0 : i32
    scf.if %2 {
      %cst_10 = arith.constant 0.000000e+00 : f32
      %12 = vector.broadcast %cst_10 : f32 to vector<16x40xf32>
      %c0_11 = arith.constant 0 : index
      %c0_12 = arith.constant 0 : index
      %13 = vector.load %arg7[%c0_11, %c0_12] : memref<16x40xf32, #tpu.memory_space<vmem>>, vector<16x40xf32>
      tpu.vector_store %arg7[%c0_11, %c0_12], %12 {strides = array<i32>} : memref<16x40xf32, #tpu.memory_space<vmem>>, vector<16x40xf32>,
    } else {
    }
    %c0 = arith.constant 0 : index
    %c0_1 = arith.constant 0 : index
    %3 = vector.load %arg7[%c0, %c0_1] : memref<16x40xf32, #tpu.memory_space<vmem>>, vector<16x40xf32>
    %c0_2 = arith.constant 0 : index
    %c0_3 = arith.constant 0 : index
    %4 = vector.load %arg3[%c0_2, %c0_3] : memref<16x32xbf16, #tpu.memory_space<vmem>>, vector<16x32xbf16>
    %c0_4 = arith.constant 0 : index
    %c0_5 = arith.constant 0 : index
    %5 = vector.load %arg4[%c0_4, %c0_5] : memref<32x40xbf16, #tpu.memory_space<vmem>>, vector<32x40xbf16>
    %cst = arith.constant dense<0.000000e+00> : vector<16x40xf32>
    %6 = tpu.matmul %4, %5, %cst {dimension_numbers = #tpu.dot_dimension_numbers<[1], [0], [0], [1], [0, 0, 1, 1], [], []>} : vector<16x32xbf16>, vector<32x40xbf16>, vector<16x40xf32> -> vector<16x40xf32>
    %7 = arith.addf %3, %6 : vector<16x40xf32>
    %c0_6 = arith.constant 0 : index
    %c0_7 = arith.constant 0 : index
    %8 = vector.load %arg7[%c0_6, %c0_7] : memref<16x40xf32, #tpu.memory_space<vmem>>, vector<16x40xf32>
    tpu.vector_store %arg7[%c0_6, %c0_7], %7 {strides = array<i32>} : memref<16x40xf32, #tpu.memory_space<vmem>>, vector<16x40xf32>,
    %c0_i32_8 = arith.constant 0 : i32
    %9 = arith.cmpi eq, %arg2, %c0_i32_8 : i32
    %10 = arith.extui %9 : i1 to i32
    %c0_i32_9 = arith.constant 0 : i32
    %11 = arith.cmpi ne, %10, %c0_i32_9 : i32
    scf.if %11 {
      %c0_10 = arith.constant 0 : index
      %c0_11 = arith.constant 0 : index
      %12 = vector.load %arg7[%c0_10, %c0_11] : memref<16x40xf32, #tpu.memory_space<vmem>>, vector<16x40xf32>
      %c0_12 = arith.constant 0 : index
      %c0_13 = arith.constant 0 : index
      %13 = vector.load %arg5[%c0_12, %c0_13] : memref<1x40xf32, #tpu.memory_space<vmem>>, vector<1x40xf32>
      %14 = vector.broadcast %13 : vector<1x40xf32> to vector<16x40xf32>
      %15 = arith.addf %12, %14 : vector<16x40xf32>
      %c0_14 = arith.constant 0 : index
      %c0_15 = arith.constant 0 : index
      %16 = vector.load %arg6[%c0_14, %c0_15] : memref<16x40xf32, #tpu.memory_space<vmem>>, vector<16x40xf32>
      tpu.vector_store %arg6[%c0_14, %c0_15], %15 {strides = array<i32>} : memref<16x40xf32, #tpu.memory_space<vmem>>, vector<16x40xf32>,
    } else {
    }
    return
  }
  func.func @transform_0(%arg0: i32, %arg1: i32, %arg2: i32) -> (i32, i32) {
    %c0_i32 = arith.constant 0 : i32
    return %arg0, %arg2 : i32, i32
  }
  func.func @transform_1(%arg0: i32, %arg1: i32, %arg2: i32) -> (i32, i32) {
    %c0_i32 = arith.constant 0 : i32
    return %arg2, %arg1 : i32, i32
  }
  func.func @transform_2(%arg0: i32, %arg1: i32, %arg2: i32) -> (i32, i32) {
    %c0_i32 = arith.constant 0 : i32
    %c0_i32_0 = arith.constant 0 : i32
    return %c0_i32, %arg1 : i32, i32
  }
  func.func @transform_3(%arg0: i32, %arg1: i32, %arg2: i32) -> (i32, i32) {
    %c0_i32 = arith.constant 0 : i32
    return %arg0, %arg1 : i32, i32
  }
}

</mosaic_0001>

<llo_original>
// kernel: vanilla_transformer_forward.49
$region0: #{vanilla_transformer_forward.49}
  #allocation0 [shape = 'u32[]', space=smem, size = 0x4, offset = 0x4, fixed_abs, tag = 'smem constant byte address 0x4 - core index']
  #allocation1 [shape = 'u32[144,128]{1,0:T(1,128)}', space=vmem, size = 0x12000, scoped, tag = 'internal scratch']
  #allocation2 [shape = 'f32[16,32]{1,0:T(8,128)}', space=vmem, size = 0x2000, scoped, tag = 'scratch operand']
  %s0 = inlined_call_operand.vmem [shape: bf16[16,32], index: 0, kind: input, shape index: {}]
  %s1 = inlined_call_operand.vmem [shape: bf16[32,32], index: 1, kind: input, shape index: {}]
  %s2 = inlined_call_operand.vmem [shape: f32[1,32], index: 2, kind: input, shape index: {}]
  %s3 = inlined_call_operand.vmem [shape: bf16[16,32], index: 3, kind: input, shape index: {}]
  %s4 = inlined_call_operand.vmem [shape: bf16[16,32], index: 4, kind: output, shape index: {}]
  %s5 = sld [smem:[#allocation0]]
  $region34: #{vanilla_transformer_forward.49} parent=0
    _
  %s7 = ssub.s32 1, %s5
  %s8 = scalar_select 0, %s7, %s5
  // Predicated region
  $region2: #{vanilla_transformer_forward.49} parent=0 // pred_check
    _
  $region3: #{vanilla_transformer_forward.49} parent=0 // pred_check_branch
    %10 = sbr.rel (0) target = $region5
  $region4: #{vanilla_transformer_forward.49} parent=0 // pred_region
    _
  $region5: #{vanilla_transformer_forward.49} parent=0 // pred_fallthru
    _
  // Predicated region
  $region6: #{vanilla_transformer_forward.49} parent=0 // pred_check
    _
  $region7: #{vanilla_transformer_forward.49} parent=0 // pred_check_branch
    %12 = sbr.rel (0) target = $region9
  $region8: #{vanilla_transformer_forward.49} parent=0 // pred_region
    _
  $region9: #{vanilla_transformer_forward.49} parent=0 // pred_fallthru
    _
  // Predicated region
  $region10: #{vanilla_transformer_forward.49} parent=0 // pred_check
    _
  $region11: #{vanilla_transformer_forward.49} parent=0 // pred_check_branch
    %14 = sbr.rel (0) target = $region13
  $region12: #{vanilla_transformer_forward.49} parent=0 // pred_region
    _
  $region13: #{vanilla_transformer_forward.49} parent=0 // pred_fallthru
    _
  // Predicated region
  $region14: #{vanilla_transformer_forward.49} parent=0 // pred_check
    _
  $region15: #{vanilla_transformer_forward.49} parent=0 // pred_check_branch
    %16 = sbr.rel (0) target = $region17
  $region16: #{vanilla_transformer_forward.49} parent=0 // pred_region
    _
  $region17: #{vanilla_transformer_forward.49} parent=0 // pred_fallthru
    _
  %p18 = scmp.eq.s32.totalorder 0, 0
  // Predicated region
  $region18: #{vanilla_transformer_forward.49} parent=0 // pred_check
    %p19 = pneg %p18
  $region19: #{vanilla_transformer_forward.49} parent=0 // pred_check_branch
    %21 = sbr.rel (%p19) target = $region21
  $region20: #{vanilla_transformer_forward.49} parent=0 // pred_region
    %vm22 = vcmask 261120
    %23 = vst.msk [vmem:[#allocation2] sm:$0xff] %vm22, 0.0
    %24 = vst.msk [vmem:[#allocation2 + $0x8] sm:$0xff] %vm22, 0.0
  $region21: #{vanilla_transformer_forward.49} parent=0 // pred_fallthru
    _
  %v25 = vld [vmem:[#allocation2] sm:$0xff]
  %v26 = vld [vmem:[#allocation2 + $0x8] sm:$0xff]
  %v27 = vld [vmem:[%s0] sm:$0xf]
  %v28 = vld [vmem:[%s0 + $0x4] sm:$0xf]
  %v29 = vld [vmem:[%s1] sm:$0xf]
  %v30 = vld [vmem:[%s1 + $0x4] sm:$0xf]
  %v31 = vld [vmem:[%s1 + $0x8] sm:$0xf]
  %v32 = vld [vmem:[%s1 + $0xc] sm:$0xf]
  %v35 = vunpack.c.l.b16 %v27
  %v36 = vunpack.c.l.b16 %v28
  %v37 = vpack.c.b16 %v36, %v35
  %v42 = vunpack.c.l.b16 %v29
  %v43 = vunpack.c.l.b16 %v30
  %v44 = vunpack.c.l.b16 %v31
  %v45 = vunpack.c.l.b16 %v32
  %v46 = vpack.c.b16 %v43, %v42
  %v47 = vpack.c.b16 %v45, %v44
  %vm50 = vcmask 261120
  %v52 = vsel %vm50, %v37, 0
  %54 = vmatprep.subr.bf16.mxu0 0
  %55 = vmatpush1.bf16.msra.mxu0 %v46
  %56 = vmatprep.subr.bf16.mxu0 0
  %57 = vmatpush1.bf16.msra.mxu0 %v47
  %58 = vmatprep.subr.bf16.mxu0 0
  %59 = vmatpush1.bf16.msra.mxu0 0
  %60 = vmatprep.subr.bf16.mxu0 0
  %61 = vmatpush1.bf16.msra.mxu0 0
  %62 = vmatprep.subr.bf16.mxu0 0
  %63 = vmatpush1.bf16.msra.mxu0 0
  %64 = vmatprep.subr.bf16.mxu0 0
  %65 = vmatpush1.bf16.msra.mxu0 0
  %66 = vmatprep.subr.bf16.mxu0 0
  %67 = vmatpush1.bf16.msra.mxu0 0
  %68 = vmatprep.subr.bf16.mxu0 0
  %69 = vmatpush1.bf16.msra.mxu0 0
  %70 = vmatprep.subr.bf16.mxu0 0
  %71 = vmatpush1.bf16.msra.mxu0 0
  %72 = vmatprep.subr.bf16.mxu0 0
  %73 = vmatpush1.bf16.msra.mxu0 0
  %74 = vmatprep.subr.bf16.mxu0 0
  %75 = vmatpush1.bf16.msra.mxu0 0
  %76 = vmatprep.subr.bf16.mxu0 0
  %77 = vmatpush1.bf16.msra.mxu0 0
  %78 = vmatprep.subr.bf16.mxu0 0
  %79 = vmatpush1.bf16.msra.mxu0 0
  %80 = vmatprep.subr.bf16.mxu0 0
  %81 = vmatpush1.bf16.msra.mxu0 0
  %82 = vmatprep.subr.bf16.mxu0 0
  %83 = vmatpush1.bf16.msra.mxu0 0
  %84 = vmatprep.subr.bf16.mxu0 0
  %85 = vmatpush1.bf16.msra.mxu0 0
  %86 = vmatprep.mubr.bf16.mxu0 0
  %87 = vmatmul.mubr.bf16.gmra.mrb[0].mxu0 %v52
  %v88 = vpop.f32.mrb[0].mxu0
  %v89 = vadd.f32 0.0, %v88
  %v90 = vpop.f32.mrb[0].mxu0
  %v91 = vpop.f32.mrb[0].mxu0
  %v92 = vadd.f32 0.0, %v91
  %v93 = vpop.f32.mrb[0].mxu0
  %94 = vdwg.mxu0
  %v95 = vadd.f32 %v25, %v89
  %v96 = vadd.f32 %v26, %v92
  %97 = vst.msk [vmem:[#allocation2] sm:$0xff] %vm50, %v95
  %98 = vst.msk [vmem:[#allocation2 + $0x8] sm:$0xff] %vm50, %v96
  // Predicated region
  $region22: #{vanilla_transformer_forward.49} parent=0 // pred_check
    %p99 = pneg %p18
  $region23: #{vanilla_transformer_forward.49} parent=0 // pred_check_branch
    %101 = sbr.rel (%p99) target = $region25
  $region24: #{vanilla_transformer_forward.49} parent=0 // pred_region
    %v102 = vld [vmem:[#allocation2] sm:$0xff]
    %v103 = vld [vmem:[#allocation2 + $0x8] sm:$0xff]
    %v104 = vld [vmem:[%s2] sm:$0x1]
    %v106 = vlaneseq
    %v107 = vshrl.u32 %v106, 7
    %v108 = vsub.s32 0, %v107
    %v109 = vrot.slane %v104, %v108
    %v111 = vadd.f32 %v102, %v109
    %v112 = vadd.f32 %v103, %v109
    %v113 = vld [vmem:[%s3] sm:$0xf]
    %v114 = vld [vmem:[%s3 + $0x4] sm:$0xf]
    %v115 = vunpack.c.l.bf16 %v113
    %v116 = vunpack.c.l.bf16 %v114
    %v117 = vadd.f32 %v111, %v115
    %v118 = vadd.f32 %v112, %v116
    %v119 = vpack.c.bf16 %v118, %v117
    %v121 = vunpack.c.l.b16 %v119
    %v122 = vunpack.c.h.b16 %v119
    %v123 = vpack.c.b16 %v121, %v121
    %v124 = vpack.c.b16 %v122, %v122
    %vm127 = vcmask 257024
    %128 = vst.msk [vmem:[%s4] sm:$0xf] %vm127, %v123
    %129 = vst.msk [vmem:[%s4 + $0x4] sm:$0xf] %vm127, %v124
  $region25: #{vanilla_transformer_forward.49} parent=0 // pred_fallthru
    _
  // Predicated region
  $region26: #{vanilla_transformer_forward.49} parent=0 // pred_check
    _
  $region27: #{vanilla_transformer_forward.49} parent=0 // pred_check_branch
    %131 = sbr.rel (0) target = $region29
  $region28: #{vanilla_transformer_forward.49} parent=0 // pred_region
    _
  $region29: #{vanilla_transformer_forward.49} parent=0 // pred_fallthru
    _
  // Predicated region
  $region30: #{vanilla_transformer_forward.49} parent=0 // pred_check
    _
  $region31: #{vanilla_transformer_forward.49} parent=0 // pred_check_branch
    %133 = sbr.rel (0) target = $region33
  $region32: #{vanilla_transformer_forward.49} parent=0 // pred_region
    _
  $region33: #{vanilla_transformer_forward.49} parent=0 // pred_fallthru
    _

// kernel: vanilla_transformer_forward.50
$region0: #{vanilla_transformer_forward.50}
  #allocation0 [shape = 'u32[]', space=smem, size = 0x4, offset = 0x4, fixed_abs, tag = 'smem constant byte address 0x4 - core index']
  #allocation1 [shape = 'u32[144,128]{1,0:T(1,128)}', space=vmem, size = 0x12000, scoped, tag = 'internal scratch']
  %s0 = inlined_call_operand.vmem [shape: bf16[16,32], index: 0, kind: input, shape index: {}]
  %s1 = inlined_call_operand.vmem [shape: f32[1,32], index: 1, kind: input, shape index: {}]
  %s2 = inlined_call_operand.vmem [shape: f32[1,32], index: 2, kind: input, shape index: {}]
  %s3 = inlined_call_operand.vmem [shape: bf16[16,32], index: 3, kind: output, shape index: {}]
  %s4 = sld [smem:[#allocation0]]
  $region22: #{vanilla_transformer_forward.50} parent=0
    _
  %s6 = ssub.s32 1, %s4
  %s7 = scalar_select 0, %s6, %s4
  // Predicated region
  $region2: #{vanilla_transformer_forward.50} parent=0 // pred_check
    _
  $region3: #{vanilla_transformer_forward.50} parent=0 // pred_check_branch
    %9 = sbr.rel (0) target = $region5
  $region4: #{vanilla_transformer_forward.50} parent=0 // pred_region
    _
  $region5: #{vanilla_transformer_forward.50} parent=0 // pred_fallthru
    _
  // Predicated region
  $region6: #{vanilla_transformer_forward.50} parent=0 // pred_check
    _
  $region7: #{vanilla_transformer_forward.50} parent=0 // pred_check_branch
    %11 = sbr.rel (0) target = $region9
  $region8: #{vanilla_transformer_forward.50} parent=0 // pred_region
    _
  $region9: #{vanilla_transformer_forward.50} parent=0 // pred_fallthru
    _
  // Predicated region
  $region10: #{vanilla_transformer_forward.50} parent=0 // pred_check
    _
  $region11: #{vanilla_transformer_forward.50} parent=0 // pred_check_branch
    %13 = sbr.rel (0) target = $region13
  $region12: #{vanilla_transformer_forward.50} parent=0 // pred_region
    _
  $region13: #{vanilla_transformer_forward.50} parent=0 // pred_fallthru
    _
  %v14 = vld [vmem:[%s0] sm:$0xf]
  %v15 = vld [vmem:[%s0 + $0x4] sm:$0xf]
  %v16 = vunpack.c.l.bf16 %v14
  %v17 = vunpack.c.l.bf16 %v15
  %vm18 = vcmask 261120
  %v19 = vsel %vm18, %v16, 0.0
  %20 = vadd.xlane.f32.xlu0 %v19
  %v21 = vpop.xlane.xlu0 %20
  %v22 = vsel %vm18, %v17, 0.0
  %23 = vadd.xlane.f32.xlu0 %v22
  %v24 = vpop.xlane.xlu0 %23
  %v25 = vrcp.pop 32.0
  %v26 = vmul.f32 %v21, %v25
  %v27 = vmul.f32 %v24, %v25
  %v28 = vsub.f32 %v16, %v26
  %v29 = vsub.f32 %v17, %v27
  %v30 = vmul.f32 %v28, %v28
  %v31 = vmul.f32 %v29, %v29
  %v32 = vsel %vm18, %v30, 0.0
  %33 = vadd.xlane.f32.xlu0 %v32
  %v34 = vpop.xlane.xlu0 %33
  %v35 = vsel %vm18, %v31, 0.0
  %36 = vadd.xlane.f32.xlu0 %v35
  %v37 = vpop.xlane.xlu0 %36
  %v38 = vmul.f32 %v34, %v25
  %v39 = vmul.f32 %v37, %v25
  %v40 = vadd.f32 %v38, 1e-05
  %v41 = vadd.f32 %v39, 1e-05
  %v42 = vrsqrt.pop %v40
  %v43 = vrsqrt.pop %v41
  %v44 = vmul.f32 %v28, %v42
  %v45 = vmul.f32 %v29, %v43
  %v46 = vld [vmem:[%s1] sm:$0x1]
  %v48 = vlaneseq
  %v49 = vshrl.u32 %v48, 7
  %v50 = vsub.s32 0, %v49
  %v51 = vrot.slane %v46, %v50
  %v53 = vmul.f32 %v44, %v51
  %v54 = vmul.f32 %v45, %v51
  %v55 = vld [vmem:[%s2] sm:$0x1]
  %v57 = vlaneseq
  %v58 = vshrl.u32 %v57, 7
  %v59 = vsub.s32 0, %v58
  %v60 = vrot.slane %v55, %v59
  %v62 = vadd.f32 %v53, %v60
  %v63 = vadd.f32 %v54, %v60
  %v64 = vpack.c.bf16 %v63, %v62
  %v66 = vunpack.c.l.b16 %v64
  %v67 = vunpack.c.h.b16 %v64
  %v68 = vpack.c.b16 %v66, %v66
  %v69 = vpack.c.b16 %v67, %v67
  %vm72 = vcmask 257024
  %73 = vst.msk [vmem:[%s3] sm:$0xf] %vm72, %v68
  %74 = vst.msk [vmem:[%s3 + $0x4] sm:$0xf] %vm72, %v69
  // Predicated region
  $region14: #{vanilla_transformer_forward.50} parent=0 // pred_check
    _
  $region15: #{vanilla_transformer_forward.50} parent=0 // pred_check_branch
    %76 = sbr.rel (0) target = $region17
  $region16: #{vanilla_transformer_forward.50} parent=0 // pred_region
    _
  $region17: #{vanilla_transformer_forward.50} parent=0 // pred_fallthru
    _
  // Predicated region
  $region18: #{vanilla_transformer_forward.50} parent=0 // pred_check
    _
  $region19: #{vanilla_transformer_forward.50} parent=0 // pred_check_branch
    %78 = sbr.rel (0) target = $region21
  $region20: #{vanilla_transformer_forward.50} parent=0 // pred_region
    _
  $region21: #{vanilla_transformer_forward.50} parent=0 // pred_fallthru
    _

// kernel: vanilla_transformer_forward.47
$region0: #{vanilla_transformer_forward.47}
  #allocation0 [shape = 'u32[]', space=smem, size = 0x4, offset = 0x4, fixed_abs, tag = 'smem constant byte address 0x4 - core index']
  #allocation1 [shape = 'u32[144,128]{1,0:T(1,128)}', space=vmem, size = 0x12000, scoped, tag = 'internal scratch']
  #allocation2 [shape = 'f32[16,96]{1,0:T(8,128)}', space=vmem, size = 0x2000, scoped, tag = 'scratch operand']
  %s0 = inlined_call_operand.vmem [shape: bf16[16,32], index: 0, kind: input, shape index: {}]
  %s1 = inlined_call_operand.vmem [shape: bf16[32,96], index: 1, kind: input, shape index: {}]
  %s2 = inlined_call_operand.vmem [shape: f32[1,96], index: 2, kind: input, shape index: {}]
  %s3 = inlined_call_operand.vmem [shape: bf16[16,96], index: 3, kind: output, shape index: {}]
  %s4 = sld [smem:[#allocation0]]
  $region30: #{vanilla_transformer_forward.47} parent=0
    _
  %s6 = ssub.s32 1, %s4
  %s7 = scalar_select 0, %s6, %s4
  // Predicated region
  $region2: #{vanilla_transformer_forward.47} parent=0 // pred_check
    _
  $region3: #{vanilla_transformer_forward.47} parent=0 // pred_check_branch
    %9 = sbr.rel (0) target = $region5
  $region4: #{vanilla_transformer_forward.47} parent=0 // pred_region
    _
  $region5: #{vanilla_transformer_forward.47} parent=0 // pred_fallthru
    _
  // Predicated region
  $region6: #{vanilla_transformer_forward.47} parent=0 // pred_check
    _
  $region7: #{vanilla_transformer_forward.47} parent=0 // pred_check_branch
    %11 = sbr.rel (0) target = $region9
  $region8: #{vanilla_transformer_forward.47} parent=0 // pred_region
    _
  $region9: #{vanilla_transformer_forward.47} parent=0 // pred_fallthru
    _
  // Predicated region
  $region10: #{vanilla_transformer_forward.47} parent=0 // pred_check
    _
  $region11: #{vanilla_transformer_forward.47} parent=0 // pred_check_branch
    %13 = sbr.rel (0) target = $region13
  $region12: #{vanilla_transformer_forward.47} parent=0 // pred_region
    _
  $region13: #{vanilla_transformer_forward.47} parent=0 // pred_fallthru
    _
  %p15 = scmp.eq.s32.totalorder 0, 0
  // Predicated region
  $region14: #{vanilla_transformer_forward.47} parent=0 // pred_check
    %p16 = pneg %p15
  $region15: #{vanilla_transformer_forward.47} parent=0 // pred_check_branch
    %18 = sbr.rel (%p16) target = $region17
  $region16: #{vanilla_transformer_forward.47} parent=0 // pred_region
    %vm19 = vcmask 785408
    %20 = vst.msk [vmem:[#allocation2] sm:$0xff] %vm19, 0.0
    %21 = vst.msk [vmem:[#allocation2 + $0x8] sm:$0xff] %vm19, 0.0
  $region17: #{vanilla_transformer_forward.47} parent=0 // pred_fallthru
    _
  %v22 = vld [vmem:[#allocation2] sm:$0xff]
  %v23 = vld [vmem:[#allocation2 + $0x8] sm:$0xff]
  %v24 = vld [vmem:[%s0] sm:$0xf]
  %v25 = vld [vmem:[%s0 + $0x4] sm:$0xf]
  %v26 = vld [vmem:[%s1] sm:$0xf]
  %v27 = vld [vmem:[%s1 + $0x4] sm:$0xf]
  %v28 = vld [vmem:[%s1 + $0x8] sm:$0xf]
  %v29 = vld [vmem:[%s1 + $0xc] sm:$0xf]
  %v32 = vunpack.c.l.b16 %v24
  %v33 = vunpack.c.l.b16 %v25
  %v34 = vpack.c.b16 %v33, %v32
  %v39 = vunpack.c.l.b16 %v26
  %v40 = vunpack.c.l.b16 %v27
  %v41 = vunpack.c.l.b16 %v28
  %v42 = vunpack.c.l.b16 %v29
  %v43 = vpack.c.b16 %v40, %v39
  %v44 = vpack.c.b16 %v42, %v41
  %vm47 = vcmask 261120
  %v49 = vsel %vm47, %v34, 0
  %51 = vmatprep.subr.bf16.mxu0 0
  %52 = vmatpush1.bf16.msra.mxu0 %v43
  %53 = vmatprep.subr.bf16.mxu0 0
  %54 = vmatpush1.bf16.msra.mxu0 %v44
  %55 = vmatprep.subr.bf16.mxu0 0
  %56 = vmatpush1.bf16.msra.mxu0 0
  %57 = vmatprep.subr.bf16.mxu0 0
  %58 = vmatpush1.bf16.msra.mxu0 0
  %59 = vmatprep.subr.bf16.mxu0 0
  %60 = vmatpush1.bf16.msra.mxu0 0
  %61 = vmatprep.subr.bf16.mxu0 0
  %62 = vmatpush1.bf16.msra.mxu0 0
  %63 = vmatprep.subr.bf16.mxu0 0
  %64 = vmatpush1.bf16.msra.mxu0 0
  %65 = vmatprep.subr.bf16.mxu0 0
  %66 = vmatpush1.bf16.msra.mxu0 0
  %67 = vmatprep.subr.bf16.mxu0 0
  %68 = vmatpush1.bf16.msra.mxu0 0
  %69 = vmatprep.subr.bf16.mxu0 0
  %70 = vmatpush1.bf16.msra.mxu0 0
  %71 = vmatprep.subr.bf16.mxu0 0
  %72 = vmatpush1.bf16.msra.mxu0 0
  %73 = vmatprep.subr.bf16.mxu0 0
  %74 = vmatpush1.bf16.msra.mxu0 0
  %75 = vmatprep.subr.bf16.mxu0 0
  %76 = vmatpush1.bf16.msra.mxu0 0
  %77 = vmatprep.subr.bf16.mxu0 0
  %78 = vmatpush1.bf16.msra.mxu0 0
  %79 = vmatprep.subr.bf16.mxu0 0
  %80 = vmatpush1.bf16.msra.mxu0 0
  %81 = vmatprep.subr.bf16.mxu0 0
  %82 = vmatpush1.bf16.msra.mxu0 0
  %83 = vmatprep.mubr.bf16.mxu0 0
  %84 = vmatmul.mubr.bf16.gmra.mrb[0].mxu0 %v49
  %v85 = vpop.f32.mrb[0].mxu0
  %v86 = vadd.f32 0.0, %v85
  %v87 = vpop.f32.mrb[0].mxu0
  %v88 = vpop.f32.mrb[0].mxu0
  %v89 = vadd.f32 0.0, %v88
  %v90 = vpop.f32.mrb[0].mxu0
  %91 = vdwg.mxu0
  %v92 = vadd.f32 %v22, %v86
  %v93 = vadd.f32 %v23, %v89
  %vm94 = vcmask 785408
  %95 = vst.msk [vmem:[#allocation2] sm:$0xff] %vm94, %v92
  %96 = vst.msk [vmem:[#allocation2 + $0x8] sm:$0xff] %vm94, %v93
  // Predicated region
  $region18: #{vanilla_transformer_forward.47} parent=0 // pred_check
    %p97 = pneg %p15
  $region19: #{vanilla_transformer_forward.47} parent=0 // pred_check_branch
    %99 = sbr.rel (%p97) target = $region21
  $region20: #{vanilla_transformer_forward.47} parent=0 // pred_region
    %v100 = vld [vmem:[#allocation2] sm:$0xff]
    %v101 = vld [vmem:[#allocation2 + $0x8] sm:$0xff]
    %v102 = vld [vmem:[%s2] sm:$0x1]
    %v104 = vlaneseq
    %v105 = vshrl.u32 %v104, 7
    %v106 = vsub.s32 0, %v105
    %v107 = vrot.slane %v102, %v106
    %v109 = vadd.f32 %v100, %v107
    %v110 = vadd.f32 %v101, %v107
    %v111 = vpack.c.bf16 %v110, %v109
    %v113 = vunpack.c.l.b16 %v111
    %v114 = vunpack.c.h.b16 %v111
    %v115 = vpack.c.b16 %v113, %v113
    %v116 = vpack.c.b16 %v114, %v114
    %vm119 = vcmask 781312
    %120 = vst.msk [vmem:[%s3] sm:$0xf] %vm119, %v115
    %121 = vst.msk [vmem:[%s3 + $0x4] sm:$0xf] %vm119, %v116
  $region21: #{vanilla_transformer_forward.47} parent=0 // pred_fallthru
    _
  // Predicated region
  $region22: #{vanilla_transformer_forward.47} parent=0 // pred_check
    _
  $region23: #{vanilla_transformer_forward.47} parent=0 // pred_check_branch
    %123 = sbr.rel (0) target = $region25
  $region24: #{vanilla_transformer_forward.47} parent=0 // pred_region
    _
  $region25: #{vanilla_transformer_forward.47} parent=0 // pred_fallthru
    _
  // Predicated region
  $region26: #{vanilla_transformer_forward.47} parent=0 // pred_check
    _
  $region27: #{vanilla_transformer_forward.47} parent=0 // pred_check_branch
    %125 = sbr.rel (0) target = $region29
  $region28: #{vanilla_transformer_forward.47} parent=0 // pred_region
    _
  $region29: #{vanilla_transformer_forward.47} parent=0 // pred_fallthru
    _

// kernel: vanilla_transformer_forward.48
$region0: #{vanilla_transformer_forward.48}
  #allocation0 [shape = 'u32[]', space=smem, size = 0x4, offset = 0x4, fixed_abs, tag = 'smem constant byte address 0x4 - core index']
  #allocation1 [shape = 'u32[144,128]{1,0:T(1,128)}', space=vmem, size = 0x12000, scoped, tag = 'internal scratch']
  %s0 = inlined_call_operand.vmem [shape: bf16[8,8,8], index: 0, kind: input, shape index: {}]
  %s1 = inlined_call_operand.vmem [shape: bf16[8,8,8], index: 1, kind: input, shape index: {}]
  %s2 = inlined_call_operand.vmem [shape: bf16[8,8,8], index: 2, kind: input, shape index: {}]
  %s3 = inlined_call_operand.vmem [shape: bf16[8,8,8], index: 3, kind: output, shape index: {0}]
  %s4 = inlined_call_operand.hbm [shape: bf16[8,8,8], index: 4, kind: output, shape index: {1}]
  %5 = xla_tuple %s3, %s4
  %s6 = sld [smem:[#allocation0]]
  $region53: #{vanilla_transformer_forward.48} parent=0
    _
  %s8 = ssub.s32 1, %s6
  %s9 = scalar_select 0, %s8, %s6
  $region1: #{vanilla_transformer_forward.48} parent=0
    #allocation2 [shape = 'u8[4096]{0}', space=vmem, size = 0x1000, scoped, tag = 'output window, operand 1']
    #allocation3 [shape = 's32[2]{0}', space=sflag, size = 0x8, scoped, tag = 'scoped memory for vanilla_transformer_forward.48']
    %10 = vsyncpa [#allocation3], 0
    %s11 = scalar_lea.sflag [#allocation3], 1
    %12 = vsyncpa %s11, 0
    loop: start=0, step=1, limit=10
    $region2: #{vanilla_transformer_forward.48} parent=1 // loop_pre_header
      _
    $region3: #{vanilla_transformer_forward.48} parent=1 // loop_header
      %s14 = sphi 0, %s18
      %p15 = scmp.ge.s32.totalorder %s14, 10
      %s21 = sphi 0, %s33
      %s22 = sphi 0, %s29
      %s23 = sphi 0, %s21
      %s24 = sphi 0, %s22
      %s25 = sphi 0, %s23
      %s26 = sphi 0, %s24
      %s38 = sphi 0, %s40
      %s41 = sphi 0, %s38
      %s42 = sphi 0, %s41
      %s58 = sphi 0, %s42
      %s64 = sphi 0, %s66
      %s67 = sphi 0, %s64
      %s68 = sphi 0, %s67
      %s84 = sphi 0, %s68
      %s90 = sphi 0, %s92
      %s93 = sphi 0, %s90
      %s94 = sphi 0, %s93
      %s110 = sphi 0, %s94
      %s118 = sphi 0, %s120
      %s121 = sphi 0, %s118
      %s122 = sphi 0, %s121
      %s138 = sphi 0, %s122
      %s146 = sphi 0, %s148
      %s149 = sphi 0, %s146
      %s150 = sphi 0, %s149
      %s166 = sphi 0, %s150
    $region4: #{vanilla_transformer_forward.48} parent=1 // loop_header_branch
      %17 = sbr.rel (%p15) target = $region8
    $region5: #{vanilla_transformer_forward.48} parent=1 // loop_body
      %s19 = ssub.s32 %s14, 1
      %s20 = ssub.s32 %s14, 2
      %s27 = sadd.s32 1, %s22
      %p28 = scmp.ge.s32.totalorder %s27, 1
      %s29 = scalar_select %p28, 0, %s27
      %s30 = sadd.s32 1, %s21
      %s31 = scalar_select %p28, %s30, %s21
      %p32 = scmp.ge.s32.totalorder %s31, 8
      %s33 = scalar_select %p32, 0, %s31
      %s34 = ssub.s32 %s21, %s33
      %s35 = ssub.s32 %s22, %s29
      %s36 = sor.u32 %s34, %s35
      %p37 = scmp.eq.s32.totalorder %s36, 0
      %s39 = sadd.s32 %s38, 1
      %s40 = scalar_select %p37, %s38, %s39
      %p43 = pneg %p37
      %p44 = scmp.eq.s32.totalorder %s14, 7
      %p45 = por %p43, %p44
      %p46 = scmp.ne.s32.totalorder %s38, %s41
      %p47 = scmp.eq.s32.totalorder %s14, 0
      %p48 = por %p46, %p47
      %p49 = scmp.ne.s32.totalorder %s38, %s41
      %p50 = scmp.eq.s32.totalorder %s19, 7
      %p51 = por %p49, %p50
      %p52 = scmp.ne.s32.totalorder %s41, %s42
      %p53 = scmp.eq.s32.totalorder %s19, 0
      %p54 = por %p52, %p53
      %p55 = scmp.ne.s32.totalorder %s41, %s42
      %p56 = scmp.eq.s32.totalorder %s20, 7
      %p57 = por %p55, %p56
      %p59 = scmp.ne.s32.totalorder %s42, %s58
      %p60 = scmp.eq.s32.totalorder %s20, 0
      %p61 = por %p59, %p60
      %s62 = ssub.s32 %s21, %s33
      %p63 = scmp.eq.s32.totalorder %s62, 0
      %s65 = sadd.s32 %s64, 1
      %s66 = scalar_select %p63, %s64, %s65
      %p69 = pneg %p63
      %p70 = scmp.eq.s32.totalorder %s14, 7
      %p71 = por %p69, %p70
      %p72 = scmp.ne.s32.totalorder %s64, %s67
      %p73 = scmp.eq.s32.totalorder %s14, 0
      %p74 = por %p72, %p73
      %p75 = scmp.ne.s32.totalorder %s64, %s67
      %p76 = scmp.eq.s32.totalorder %s19, 7
      %p77 = por %p75, %p76
      %p78 = scmp.ne.s32.totalorder %s67, %s68
      %p79 = scmp.eq.s32.totalorder %s19, 0
      %p80 = por %p78, %p79
      %p81 = scmp.ne.s32.totalorder %s67, %s68
      %p82 = scmp.eq.s32.totalorder %s20, 7
      %p83 = por %p81, %p82
      %p85 = scmp.ne.s32.totalorder %s68, %s84
      %p86 = scmp.eq.s32.totalorder %s20, 0
      %p87 = por %p85, %p86
      %s88 = ssub.s32 %s21, %s33
      %p89 = scmp.eq.s32.totalorder %s88, 0
      %s91 = sadd.s32 %s90, 1
      %s92 = scalar_select %p89, %s90, %s91
      %p95 = pneg %p89
      %p96 = scmp.eq.s32.totalorder %s14, 7
      %p97 = por %p95, %p96
      %p98 = scmp.ne.s32.totalorder %s90, %s93
      %p99 = scmp.eq.s32.totalorder %s14, 0
      %p100 = por %p98, %p99
      %p101 = scmp.ne.s32.totalorder %s90, %s93
      %p102 = scmp.eq.s32.totalorder %s19, 7
      %p103 = por %p101, %p102
      %p104 = scmp.ne.s32.totalorder %s93, %s94
      %p105 = scmp.eq.s32.totalorder %s19, 0
      %p106 = por %p104, %p105
      %p107 = scmp.ne.s32.totalorder %s93, %s94
      %p108 = scmp.eq.s32.totalorder %s20, 7
      %p109 = por %p107, %p108
      %p111 = scmp.ne.s32.totalorder %s94, %s110
      %p112 = scmp.eq.s32.totalorder %s20, 0
      %p113 = por %p111, %p112
      %s114 = ssub.s32 %s21, %s33
      %s115 = ssub.s32 %s22, %s29
      %s116 = sor.u32 %s114, %s115
      %p117 = scmp.eq.s32.totalorder %s116, 0
      %s119 = sadd.s32 %s118, 1
      %s120 = scalar_select %p117, %s118, %s119
      %p123 = pneg %p117
      %p124 = scmp.eq.s32.totalorder %s14, 7
      %p125 = por %p123, %p124
      %p126 = scmp.ne.s32.totalorder %s118, %s121
      %p127 = scmp.eq.s32.totalorder %s14, 0
      %p128 = por %p126, %p127
      %p129 = scmp.ne.s32.totalorder %s118, %s121
      %p130 = scmp.eq.s32.totalorder %s19, 7
      %p131 = por %p129, %p130
      %p132 = scmp.ne.s32.totalorder %s121, %s122
      %p133 = scmp.eq.s32.totalorder %s19, 0
      %p134 = por %p132, %p133
      %p135 = scmp.ne.s32.totalorder %s121, %s122
      %p136 = scmp.eq.s32.totalorder %s20, 7
      %p137 = por %p135, %p136
      %p139 = scmp.ne.s32.totalorder %s122, %s138
      %p140 = scmp.eq.s32.totalorder %s20, 0
      %p141 = por %p139, %p140
      %s142 = ssub.s32 %s21, %s33
      %s143 = ssub.s32 %s22, %s29
      %s144 = sor.u32 %s142, %s143
      %p145 = scmp.eq.s32.totalorder %s144, 0
      %s147 = sadd.s32 %s146, 1
      %s148 = scalar_select %p145, %s146, %s147
      %p151 = pneg %p145
      %p152 = scmp.eq.s32.totalorder %s14, 7
      %p153 = por %p151, %p152
      %p154 = scmp.ne.s32.totalorder %s146, %s149
      %p155 = scmp.eq.s32.totalorder %s14, 0
      %p156 = por %p154, %p155
      %p157 = scmp.ne.s32.totalorder %s146, %s149
      %p158 = scmp.eq.s32.totalorder %s19, 7
      %p159 = por %p157, %p158
      %p160 = scmp.ne.s32.totalorder %s149, %s150
      %p161 = scmp.eq.s32.totalorder %s19, 0
      %p162 = por %p160, %p161
      %p163 = scmp.ne.s32.totalorder %s149, %s150
      %p164 = scmp.eq.s32.totalorder %s20, 7
      %p165 = por %p163, %p164
      %p167 = scmp.ne.s32.totalorder %s150, %s166
      %p168 = scmp.eq.s32.totalorder %s20, 0
      %p169 = por %p167, %p168
      %p170 = scmp.le.s32.totalorder 1, %s14
      %p171 = scmp.lt.s32.totalorder %s14, 9
      %p172 = pnand %p170, %p171
      %p173 = pneg %p172
      // Predicated region
      $region9: #{vanilla_transformer_forward.48} parent=5 // pred_check
        _
      $region10: #{vanilla_transformer_forward.48} parent=5 // pred_check_branch
        %175 = sbr.rel (%p172) target = $region12
      $region11: #{vanilla_transformer_forward.48} parent=5 // pred_region
        %s176 = ssub.s32 %s14, 1
      $region12: #{vanilla_transformer_forward.48} parent=5 // pred_fallthru
        _
      %p177 = scmp.lt.s32.totalorder %s14, 8
      // Predicated region
      $region13: #{vanilla_transformer_forward.48} parent=5 // pred_check
        %p178 = pneg %p177
      $region14: #{vanilla_transformer_forward.48} parent=5 // pred_check_branch
        %180 = sbr.rel (%p178) target = $region16
      $region15: #{vanilla_transformer_forward.48} parent=5 // pred_region
        // Predicated region
        $region17: #{vanilla_transformer_forward.48} parent=15 // pred_check
          %p181 = pneg %p48
        $region18: #{vanilla_transformer_forward.48} parent=15 // pred_check_branch
          %183 = sbr.rel (%p181) target = $region20
        $region19: #{vanilla_transformer_forward.48} parent=15 // pred_region
          %p184 = scmp.lt.s32.totalorder %s21, 7
          %s185 = scalar_select %p184, %s21, 7
          %p186 = scmp.lt.s32.totalorder %s22, 0
          %s187 = scalar_select %p186, %s22, 0
          %s188 = sadd.s32 %s187, %s185
          %s189 = smul.addr %s188, 4
          %s190 = scalar_lea.vmem %s0, %s189
        $region20: #{vanilla_transformer_forward.48} parent=15 // pred_fallthru
          _
        // Predicated region
        $region21: #{vanilla_transformer_forward.48} parent=15 // pred_check
          %p191 = pneg %p74
        $region22: #{vanilla_transformer_forward.48} parent=15 // pred_check_branch
          %193 = sbr.rel (%p191) target = $region24
        $region23: #{vanilla_transformer_forward.48} parent=15 // pred_region
          %p194 = scmp.lt.s32.totalorder %s21, 7
          %s195 = scalar_select %p194, %s21, 7
          %s196 = smul.addr %s195, 4
          %s197 = scalar_lea.vmem %s1, %s196
        $region24: #{vanilla_transformer_forward.48} parent=15 // pred_fallthru
          _
        // Predicated region
        $region25: #{vanilla_transformer_forward.48} parent=15 // pred_check
          %p198 = pneg %p100
        $region26: #{vanilla_transformer_forward.48} parent=15 // pred_check_branch
          %200 = sbr.rel (%p198) target = $region28
        $region27: #{vanilla_transformer_forward.48} parent=15 // pred_region
          %p201 = scmp.lt.s32.totalorder %s21, 7
          %s202 = scalar_select %p201, %s21, 7
          %s203 = smul.addr %s202, 4
          %s204 = scalar_lea.vmem %s2, %s203
        $region28: #{vanilla_transformer_forward.48} parent=15 // pred_fallthru
          _
      $region16: #{vanilla_transformer_forward.48} parent=5 // pred_fallthru
        _
      %p205 = scmp.le.s32.totalorder 1, %s14
      %p206 = scmp.lt.s32.totalorder %s14, 9
      %p207 = pnand %p205, %p206
      %p208 = pneg %p207
      // Predicated region
      $region29: #{vanilla_transformer_forward.48} parent=5 // pred_check
        _
      $region30: #{vanilla_transformer_forward.48} parent=5 // pred_check_branch
        %210 = sbr.rel (%p207) target = $region32
      $region31: #{vanilla_transformer_forward.48} parent=5 // pred_region
        %s211 = ssub.s32 %s14, 1
        %p212 = scmp.lt.s32.totalorder %s23, 7
        %s213 = scalar_select %p212, %s23, 7
        %p214 = scmp.lt.s32.totalorder %s24, 0
        %s215 = scalar_select %p214, %s24, 0
        %s216 = sadd.s32 %s215, %s213
        %s217 = smul.addr %s216, 4
        %s218 = scalar_lea.vmem %s0, %s217
        %p219 = pneg %p54
        %p220 = pneg %p51
        %p221 = scmp.lt.s32.totalorder %s23, 7
        %s222 = scalar_select %p221, %s23, 7
        %s223 = smul.addr %s222, 4
        %s224 = scalar_lea.vmem %s1, %s223
        %p225 = pneg %p80
        %p226 = pneg %p77
        %p227 = scmp.lt.s32.totalorder %s23, 7
        %s228 = scalar_select %p227, %s23, 7
        %s229 = smul.addr %s228, 4
        %s230 = scalar_lea.vmem %s2, %s229
        %p231 = pneg %p106
        %p232 = pneg %p103
        %p233 = pneg %p134
        %p234 = pneg %p131
        %p235 = scmp.lt.s32.totalorder %s23, 7
        %s236 = scalar_select %p235, %s23, 7
        %p237 = scmp.lt.s32.totalorder %s24, 0
        %s238 = scalar_select %p237, %s24, 0
        %s239 = sadd.s32 %s238, %s236
        %s240 = smul.addr %s239, 4
        %s241 = scalar_lea.vmem %s3, %s240
        %p242 = pneg %p162
        %p243 = pneg %p159
        %s244 = sand.u32 %s149, 1
        %s245 = scalar_lea.sflag [#allocation3], %s244
        %s246 = sand.u32 %s149, 1
        %s247 = smul.addr %s246, 4
        %s248 = scalar_lea.vmem [#allocation2], %s247
        %p249 = scmp.lt.s32.totalorder %s23, 7
        %s250 = scalar_select %p249, %s23, 7
        %p251 = scmp.lt.s32.totalorder %s24, 0
        %s252 = scalar_select %p251, %s24, 0
        %s253 = sadd.s32 %s252, %s250
        %s254 = smul.addr %s253, 4
        %s255 = scalar_lea.vmem %s0, %s254
        %p256 = scmp.lt.s32.totalorder %s23, 7
        %s257 = scalar_select %p256, %s23, 7
        %s258 = smul.addr %s257, 4
        %s259 = scalar_lea.vmem %s1, %s258
        %p260 = scmp.lt.s32.totalorder %s23, 7
        %s261 = scalar_select %p260, %s23, 7
        %s262 = smul.addr %s261, 4
        %s263 = scalar_lea.vmem %s2, %s262
        %p264 = scmp.lt.s32.totalorder %s23, 7
        %s265 = scalar_select %p264, %s23, 7
        %p266 = scmp.lt.s32.totalorder %s24, 0
        %s267 = scalar_select %p266, %s24, 0
        %s268 = sadd.s32 %s267, %s265
        %s269 = smul.addr %s268, 4
        %s270 = scalar_lea.vmem %s3, %s269
        %v272 = vld [vmem:[%s255] sm:$0xf]
        %v273 = vld [vmem:[%s259] sm:$0xf]
        %v274 = vld [vmem:[%s263] sm:$0xf]
        %vm275 = vcmask 64512
        %v277 = vsel %vm275, %v272, 0
        %v280 = vsel %vm275, %v273, 0
        %282 = vmatprep.subr.bf16.mxu0 0
        %283 = vmatpush1.bf16.xpose.msra.mxu0 %v280
        %284 = vmatprep.subr.bf16.mxu0 0
        %285 = vmatpush1.bf16.xpose.msra.mxu0 0
        %286 = vmatprep.subr.bf16.mxu0 0
        %287 = vmatpush1.bf16.xpose.msra.mxu0 0
        %288 = vmatprep.subr.bf16.mxu0 0
        %289 = vmatpush1.bf16.xpose.msra.mxu0 0
        %290 = vmatprep.subr.bf16.mxu0 0
        %291 = vmatpush1.bf16.xpose.msra.mxu0 0
        %292 = vmatprep.subr.bf16.mxu0 0
        %293 = vmatpush1.bf16.xpose.msra.mxu0 0
        %294 = vmatprep.subr.bf16.mxu0 0
        %295 = vmatpush1.bf16.xpose.msra.mxu0 0
        %296 = vmatprep.subr.bf16.mxu0 0
        %297 = vmatpush1.bf16.xpose.msra.mxu0 0
        %298 = vmatprep.subr.bf16.mxu0 0
        %299 = vmatpush1.bf16.xpose.msra.mxu0 0
        %300 = vmatprep.subr.bf16.mxu0 0
        %301 = vmatpush1.bf16.xpose.msra.mxu0 0
        %302 = vmatprep.subr.bf16.mxu0 0
        %303 = vmatpush1.bf16.xpose.msra.mxu0 0
        %304 = vmatprep.subr.bf16.mxu0 0
        %305 = vmatpush1.bf16.xpose.msra.mxu0 0
        %306 = vmatprep.subr.bf16.mxu0 0
        %307 = vmatpush1.bf16.xpose.msra.mxu0 0
        %308 = vmatprep.subr.bf16.mxu0 0
        %309 = vmatpush1.bf16.xpose.msra.mxu0 0
        %310 = vmatprep.subr.bf16.mxu0 0
        %311 = vmatpush1.bf16.xpose.msra.mxu0 0
        %312 = vmatprep.subr.bf16.mxu0 0
        %313 = vmatpush1.bf16.xpose.msra.mxu0 0
        %314 = vmatprep.mubr.bf16.mxu0 0
        %315 = vmatmul.mubr.bf16.gmra.mrb[0].mxu0 %v277
        %v316 = vpop.f32.mrb[0].mxu0
        %v317 = vadd.f32 0.0, %v316
        %v318 = vpop.f32.mrb[0].mxu0
        %v319 = vpop.f32.mrb[0].mxu0
        %v320 = vpop.f32.mrb[0].mxu0
        %321 = vdwg.mxu0
        %v322 = vmul.f32 %v317, 0.35355338
        %s323 = smul.u32 %s24, 8
        %v324 = vlaneseq
        %v325 = vshrl.u32 %v324, 7
        %v326 = vstv %s323
        %v327 = vadd.s32 %v325, %v326
        %v328 = vlaneseq
        %v329 = vand.u32 %v328, 127
        %vm330 = vcmp.ge.s32.totalorder %v327, %v329
        %v331 = vsel %vm330, %v322, -1e+09
        %v332 = vsel %vm275, %v331, -inf
        %333 = vmax.xlane.f32.xlu0 %v332
        %v334 = vpop.xlane.xlu0 %333
        %v335 = vsub.f32 %v331, %v334
        %v336 = vmul.f32 %v335, 1.442695
        %v337 = vpow.pop %v336
        %v338 = vsel %vm275, %v337, 0.0
        %339 = vadd.xlane.f32.xlu0 %v338
        %v340 = vpop.xlane.xlu0 %339
        %v341 = vrcp.pop %v340
        %v342 = vmul.f32 %v337, %v341
        %v343 = vpack.c.bf16 %v342, %v342
        %v345 = vsel %vm275, %v343, 0
        %vm347 = vcmask 1043456
        %v349 = vsel %vm347, %v274, 0
        %351 = vmatprep.subr.bf16.mxu0 0
        %352 = vmatpush1.bf16.msra.mxu0 %v349
        %353 = vmatprep.subr.bf16.mxu0 0
        %354 = vmatpush1.bf16.msra.mxu0 0
        %355 = vmatprep.subr.bf16.mxu0 0
        %356 = vmatpush1.bf16.msra.mxu0 0
        %357 = vmatprep.subr.bf16.mxu0 0
        %358 = vmatpush1.bf16.msra.mxu0 0
        %359 = vmatprep.subr.bf16.mxu0 0
        %360 = vmatpush1.bf16.msra.mxu0 0
        %361 = vmatprep.subr.bf16.mxu0 0
        %362 = vmatpush1.bf16.msra.mxu0 0
        %363 = vmatprep.subr.bf16.mxu0 0
        %364 = vmatpush1.bf16.msra.mxu0 0
        %365 = vmatprep.subr.bf16.mxu0 0
        %366 = vmatpush1.bf16.msra.mxu0 0
        %367 = vmatprep.subr.bf16.mxu0 0
        %368 = vmatpush1.bf16.msra.mxu0 0
        %369 = vmatprep.subr.bf16.mxu0 0
        %370 = vmatpush1.bf16.msra.mxu0 0
        %371 = vmatprep.subr.bf16.mxu0 0
        %372 = vmatpush1.bf16.msra.mxu0 0
        %373 = vmatprep.subr.bf16.mxu0 0
        %374 = vmatpush1.bf16.msra.mxu0 0
        %375 = vmatprep.subr.bf16.mxu0 0
        %376 = vmatpush1.bf16.msra.mxu0 0
        %377 = vmatprep.subr.bf16.mxu0 0
        %378 = vmatpush1.bf16.msra.mxu0 0
        %379 = vmatprep.subr.bf16.mxu0 0
        %380 = vmatpush1.bf16.msra.mxu0 0
        %381 = vmatprep.subr.bf16.mxu0 0
        %382 = vmatpush1.bf16.msra.mxu0 0
        %383 = vmatprep.mubr.bf16.mxu0 0
        %384 = vmatmul.mubr.bf16.gmra.mrb[0].mxu0 %v345
        %v385 = vpop.f32.mrb[0].mxu0
        %v386 = vadd.f32 0.0, %v385
        %v387 = vpop.f32.mrb[0].mxu0
        %v388 = vpop.f32.mrb[0].mxu0
        %v389 = vpop.f32.mrb[0].mxu0
        %390 = vdwg.mxu0
        %v391 = vpack.c.bf16 %v386, %v386
        %vm392 = vcmask 60416
        %393 = vst.msk [vmem:[%s270] sm:$0xf] %vm392, %v391
        %394 = vst.msk [vmem:[%s248] sm:$0xf] %vm392, %v343
        %p395 = scmp.lt.s32.totalorder %s23, 7
        %s396 = scalar_select %p395, %s23, 7
        %p397 = scmp.lt.s32.totalorder %s24, 0
        %s398 = scalar_select %p397, %s24, 0
        %s399 = sadd.s32 %s398, %s396
        %s400 = smul.addr %s399, 4
        %s401 = scalar_lea.vmem %s3, %s400
        %s402 = sand.u32 %s149, 1
        %s403 = scalar_lea.sflag [#allocation3], %s402
        %s404 = sand.u32 %s149, 1
        %s405 = smul.addr %s404, 4
        %s406 = scalar_lea.vmem [#allocation2], %s405
        // Predicated region
        $region33: #{vanilla_transformer_forward.48} parent=31 // pred_check
          %p407 = pneg %p131
        $region34: #{vanilla_transformer_forward.48} parent=31 // pred_check_branch
          %409 = sbr.rel (%p407) target = $region36
        $region35: #{vanilla_transformer_forward.48} parent=31 // pred_region
          _
        $region36: #{vanilla_transformer_forward.48} parent=31 // pred_fallthru
          _
        // Predicated region
        $region37: #{vanilla_transformer_forward.48} parent=31 // pred_check
          %p410 = pneg %p159
        $region38: #{vanilla_transformer_forward.48} parent=31 // pred_check_branch
          %412 = sbr.rel (%p410) target = $region40
        $region39: #{vanilla_transformer_forward.48} parent=31 // pred_region
          %s414 = ssub.s32 64, 64
          %415 = vsyncadd %s403, %s414
          %s416 = sadd.s32 %s24, %s23
          %s417 = smul.addr %s416, 64
          %s418 = scalar_lea.hbm %s4, %s417
          %s420 = sshll.u32 %s406, 4
          %s421 = int_to_ptr.vmem [resolvable:$true] %s420
          %423 = dma.vmem_to_hbm [thread:$0]  %s421, 64, %s418, %s403
        $region40: #{vanilla_transformer_forward.48} parent=31 // pred_fallthru
          _
      $region32: #{vanilla_transformer_forward.48} parent=5 // pred_fallthru
        _
      %p424 = scmp.le.s32.totalorder 2, %s14
      // Predicated region
      $region41: #{vanilla_transformer_forward.48} parent=5 // pred_check
        %p425 = pneg %p424
      $region42: #{vanilla_transformer_forward.48} parent=5 // pred_check_branch
        %427 = sbr.rel (%p425) target = $region44
      $region43: #{vanilla_transformer_forward.48} parent=5 // pred_region
        %s428 = ssub.s32 %s14, 2
        // Predicated region
        $region45: #{vanilla_transformer_forward.48} parent=43 // pred_check
          %p429 = pneg %p137
        $region46: #{vanilla_transformer_forward.48} parent=43 // pred_check_branch
          %431 = sbr.rel (%p429) target = $region48
        $region47: #{vanilla_transformer_forward.48} parent=43 // pred_region
          %p432 = scmp.lt.s32.totalorder %s25, 7
          %s433 = scalar_select %p432, %s25, 7
          %p434 = scmp.lt.s32.totalorder %s26, 0
          %s435 = scalar_select %p434, %s26, 0
          %s436 = sadd.s32 %s435, %s433
          %s437 = smul.addr %s436, 4
          %s438 = scalar_lea.vmem %s3, %s437
        $region48: #{vanilla_transformer_forward.48} parent=43 // pred_fallthru
          _
        // Predicated region
        $region49: #{vanilla_transformer_forward.48} parent=43 // pred_check
          %p439 = pneg %p165
        $region50: #{vanilla_transformer_forward.48} parent=43 // pred_check_branch
          %441 = sbr.rel (%p439) target = $region52
        $region51: #{vanilla_transformer_forward.48} parent=43 // pred_region
          %s442 = sand.u32 %s150, 1
          %s443 = scalar_lea.sflag [#allocation3], %s442
          %s444 = sand.u32 %s150, 1
          %s445 = smul.addr %s444, 4
          %s446 = scalar_lea.vmem [#allocation2], %s445
          %447 = dma.done %s443, 64
        $region52: #{vanilla_transformer_forward.48} parent=43 // pred_fallthru
          _
      $region44: #{vanilla_transformer_forward.48} parent=5 // pred_fallthru
        _
    $region6: #{vanilla_transformer_forward.48} parent=1 // loop_footer
      %s18 = sadd.s32 1, %s14
    $region7: #{vanilla_transformer_forward.48} parent=1 // loop_footer_branch
      %13 = sbr.rel target = $region3
    $region8: #{vanilla_transformer_forward.48} parent=1 // loop_exit
      _
    %448 = vsyncpa [#allocation3], 1
    %s449 = scalar_lea.sflag [#allocation3], 1
    %450 = vsyncpa %s449, 1

// kernel: vanilla_transformer_forward.51
$region0: #{vanilla_transformer_forward.51}
  #allocation0 [shape = 'u32[]', space=smem, size = 0x4, offset = 0x4, fixed_abs, tag = 'smem constant byte address 0x4 - core index']
  #allocation1 [shape = 'u32[144,128]{1,0:T(1,128)}', space=vmem, size = 0x12000, scoped, tag = 'internal scratch']
  #allocation2 [shape = 'f32[16,32]{1,0:T(8,128)}', space=vmem, size = 0x2000, scoped, tag = 'scratch operand']
  %s0 = inlined_call_operand.vmem [shape: bf16[16,32], index: 0, kind: input, shape index: {}]
  %s1 = inlined_call_operand.vmem [shape: bf16[32,32], index: 1, kind: input, shape index: {}]
  %s2 = inlined_call_operand.vmem [shape: f32[1,32], index: 2, kind: input, shape index: {}]
  %s3 = inlined_call_operand.vmem [shape: bf16[16,32], index: 3, kind: output, shape index: {}]
  %s4 = sld [smem:[#allocation0]]
  $region30: #{vanilla_transformer_forward.51} parent=0
    _
  %s6 = ssub.s32 1, %s4
  %s7 = scalar_select 0, %s6, %s4
  // Predicated region
  $region2: #{vanilla_transformer_forward.51} parent=0 // pred_check
    _
  $region3: #{vanilla_transformer_forward.51} parent=0 // pred_check_branch
    %9 = sbr.rel (0) target = $region5
  $region4: #{vanilla_transformer_forward.51} parent=0 // pred_region
    _
  $region5: #{vanilla_transformer_forward.51} parent=0 // pred_fallthru
    _
  // Predicated region
  $region6: #{vanilla_transformer_forward.51} parent=0 // pred_check
    _
  $region7: #{vanilla_transformer_forward.51} parent=0 // pred_check_branch
    %11 = sbr.rel (0) target = $region9
  $region8: #{vanilla_transformer_forward.51} parent=0 // pred_region
    _
  $region9: #{vanilla_transformer_forward.51} parent=0 // pred_fallthru
    _
  // Predicated region
  $region10: #{vanilla_transformer_forward.51} parent=0 // pred_check
    _
  $region11: #{vanilla_transformer_forward.51} parent=0 // pred_check_branch
    %13 = sbr.rel (0) target = $region13
  $region12: #{vanilla_transformer_forward.51} parent=0 // pred_region
    _
  $region13: #{vanilla_transformer_forward.51} parent=0 // pred_fallthru
    _
  %p15 = scmp.eq.s32.totalorder 0, 0
  // Predicated region
  $region14: #{vanilla_transformer_forward.51} parent=0 // pred_check
    %p16 = pneg %p15
  $region15: #{vanilla_transformer_forward.51} parent=0 // pred_check_branch
    %18 = sbr.rel (%p16) target = $region17
  $region16: #{vanilla_transformer_forward.51} parent=0 // pred_region
    %vm19 = vcmask 261120
    %20 = vst.msk [vmem:[#allocation2] sm:$0xff] %vm19, 0.0
    %21 = vst.msk [vmem:[#allocation2 + $0x8] sm:$0xff] %vm19, 0.0
  $region17: #{vanilla_transformer_forward.51} parent=0 // pred_fallthru
    _
  %v22 = vld [vmem:[#allocation2] sm:$0xff]
  %v23 = vld [vmem:[#allocation2 + $0x8] sm:$0xff]
  %v24 = vld [vmem:[%s0] sm:$0xf]
  %v25 = vld [vmem:[%s0 + $0x4] sm:$0xf]
  %v26 = vld [vmem:[%s1] sm:$0xf]
  %v27 = vld [vmem:[%s1 + $0x4] sm:$0xf]
  %v28 = vld [vmem:[%s1 + $0x8] sm:$0xf]
  %v29 = vld [vmem:[%s1 + $0xc] sm:$0xf]
  %v32 = vunpack.c.l.b16 %v24
  %v33 = vunpack.c.l.b16 %v25
  %v34 = vpack.c.b16 %v33, %v32
  %v39 = vunpack.c.l.b16 %v26
  %v40 = vunpack.c.l.b16 %v27
  %v41 = vunpack.c.l.b16 %v28
  %v42 = vunpack.c.l.b16 %v29
  %v43 = vpack.c.b16 %v40, %v39
  %v44 = vpack.c.b16 %v42, %v41
  %vm47 = vcmask 261120
  %v49 = vsel %vm47, %v34, 0
  %51 = vmatprep.subr.bf16.mxu0 0
  %52 = vmatpush1.bf16.msra.mxu0 %v43
  %53 = vmatprep.subr.bf16.mxu0 0
  %54 = vmatpush1.bf16.msra.mxu0 %v44
  %55 = vmatprep.subr.bf16.mxu0 0
  %56 = vmatpush1.bf16.msra.mxu0 0
  %57 = vmatprep.subr.bf16.mxu0 0
  %58 = vmatpush1.bf16.msra.mxu0 0
  %59 = vmatprep.subr.bf16.mxu0 0
  %60 = vmatpush1.bf16.msra.mxu0 0
  %61 = vmatprep.subr.bf16.mxu0 0
  %62 = vmatpush1.bf16.msra.mxu0 0
  %63 = vmatprep.subr.bf16.mxu0 0
  %64 = vmatpush1.bf16.msra.mxu0 0
  %65 = vmatprep.subr.bf16.mxu0 0
  %66 = vmatpush1.bf16.msra.mxu0 0
  %67 = vmatprep.subr.bf16.mxu0 0
  %68 = vmatpush1.bf16.msra.mxu0 0
  %69 = vmatprep.subr.bf16.mxu0 0
  %70 = vmatpush1.bf16.msra.mxu0 0
  %71 = vmatprep.subr.bf16.mxu0 0
  %72 = vmatpush1.bf16.msra.mxu0 0
  %73 = vmatprep.subr.bf16.mxu0 0
  %74 = vmatpush1.bf16.msra.mxu0 0
  %75 = vmatprep.subr.bf16.mxu0 0
  %76 = vmatpush1.bf16.msra.mxu0 0
  %77 = vmatprep.subr.bf16.mxu0 0
  %78 = vmatpush1.bf16.msra.mxu0 0
  %79 = vmatprep.subr.bf16.mxu0 0
  %80 = vmatpush1.bf16.msra.mxu0 0
  %81 = vmatprep.subr.bf16.mxu0 0
  %82 = vmatpush1.bf16.msra.mxu0 0
  %83 = vmatprep.mubr.bf16.mxu0 0
  %84 = vmatmul.mubr.bf16.gmra.mrb[0].mxu0 %v49
  %v85 = vpop.f32.mrb[0].mxu0
  %v86 = vadd.f32 0.0, %v85
  %v87 = vpop.f32.mrb[0].mxu0
  %v88 = vpop.f32.mrb[0].mxu0
  %v89 = vadd.f32 0.0, %v88
  %v90 = vpop.f32.mrb[0].mxu0
  %91 = vdwg.mxu0
  %v92 = vadd.f32 %v22, %v86
  %v93 = vadd.f32 %v23, %v89
  %94 = vst.msk [vmem:[#allocation2] sm:$0xff] %vm47, %v92
  %95 = vst.msk [vmem:[#allocation2 + $0x8] sm:$0xff] %vm47, %v93
  // Predicated region
  $region18: #{vanilla_transformer_forward.51} parent=0 // pred_check
    %p96 = pneg %p15
  $region19: #{vanilla_transformer_forward.51} parent=0 // pred_check_branch
    %98 = sbr.rel (%p96) target = $region21
  $region20: #{vanilla_transformer_forward.51} parent=0 // pred_region
    %v99 = vld [vmem:[#allocation2] sm:$0xff]
    %v100 = vld [vmem:[#allocation2 + $0x8] sm:$0xff]
    %v101 = vld [vmem:[%s2] sm:$0x1]
    %v103 = vlaneseq
    %v104 = vshrl.u32 %v103, 7
    %v105 = vsub.s32 0, %v104
    %v106 = vrot.slane %v101, %v105
    %v108 = vadd.f32 %v99, %v106
    %v109 = vadd.f32 %v100, %v106
    %v110 = vpack.c.bf16 %v109, %v108
    %v112 = vunpack.c.l.b16 %v110
    %v113 = vunpack.c.h.b16 %v110
    %v114 = vpack.c.b16 %v112, %v112
    %v115 = vpack.c.b16 %v113, %v113
    %vm118 = vcmask 257024
    %119 = vst.msk [vmem:[%s3] sm:$0xf] %vm118, %v114
    %120 = vst.msk [vmem:[%s3 + $0x4] sm:$0xf] %vm118, %v115
  $region21: #{vanilla_transformer_forward.51} parent=0 // pred_fallthru
    _
  // Predicated region
  $region22: #{vanilla_transformer_forward.51} parent=0 // pred_check
    _
  $region23: #{vanilla_transformer_forward.51} parent=0 // pred_check_branch
    %122 = sbr.rel (0) target = $region25
  $region24: #{vanilla_transformer_forward.51} parent=0 // pred_region
    _
  $region25: #{vanilla_transformer_forward.51} parent=0 // pred_fallthru
    _
  // Predicated region
  $region26: #{vanilla_transformer_forward.51} parent=0 // pred_check
    _
  $region27: #{vanilla_transformer_forward.51} parent=0 // pred_check_branch
    %124 = sbr.rel (0) target = $region29
  $region28: #{vanilla_transformer_forward.51} parent=0 // pred_region
    _
  $region29: #{vanilla_transformer_forward.51} parent=0 // pred_fallthru
    _

// kernel: vanilla_transformer_forward.36
$region0: #{vanilla_transformer_forward.36}
  #allocation0 [shape = 'u32[]', space=smem, size = 0x4, offset = 0x4, fixed_abs, tag = 'smem constant byte address 0x4 - core index']
  #allocation1 [shape = 'u32[144,128]{1,0:T(1,128)}', space=vmem, size = 0x12000, scoped, tag = 'internal scratch']
  %s0 = inlined_call_operand.vmem [shape: bf16[8,8,8], index: 0, kind: input, shape index: {}]
  %s1 = inlined_call_operand.vmem [shape: bf16[8,8,8], index: 1, kind: input, shape index: {}]
  %s2 = inlined_call_operand.vmem [shape: bf16[8,8,8], index: 2, kind: input, shape index: {}]
  %s3 = inlined_call_operand.vmem [shape: bf16[8,8,8], index: 3, kind: output, shape index: {0}]
  %s4 = inlined_call_operand.vmem [shape: bf16[8,8,8], index: 4, kind: output, shape index: {1}]
  %5 = xla_tuple %s3, %s4
  %s6 = sld [smem:[#allocation0]]
  $region53: #{vanilla_transformer_forward.36} parent=0
    _
  %s8 = ssub.s32 1, %s6
  %s9 = scalar_select 0, %s8, %s6
  loop: start=0, step=1, limit=10
  $region2: #{vanilla_transformer_forward.36} parent=0 // loop_pre_header
    _
  $region3: #{vanilla_transformer_forward.36} parent=0 // loop_header
    %s11 = sphi 0, %s15
    %p12 = scmp.ge.s32.totalorder %s11, 10
    %s18 = sphi 0, %s30
    %s19 = sphi 0, %s26
    %s20 = sphi 0, %s18
    %s21 = sphi 0, %s19
    %s22 = sphi 0, %s20
    %s23 = sphi 0, %s21
    %s35 = sphi 0, %s37
    %s38 = sphi 0, %s35
    %s39 = sphi 0, %s38
    %s55 = sphi 0, %s39
    %s61 = sphi 0, %s63
    %s64 = sphi 0, %s61
    %s65 = sphi 0, %s64
    %s81 = sphi 0, %s65
    %s87 = sphi 0, %s89
    %s90 = sphi 0, %s87
    %s91 = sphi 0, %s90
    %s107 = sphi 0, %s91
    %s115 = sphi 0, %s117
    %s118 = sphi 0, %s115
    %s119 = sphi 0, %s118
    %s135 = sphi 0, %s119
    %s143 = sphi 0, %s145
    %s146 = sphi 0, %s143
    %s147 = sphi 0, %s146
    %s163 = sphi 0, %s147
  $region4: #{vanilla_transformer_forward.36} parent=0 // loop_header_branch
    %14 = sbr.rel (%p12) target = $region8
  $region5: #{vanilla_transformer_forward.36} parent=0 // loop_body
    %s16 = ssub.s32 %s11, 1
    %s17 = ssub.s32 %s11, 2
    %s24 = sadd.s32 1, %s19
    %p25 = scmp.ge.s32.totalorder %s24, 1
    %s26 = scalar_select %p25, 0, %s24
    %s27 = sadd.s32 1, %s18
    %s28 = scalar_select %p25, %s27, %s18
    %p29 = scmp.ge.s32.totalorder %s28, 8
    %s30 = scalar_select %p29, 0, %s28
    %s31 = ssub.s32 %s18, %s30
    %s32 = ssub.s32 %s19, %s26
    %s33 = sor.u32 %s31, %s32
    %p34 = scmp.eq.s32.totalorder %s33, 0
    %s36 = sadd.s32 %s35, 1
    %s37 = scalar_select %p34, %s35, %s36
    %p40 = pneg %p34
    %p41 = scmp.eq.s32.totalorder %s11, 7
    %p42 = por %p40, %p41
    %p43 = scmp.ne.s32.totalorder %s35, %s38
    %p44 = scmp.eq.s32.totalorder %s11, 0
    %p45 = por %p43, %p44
    %p46 = scmp.ne.s32.totalorder %s35, %s38
    %p47 = scmp.eq.s32.totalorder %s16, 7
    %p48 = por %p46, %p47
    %p49 = scmp.ne.s32.totalorder %s38, %s39
    %p50 = scmp.eq.s32.totalorder %s16, 0
    %p51 = por %p49, %p50
    %p52 = scmp.ne.s32.totalorder %s38, %s39
    %p53 = scmp.eq.s32.totalorder %s17, 7
    %p54 = por %p52, %p53
    %p56 = scmp.ne.s32.totalorder %s39, %s55
    %p57 = scmp.eq.s32.totalorder %s17, 0
    %p58 = por %p56, %p57
    %s59 = ssub.s32 %s18, %s30
    %p60 = scmp.eq.s32.totalorder %s59, 0
    %s62 = sadd.s32 %s61, 1
    %s63 = scalar_select %p60, %s61, %s62
    %p66 = pneg %p60
    %p67 = scmp.eq.s32.totalorder %s11, 7
    %p68 = por %p66, %p67
    %p69 = scmp.ne.s32.totalorder %s61, %s64
    %p70 = scmp.eq.s32.totalorder %s11, 0
    %p71 = por %p69, %p70
    %p72 = scmp.ne.s32.totalorder %s61, %s64
    %p73 = scmp.eq.s32.totalorder %s16, 7
    %p74 = por %p72, %p73
    %p75 = scmp.ne.s32.totalorder %s64, %s65
    %p76 = scmp.eq.s32.totalorder %s16, 0
    %p77 = por %p75, %p76
    %p78 = scmp.ne.s32.totalorder %s64, %s65
    %p79 = scmp.eq.s32.totalorder %s17, 7
    %p80 = por %p78, %p79
    %p82 = scmp.ne.s32.totalorder %s65, %s81
    %p83 = scmp.eq.s32.totalorder %s17, 0
    %p84 = por %p82, %p83
    %s85 = ssub.s32 %s18, %s30
    %p86 = scmp.eq.s32.totalorder %s85, 0
    %s88 = sadd.s32 %s87, 1
    %s89 = scalar_select %p86, %s87, %s88
    %p92 = pneg %p86
    %p93 = scmp.eq.s32.totalorder %s11, 7
    %p94 = por %p92, %p93
    %p95 = scmp.ne.s32.totalorder %s87, %s90
    %p96 = scmp.eq.s32.totalorder %s11, 0
    %p97 = por %p95, %p96
    %p98 = scmp.ne.s32.totalorder %s87, %s90
    %p99 = scmp.eq.s32.totalorder %s16, 7
    %p100 = por %p98, %p99
    %p101 = scmp.ne.s32.totalorder %s90, %s91
    %p102 = scmp.eq.s32.totalorder %s16, 0
    %p103 = por %p101, %p102
    %p104 = scmp.ne.s32.totalorder %s90, %s91
    %p105 = scmp.eq.s32.totalorder %s17, 7
    %p106 = por %p104, %p105
    %p108 = scmp.ne.s32.totalorder %s91, %s107
    %p109 = scmp.eq.s32.totalorder %s17, 0
    %p110 = por %p108, %p109
    %s111 = ssub.s32 %s18, %s30
    %s112 = ssub.s32 %s19, %s26
    %s113 = sor.u32 %s111, %s112
    %p114 = scmp.eq.s32.totalorder %s113, 0
    %s116 = sadd.s32 %s115, 1
    %s117 = scalar_select %p114, %s115, %s116
    %p120 = pneg %p114
    %p121 = scmp.eq.s32.totalorder %s11, 7
    %p122 = por %p120, %p121
    %p123 = scmp.ne.s32.totalorder %s115, %s118
    %p124 = scmp.eq.s32.totalorder %s11, 0
    %p125 = por %p123, %p124
    %p126 = scmp.ne.s32.totalorder %s115, %s118
    %p127 = scmp.eq.s32.totalorder %s16, 7
    %p128 = por %p126, %p127
    %p129 = scmp.ne.s32.totalorder %s118, %s119
    %p130 = scmp.eq.s32.totalorder %s16, 0
    %p131 = por %p129, %p130
    %p132 = scmp.ne.s32.totalorder %s118, %s119
    %p133 = scmp.eq.s32.totalorder %s17, 7
    %p134 = por %p132, %p133
    %p136 = scmp.ne.s32.totalorder %s119, %s135
    %p137 = scmp.eq.s32.totalorder %s17, 0
    %p138 = por %p136, %p137
    %s139 = ssub.s32 %s18, %s30
    %s140 = ssub.s32 %s19, %s26
    %s141 = sor.u32 %s139, %s140
    %p142 = scmp.eq.s32.totalorder %s141, 0
    %s144 = sadd.s32 %s143, 1
    %s145 = scalar_select %p142, %s143, %s144
    %p148 = pneg %p142
    %p149 = scmp.eq.s32.totalorder %s11, 7
    %p150 = por %p148, %p149
    %p151 = scmp.ne.s32.totalorder %s143, %s146
    %p152 = scmp.eq.s32.totalorder %s11, 0
    %p153 = por %p151, %p152
    %p154 = scmp.ne.s32.totalorder %s143, %s146
    %p155 = scmp.eq.s32.totalorder %s16, 7
    %p156 = por %p154, %p155
    %p157 = scmp.ne.s32.totalorder %s146, %s147
    %p158 = scmp.eq.s32.totalorder %s16, 0
    %p159 = por %p157, %p158
    %p160 = scmp.ne.s32.totalorder %s146, %s147
    %p161 = scmp.eq.s32.totalorder %s17, 7
    %p162 = por %p160, %p161
    %p164 = scmp.ne.s32.totalorder %s147, %s163
    %p165 = scmp.eq.s32.totalorder %s17, 0
    %p166 = por %p164, %p165
    %p167 = scmp.le.s32.totalorder 1, %s11
    %p168 = scmp.lt.s32.totalorder %s11, 9
    %p169 = pnand %p167, %p168
    %p170 = pneg %p169
    // Predicated region
    $region9: #{vanilla_transformer_forward.36} parent=5 // pred_check
      _
    $region10: #{vanilla_transformer_forward.36} parent=5 // pred_check_branch
      %172 = sbr.rel (%p169) target = $region12
    $region11: #{vanilla_transformer_forward.36} parent=5 // pred_region
      %s173 = ssub.s32 %s11, 1
    $region12: #{vanilla_transformer_forward.36} parent=5 // pred_fallthru
      _
    %p174 = scmp.lt.s32.totalorder %s11, 8
    // Predicated region
    $region13: #{vanilla_transformer_forward.36} parent=5 // pred_check
      %p175 = pneg %p174
    $region14: #{vanilla_transformer_forward.36} parent=5 // pred_check_branch
      %177 = sbr.rel (%p175) target = $region16
    $region15: #{vanilla_transformer_forward.36} parent=5 // pred_region
      // Predicated region
      $region17: #{vanilla_transformer_forward.36} parent=15 // pred_check
        %p178 = pneg %p45
      $region18: #{vanilla_transformer_forward.36} parent=15 // pred_check_branch
        %180 = sbr.rel (%p178) target = $region20
      $region19: #{vanilla_transformer_forward.36} parent=15 // pred_region
        %p181 = scmp.lt.s32.totalorder %s18, 7
        %s182 = scalar_select %p181, %s18, 7
        %p183 = scmp.lt.s32.totalorder %s19, 0
        %s184 = scalar_select %p183, %s19, 0
        %s185 = sadd.s32 %s184, %s182
        %s186 = smul.addr %s185, 4
        %s187 = scalar_lea.vmem %s0, %s186
      $region20: #{vanilla_transformer_forward.36} parent=15 // pred_fallthru
        _
      // Predicated region
      $region21: #{vanilla_transformer_forward.36} parent=15 // pred_check
        %p188 = pneg %p71
      $region22: #{vanilla_transformer_forward.36} parent=15 // pred_check_branch
        %190 = sbr.rel (%p188) target = $region24
      $region23: #{vanilla_transformer_forward.36} parent=15 // pred_region
        %p191 = scmp.lt.s32.totalorder %s18, 7
        %s192 = scalar_select %p191, %s18, 7
        %s193 = smul.addr %s192, 4
        %s194 = scalar_lea.vmem %s1, %s193
      $region24: #{vanilla_transformer_forward.36} parent=15 // pred_fallthru
        _
      // Predicated region
      $region25: #{vanilla_transformer_forward.36} parent=15 // pred_check
        %p195 = pneg %p97
      $region26: #{vanilla_transformer_forward.36} parent=15 // pred_check_branch
        %197 = sbr.rel (%p195) target = $region28
      $region27: #{vanilla_transformer_forward.36} parent=15 // pred_region
        %p198 = scmp.lt.s32.totalorder %s18, 7
        %s199 = scalar_select %p198, %s18, 7
        %s200 = smul.addr %s199, 4
        %s201 = scalar_lea.vmem %s2, %s200
      $region28: #{vanilla_transformer_forward.36} parent=15 // pred_fallthru
        _
    $region16: #{vanilla_transformer_forward.36} parent=5 // pred_fallthru
      _
    %p202 = scmp.le.s32.totalorder 1, %s11
    %p203 = scmp.lt.s32.totalorder %s11, 9
    %p204 = pnand %p202, %p203
    %p205 = pneg %p204
    // Predicated region
    $region29: #{vanilla_transformer_forward.36} parent=5 // pred_check
      _
    $region30: #{vanilla_transformer_forward.36} parent=5 // pred_check_branch
      %207 = sbr.rel (%p204) target = $region32
    $region31: #{vanilla_transformer_forward.36} parent=5 // pred_region
      %s208 = ssub.s32 %s11, 1
      %p209 = scmp.lt.s32.totalorder %s20, 7
      %s210 = scalar_select %p209, %s20, 7
      %p211 = scmp.lt.s32.totalorder %s21, 0
      %s212 = scalar_select %p211, %s21, 0
      %s213 = sadd.s32 %s212, %s210
      %s214 = smul.addr %s213, 4
      %s215 = scalar_lea.vmem %s0, %s214
      %p216 = pneg %p51
      %p217 = pneg %p48
      %p218 = scmp.lt.s32.totalorder %s20, 7
      %s219 = scalar_select %p218, %s20, 7
      %s220 = smul.addr %s219, 4
      %s221 = scalar_lea.vmem %s1, %s220
      %p222 = pneg %p77
      %p223 = pneg %p74
      %p224 = scmp.lt.s32.totalorder %s20, 7
      %s225 = scalar_select %p224, %s20, 7
      %s226 = smul.addr %s225, 4
      %s227 = scalar_lea.vmem %s2, %s226
      %p228 = pneg %p103
      %p229 = pneg %p100
      %p230 = pneg %p131
      %p231 = pneg %p128
      %p232 = scmp.lt.s32.totalorder %s20, 7
      %s233 = scalar_select %p232, %s20, 7
      %p234 = scmp.lt.s32.totalorder %s21, 0
      %s235 = scalar_select %p234, %s21, 0
      %s236 = sadd.s32 %s235, %s233
      %s237 = smul.addr %s236, 4
      %s238 = scalar_lea.vmem %s3, %s237
      %p239 = pneg %p159
      %p240 = pneg %p156
      %p241 = scmp.lt.s32.totalorder %s20, 7
      %s242 = scalar_select %p241, %s20, 7
      %p243 = scmp.lt.s32.totalorder %s21, 0
      %s244 = scalar_select %p243, %s21, 0
      %s245 = sadd.s32 %s244, %s242
      %s246 = smul.addr %s245, 4
      %s247 = scalar_lea.vmem %s4, %s246
      %p248 = scmp.lt.s32.totalorder %s20, 7
      %s249 = scalar_select %p248, %s20, 7
      %p250 = scmp.lt.s32.totalorder %s21, 0
      %s251 = scalar_select %p250, %s21, 0
      %s252 = sadd.s32 %s251, %s249
      %s253 = smul.addr %s252, 4
      %s254 = scalar_lea.vmem %s0, %s253
      %p255 = scmp.lt.s32.totalorder %s20, 7
      %s256 = scalar_select %p255, %s20, 7
      %s257 = smul.addr %s256, 4
      %s258 = scalar_lea.vmem %s1, %s257
      %p259 = scmp.lt.s32.totalorder %s20, 7
      %s260 = scalar_select %p259, %s20, 7
      %s261 = smul.addr %s260, 4
      %s262 = scalar_lea.vmem %s2, %s261
      %p263 = scmp.lt.s32.totalorder %s20, 7
      %s264 = scalar_select %p263, %s20, 7
      %p265 = scmp.lt.s32.totalorder %s21, 0
      %s266 = scalar_select %p265, %s21, 0
      %s267 = sadd.s32 %s266, %s264
      %s268 = smul.addr %s267, 4
      %s269 = scalar_lea.vmem %s3, %s268
      %p270 = scmp.lt.s32.totalorder %s20, 7
      %s271 = scalar_select %p270, %s20, 7
      %p272 = scmp.lt.s32.totalorder %s21, 0
      %s273 = scalar_select %p272, %s21, 0
      %s274 = sadd.s32 %s273, %s271
      %s275 = smul.addr %s274, 4
      %s276 = scalar_lea.vmem %s4, %s275
      %v278 = vld [vmem:[%s254] sm:$0xf]
      %v279 = vld [vmem:[%s258] sm:$0xf]
      %v280 = vld [vmem:[%s262] sm:$0xf]
      %vm281 = vcmask 64512
      %v283 = vsel %vm281, %v278, 0
      %v286 = vsel %vm281, %v279, 0
      %288 = vmatprep.subr.bf16.mxu0 0
      %289 = vmatpush1.bf16.xpose.msra.mxu0 %v286
      %290 = vmatprep.subr.bf16.mxu0 0
      %291 = vmatpush1.bf16.xpose.msra.mxu0 0
      %292 = vmatprep.subr.bf16.mxu0 0
      %293 = vmatpush1.bf16.xpose.msra.mxu0 0
      %294 = vmatprep.subr.bf16.mxu0 0
      %295 = vmatpush1.bf16.xpose.msra.mxu0 0
      %296 = vmatprep.subr.bf16.mxu0 0
      %297 = vmatpush1.bf16.xpose.msra.mxu0 0
      %298 = vmatprep.subr.bf16.mxu0 0
      %299 = vmatpush1.bf16.xpose.msra.mxu0 0
      %300 = vmatprep.subr.bf16.mxu0 0
      %301 = vmatpush1.bf16.xpose.msra.mxu0 0
      %302 = vmatprep.subr.bf16.mxu0 0
      %303 = vmatpush1.bf16.xpose.msra.mxu0 0
      %304 = vmatprep.subr.bf16.mxu0 0
      %305 = vmatpush1.bf16.xpose.msra.mxu0 0
      %306 = vmatprep.subr.bf16.mxu0 0
      %307 = vmatpush1.bf16.xpose.msra.mxu0 0
      %308 = vmatprep.subr.bf16.mxu0 0
      %309 = vmatpush1.bf16.xpose.msra.mxu0 0
      %310 = vmatprep.subr.bf16.mxu0 0
      %311 = vmatpush1.bf16.xpose.msra.mxu0 0
      %312 = vmatprep.subr.bf16.mxu0 0
      %313 = vmatpush1.bf16.xpose.msra.mxu0 0
      %314 = vmatprep.subr.bf16.mxu0 0
      %315 = vmatpush1.bf16.xpose.msra.mxu0 0
      %316 = vmatprep.subr.bf16.mxu0 0
      %317 = vmatpush1.bf16.xpose.msra.mxu0 0
      %318 = vmatprep.subr.bf16.mxu0 0
      %319 = vmatpush1.bf16.xpose.msra.mxu0 0
      %320 = vmatprep.mubr.bf16.mxu0 0
      %321 = vmatmul.mubr.bf16.gmra.mrb[0].mxu0 %v283
      %v322 = vpop.f32.mrb[0].mxu0
      %v323 = vadd.f32 0.0, %v322
      %v324 = vpop.f32.mrb[0].mxu0
      %v325 = vpop.f32.mrb[0].mxu0
      %v326 = vpop.f32.mrb[0].mxu0
      %327 = vdwg.mxu0
      %v328 = vmul.f32 %v323, 0.35355338
      %v329 = vsel %vm281, %v328, -inf
      %330 = vmax.xlane.f32.xlu0 %v329
      %v331 = vpop.xlane.xlu0 %330
      %v332 = vsub.f32 %v328, %v331
      %v333 = vmul.f32 %v332, 1.442695
      %v334 = vpow.pop %v333
      %v335 = vsel %vm281, %v334, 0.0
      %336 = vadd.xlane.f32.xlu0 %v335
      %v337 = vpop.xlane.xlu0 %336
      %v338 = vrcp.pop %v337
      %v339 = vmul.f32 %v334, %v338
      %v340 = vpack.c.bf16 %v339, %v339
      %v342 = vsel %vm281, %v340, 0
      %vm344 = vcmask 1043456
      %v346 = vsel %vm344, %v280, 0
      %348 = vmatprep.subr.bf16.mxu0 0
      %349 = vmatpush1.bf16.msra.mxu0 %v346
      %350 = vmatprep.subr.bf16.mxu0 0
      %351 = vmatpush1.bf16.msra.mxu0 0
      %352 = vmatprep.subr.bf16.mxu0 0
      %353 = vmatpush1.bf16.msra.mxu0 0
      %354 = vmatprep.subr.bf16.mxu0 0
      %355 = vmatpush1.bf16.msra.mxu0 0
      %356 = vmatprep.subr.bf16.mxu0 0
      %357 = vmatpush1.bf16.msra.mxu0 0
      %358 = vmatprep.subr.bf16.mxu0 0
      %359 = vmatpush1.bf16.msra.mxu0 0
      %360 = vmatprep.subr.bf16.mxu0 0
      %361 = vmatpush1.bf16.msra.mxu0 0
      %362 = vmatprep.subr.bf16.mxu0 0
      %363 = vmatpush1.bf16.msra.mxu0 0
      %364 = vmatprep.subr.bf16.mxu0 0
      %365 = vmatpush1.bf16.msra.mxu0 0
      %366 = vmatprep.subr.bf16.mxu0 0
      %367 = vmatpush1.bf16.msra.mxu0 0
      %368 = vmatprep.subr.bf16.mxu0 0
      %369 = vmatpush1.bf16.msra.mxu0 0
      %370 = vmatprep.subr.bf16.mxu0 0
      %371 = vmatpush1.bf16.msra.mxu0 0
      %372 = vmatprep.subr.bf16.mxu0 0
      %373 = vmatpush1.bf16.msra.mxu0 0
      %374 = vmatprep.subr.bf16.mxu0 0
      %375 = vmatpush1.bf16.msra.mxu0 0
      %376 = vmatprep.subr.bf16.mxu0 0
      %377 = vmatpush1.bf16.msra.mxu0 0
      %378 = vmatprep.subr.bf16.mxu0 0
      %379 = vmatpush1.bf16.msra.mxu0 0
      %380 = vmatprep.mubr.bf16.mxu0 0
      %381 = vmatmul.mubr.bf16.gmra.mrb[0].mxu0 %v342
      %v382 = vpop.f32.mrb[0].mxu0
      %v383 = vadd.f32 0.0, %v382
      %v384 = vpop.f32.mrb[0].mxu0
      %v385 = vpop.f32.mrb[0].mxu0
      %v386 = vpop.f32.mrb[0].mxu0
      %387 = vdwg.mxu0
      %v388 = vpack.c.bf16 %v383, %v383
      %vm389 = vcmask 60416
      %390 = vst.msk [vmem:[%s269] sm:$0xf] %vm389, %v388
      %391 = vst.msk [vmem:[%s276] sm:$0xf] %vm389, %v340
      %p392 = scmp.lt.s32.totalorder %s20, 7
      %s393 = scalar_select %p392, %s20, 7
      %p394 = scmp.lt.s32.totalorder %s21, 0
      %s395 = scalar_select %p394, %s21, 0
      %s396 = sadd.s32 %s395, %s393
      %s397 = smul.addr %s396, 4
      %s398 = scalar_lea.vmem %s3, %s397
      %p399 = scmp.lt.s32.totalorder %s20, 7
      %s400 = scalar_select %p399, %s20, 7
      %p401 = scmp.lt.s32.totalorder %s21, 0
      %s402 = scalar_select %p401, %s21, 0
      %s403 = sadd.s32 %s402, %s400
      %s404 = smul.addr %s403, 4
      %s405 = scalar_lea.vmem %s4, %s404
      // Predicated region
      $region33: #{vanilla_transformer_forward.36} parent=31 // pred_check
        %p406 = pneg %p128
      $region34: #{vanilla_transformer_forward.36} parent=31 // pred_check_branch
        %408 = sbr.rel (%p406) target = $region36
      $region35: #{vanilla_transformer_forward.36} parent=31 // pred_region
        _
      $region36: #{vanilla_transformer_forward.36} parent=31 // pred_fallthru
        _
      // Predicated region
      $region37: #{vanilla_transformer_forward.36} parent=31 // pred_check
        %p409 = pneg %p156
      $region38: #{vanilla_transformer_forward.36} parent=31 // pred_check_branch
        %411 = sbr.rel (%p409) target = $region40
      $region39: #{vanilla_transformer_forward.36} parent=31 // pred_region
        _
      $region40: #{vanilla_transformer_forward.36} parent=31 // pred_fallthru
        _
    $region32: #{vanilla_transformer_forward.36} parent=5 // pred_fallthru
      _
    %p412 = scmp.le.s32.totalorder 2, %s11
    // Predicated region
    $region41: #{vanilla_transformer_forward.36} parent=5 // pred_check
      %p413 = pneg %p412
    $region42: #{vanilla_transformer_forward.36} parent=5 // pred_check_branch
      %415 = sbr.rel (%p413) target = $region44
    $region43: #{vanilla_transformer_forward.36} parent=5 // pred_region
      %s416 = ssub.s32 %s11, 2
      // Predicated region
      $region45: #{vanilla_transformer_forward.36} parent=43 // pred_check
        %p417 = pneg %p134
      $region46: #{vanilla_transformer_forward.36} parent=43 // pred_check_branch
        %419 = sbr.rel (%p417) target = $region48
      $region47: #{vanilla_transformer_forward.36} parent=43 // pred_region
        %p420 = scmp.lt.s32.totalorder %s22, 7
        %s421 = scalar_select %p420, %s22, 7
        %p422 = scmp.lt.s32.totalorder %s23, 0
        %s423 = scalar_select %p422, %s23, 0
        %s424 = sadd.s32 %s423, %s421
        %s425 = smul.addr %s424, 4
        %s426 = scalar_lea.vmem %s3, %s425
      $region48: #{vanilla_transformer_forward.36} parent=43 // pred_fallthru
        _
      // Predicated region
      $region49: #{vanilla_transformer_forward.36} parent=43 // pred_check
        %p427 = pneg %p162
      $region50: #{vanilla_transformer_forward.36} parent=43 // pred_check_branch
        %429 = sbr.rel (%p427) target = $region52
      $region51: #{vanilla_transformer_forward.36} parent=43 // pred_region
        %p430 = scmp.lt.s32.totalorder %s22, 7
        %s431 = scalar_select %p430, %s22, 7
        %p432 = scmp.lt.s32.totalorder %s23, 0
        %s433 = scalar_select %p432, %s23, 0
        %s434 = sadd.s32 %s433, %s431
        %s435 = smul.addr %s434, 4
        %s436 = scalar_lea.vmem %s4, %s435
      $region52: #{vanilla_transformer_forward.36} parent=43 // pred_fallthru
        _
    $region44: #{vanilla_transformer_forward.36} parent=5 // pred_fallthru
      _
  $region6: #{vanilla_transformer_forward.36} parent=0 // loop_footer
    %s15 = sadd.s32 1, %s11
  $region7: #{vanilla_transformer_forward.36} parent=0 // loop_footer_branch
    %10 = sbr.rel target = $region3
  $region8: #{vanilla_transformer_forward.36} parent=0 // loop_exit
    _

// kernel: vanilla_transformer_forward.39
$region0: #{vanilla_transformer_forward.39}
  #allocation0 [shape = 'u32[]', space=smem, size = 0x4, offset = 0x4, fixed_abs, tag = 'smem constant byte address 0x4 - core index']
  #allocation1 [shape = 'u32[144,128]{1,0:T(1,128)}', space=vmem, size = 0x12000, scoped, tag = 'internal scratch']
  %s0 = inlined_call_operand.vmem [shape: bf16[16,32], index: 0, kind: input, shape index: {}, may-alias: {0,5}]
  %s1 = inlined_call_operand.vmem [shape: bf16[32,64], index: 1, kind: input, shape index: {}]
  %s2 = inlined_call_operand.vmem [shape: f32[1,64], index: 2, kind: input, shape index: {}]
  %s3 = inlined_call_operand.vmem [shape: bf16[64,32], index: 3, kind: input, shape index: {}]
  %s4 = inlined_call_operand.vmem [shape: f32[1,32], index: 4, kind: input, shape index: {}]
  %s5 = inlined_call_operand.vmem [shape: bf16[16,32], index: 5, kind: input, shape index: {}, may-alias: {0,5}]
  %s6 = inlined_call_operand.vmem [shape: bf16[16,32], index: 6, kind: output, shape index: {}]
  %s7 = sld [smem:[#allocation0]]
  $region34: #{vanilla_transformer_forward.39} parent=0
    _
  %s9 = ssub.s32 1, %s7
  %s10 = scalar_select 0, %s9, %s7
  // Predicated region
  $region2: #{vanilla_transformer_forward.39} parent=0 // pred_check
    _
  $region3: #{vanilla_transformer_forward.39} parent=0 // pred_check_branch
    %12 = sbr.rel (0) target = $region5
  $region4: #{vanilla_transformer_forward.39} parent=0 // pred_region
    _
  $region5: #{vanilla_transformer_forward.39} parent=0 // pred_fallthru
    _
  // Predicated region
  $region6: #{vanilla_transformer_forward.39} parent=0 // pred_check
    _
  $region7: #{vanilla_transformer_forward.39} parent=0 // pred_check_branch
    %14 = sbr.rel (0) target = $region9
  $region8: #{vanilla_transformer_forward.39} parent=0 // pred_region
    _
  $region9: #{vanilla_transformer_forward.39} parent=0 // pred_fallthru
    _
  // Predicated region
  $region10: #{vanilla_transformer_forward.39} parent=0 // pred_check
    _
  $region11: #{vanilla_transformer_forward.39} parent=0 // pred_check_branch
    %16 = sbr.rel (0) target = $region13
  $region12: #{vanilla_transformer_forward.39} parent=0 // pred_region
    _
  $region13: #{vanilla_transformer_forward.39} parent=0 // pred_fallthru
    _
  // Predicated region
  $region14: #{vanilla_transformer_forward.39} parent=0 // pred_check
    _
  $region15: #{vanilla_transformer_forward.39} parent=0 // pred_check_branch
    %18 = sbr.rel (0) target = $region17
  $region16: #{vanilla_transformer_forward.39} parent=0 // pred_region
    _
  $region17: #{vanilla_transformer_forward.39} parent=0 // pred_fallthru
    _
  // Predicated region
  $region18: #{vanilla_transformer_forward.39} parent=0 // pred_check
    _
  $region19: #{vanilla_transformer_forward.39} parent=0 // pred_check_branch
    %20 = sbr.rel (0) target = $region21
  $region20: #{vanilla_transformer_forward.39} parent=0 // pred_region
    _
  $region21: #{vanilla_transformer_forward.39} parent=0 // pred_fallthru
    _
  // Predicated region
  $region22: #{vanilla_transformer_forward.39} parent=0 // pred_check
    _
  $region23: #{vanilla_transformer_forward.39} parent=0 // pred_check_branch
    %22 = sbr.rel (0) target = $region25
  $region24: #{vanilla_transformer_forward.39} parent=0 // pred_region
    _
  $region25: #{vanilla_transformer_forward.39} parent=0 // pred_fallthru
    _
  %v24 = vld [vmem:[%s0] sm:$0xf]
  %v25 = vld [vmem:[%s0 + $0x4] sm:$0xf]
  %v26 = vld [vmem:[%s1] sm:$0xf]
  %v27 = vld [vmem:[%s1 + $0x4] sm:$0xf]
  %v28 = vld [vmem:[%s1 + $0x8] sm:$0xf]
  %v29 = vld [vmem:[%s1 + $0xc] sm:$0xf]
  %v30 = vld [vmem:[%s2] sm:$0x1]
  %v32 = vlaneseq
  %v33 = vshrl.u32 %v32, 7
  %v34 = vsub.s32 0, %v33
  %v35 = vrot.slane %v30, %v34
  %v39 = vunpack.c.l.b16 %v24
  %v40 = vunpack.c.l.b16 %v25
  %v41 = vpack.c.b16 %v40, %v39
  %v46 = vunpack.c.l.b16 %v26
  %v47 = vunpack.c.l.b16 %v27
  %v48 = vunpack.c.l.b16 %v28
  %v49 = vunpack.c.l.b16 %v29
  %v50 = vpack.c.b16 %v47, %v46
  %v51 = vpack.c.b16 %v49, %v48
  %vm54 = vcmask 261120
  %v56 = vsel %vm54, %v41, 0
  %58 = vmatprep.subr.bf16.mxu0 0
  %59 = vmatpush1.bf16.msra.mxu0 %v50
  %60 = vmatprep.subr.bf16.mxu0 0
  %61 = vmatpush1.bf16.msra.mxu0 %v51
  %62 = vmatprep.subr.bf16.mxu0 0
  %63 = vmatpush1.bf16.msra.mxu0 0
  %64 = vmatprep.subr.bf16.mxu0 0
  %65 = vmatpush1.bf16.msra.mxu0 0
  %66 = vmatprep.subr.bf16.mxu0 0
  %67 = vmatpush1.bf16.msra.mxu0 0
  %68 = vmatprep.subr.bf16.mxu0 0
  %69 = vmatpush1.bf16.msra.mxu0 0
  %70 = vmatprep.subr.bf16.mxu0 0
  %71 = vmatpush1.bf16.msra.mxu0 0
  %72 = vmatprep.subr.bf16.mxu0 0
  %73 = vmatpush1.bf16.msra.mxu0 0
  %74 = vmatprep.subr.bf16.mxu0 0
  %75 = vmatpush1.bf16.msra.mxu0 0
  %76 = vmatprep.subr.bf16.mxu0 0
  %77 = vmatpush1.bf16.msra.mxu0 0
  %78 = vmatprep.subr.bf16.mxu0 0
  %79 = vmatpush1.bf16.msra.mxu0 0
  %80 = vmatprep.subr.bf16.mxu0 0
  %81 = vmatpush1.bf16.msra.mxu0 0
  %82 = vmatprep.subr.bf16.mxu0 0
  %83 = vmatpush1.bf16.msra.mxu0 0
  %84 = vmatprep.subr.bf16.mxu0 0
  %85 = vmatpush1.bf16.msra.mxu0 0
  %86 = vmatprep.subr.bf16.mxu0 0
  %87 = vmatpush1.bf16.msra.mxu0 0
  %88 = vmatprep.subr.bf16.mxu0 0
  %89 = vmatpush1.bf16.msra.mxu0 0
  %90 = vmatprep.mubr.bf16.mxu0 0
  %91 = vmatmul.mubr.bf16.gmra.mrb[0].mxu0 %v56
  %v92 = vpop.f32.mrb[0].mxu0
  %v93 = vadd.f32 %v35, %v92
  %v94 = vpop.f32.mrb[0].mxu0
  %v95 = vpop.f32.mrb[0].mxu0
  %v96 = vadd.f32 %v35, %v95
  %v97 = vpop.f32.mrb[0].mxu0
  %98 = vdwg.mxu0
  %v99 = vmax.f32 %v93, 0.0
  %v100 = vmax.f32 %v96, 0.0
  %v101 = vpack.c.bf16 %v100, %v99
  %v102 = vld [vmem:[%s3] sm:$0xf]
  %v103 = vld [vmem:[%s3 + $0x4] sm:$0xf]
  %v104 = vld [vmem:[%s3 + $0x8] sm:$0xf]
  %v105 = vld [vmem:[%s3 + $0xc] sm:$0xf]
  %v106 = vld [vmem:[%s3 + $0x10] sm:$0xf]
  %v107 = vld [vmem:[%s3 + $0x14] sm:$0xf]
  %v108 = vld [vmem:[%s3 + $0x18] sm:$0xf]
  %v109 = vld [vmem:[%s3 + $0x1c] sm:$0xf]
  %v110 = vld [vmem:[%s4] sm:$0x1]
  %v112 = vlaneseq
  %v113 = vshrl.u32 %v112, 7
  %v114 = vsub.s32 0, %v113
  %v115 = vrot.slane %v110, %v114
  %v125 = vunpack.c.l.b16 %v102
  %v126 = vunpack.c.l.b16 %v103
  %v127 = vunpack.c.l.b16 %v104
  %v128 = vunpack.c.l.b16 %v105
  %v129 = vunpack.c.l.b16 %v106
  %v130 = vunpack.c.l.b16 %v107
  %v131 = vunpack.c.l.b16 %v108
  %v132 = vunpack.c.l.b16 %v109
  %v133 = vpack.c.b16 %v126, %v125
  %v134 = vpack.c.b16 %v128, %v127
  %v135 = vpack.c.b16 %v130, %v129
  %v136 = vpack.c.b16 %v132, %v131
  %vm141 = vcmask 523264
  %v143 = vsel %vm141, %v101, 0
  %145 = vmatprep.subr.bf16.mxu0 0
  %146 = vmatpush1.bf16.msra.mxu0 %v133
  %147 = vmatprep.subr.bf16.mxu0 0
  %148 = vmatpush1.bf16.msra.mxu0 %v134
  %149 = vmatprep.subr.bf16.mxu0 0
  %150 = vmatpush1.bf16.msra.mxu0 %v135
  %151 = vmatprep.subr.bf16.mxu0 0
  %152 = vmatpush1.bf16.msra.mxu0 %v136
  %153 = vmatprep.subr.bf16.mxu0 0
  %154 = vmatpush1.bf16.msra.mxu0 0
  %155 = vmatprep.subr.bf16.mxu0 0
  %156 = vmatpush1.bf16.msra.mxu0 0
  %157 = vmatprep.subr.bf16.mxu0 0
  %158 = vmatpush1.bf16.msra.mxu0 0
  %159 = vmatprep.subr.bf16.mxu0 0
  %160 = vmatpush1.bf16.msra.mxu0 0
  %161 = vmatprep.subr.bf16.mxu0 0
  %162 = vmatpush1.bf16.msra.mxu0 0
  %163 = vmatprep.subr.bf16.mxu0 0
  %164 = vmatpush1.bf16.msra.mxu0 0
  %165 = vmatprep.subr.bf16.mxu0 0
  %166 = vmatpush1.bf16.msra.mxu0 0
  %167 = vmatprep.subr.bf16.mxu0 0
  %168 = vmatpush1.bf16.msra.mxu0 0
  %169 = vmatprep.subr.bf16.mxu0 0
  %170 = vmatpush1.bf16.msra.mxu0 0
  %171 = vmatprep.subr.bf16.mxu0 0
  %172 = vmatpush1.bf16.msra.mxu0 0
  %173 = vmatprep.subr.bf16.mxu0 0
  %174 = vmatpush1.bf16.msra.mxu0 0
  %175 = vmatprep.subr.bf16.mxu0 0
  %176 = vmatpush1.bf16.msra.mxu0 0
  %177 = vmatprep.mubr.bf16.mxu0 0
  %178 = vmatmul.mubr.bf16.gmra.mrb[0].mxu0 %v143
  %v179 = vpop.f32.mrb[0].mxu0
  %v180 = vadd.f32 %v115, %v179
  %v181 = vpop.f32.mrb[0].mxu0
  %v182 = vpop.f32.mrb[0].mxu0
  %v183 = vadd.f32 %v115, %v182
  %v184 = vpop.f32.mrb[0].mxu0
  %185 = vdwg.mxu0
  %v186 = vld [vmem:[%s5] sm:$0xf]
  %v187 = vld [vmem:[%s5 + $0x4] sm:$0xf]
  %v188 = vunpack.c.l.bf16 %v186
  %v189 = vunpack.c.l.bf16 %v187
  %v190 = vadd.f32 %v180, %v188
  %v191 = vadd.f32 %v183, %v189
  %v192 = vpack.c.bf16 %v191, %v190
  %v194 = vunpack.c.l.b16 %v192
  %v195 = vunpack.c.h.b16 %v192
  %v196 = vpack.c.b16 %v194, %v194
  %v197 = vpack.c.b16 %v195, %v195
  %vm200 = vcmask 257024
  %201 = vst.msk [vmem:[%s6] sm:$0xf] %vm200, %v196
  %202 = vst.msk [vmem:[%s6 + $0x4] sm:$0xf] %vm200, %v197
  // Predicated region
  $region26: #{vanilla_transformer_forward.39} parent=0 // pred_check
    _
  $region27: #{vanilla_transformer_forward.39} parent=0 // pred_check_branch
    %204 = sbr.rel (0) target = $region29
  $region28: #{vanilla_transformer_forward.39} parent=0 // pred_region
    _
  $region29: #{vanilla_transformer_forward.39} parent=0 // pred_fallthru
    _
  // Predicated region
  $region30: #{vanilla_transformer_forward.39} parent=0 // pred_check
    _
  $region31: #{vanilla_transformer_forward.39} parent=0 // pred_check_branch
    %206 = sbr.rel (0) target = $region33
  $region32: #{vanilla_transformer_forward.39} parent=0 // pred_region
    _
  $region33: #{vanilla_transformer_forward.39} parent=0 // pred_fallthru
    _

// kernel: vanilla_transformer_forward.52
$region0: #{vanilla_transformer_forward.52}
  #allocation0 [shape = 'u32[]', space=smem, size = 0x4, offset = 0x4, fixed_abs, tag = 'smem constant byte address 0x4 - core index']
  #allocation1 [shape = 'u32[144,128]{1,0:T(1,128)}', space=vmem, size = 0x12000, scoped, tag = 'internal scratch']
  #allocation2 [shape = 'f32[16,64]{1,0:T(8,128)}', space=vmem, size = 0x2000, scoped, tag = 'scratch operand']
  %s0 = inlined_call_operand.vmem [shape: bf16[16,32], index: 0, kind: input, shape index: {}]
  %s1 = inlined_call_operand.vmem [shape: bf16[32,64], index: 1, kind: input, shape index: {}]
  %s2 = inlined_call_operand.vmem [shape: f32[1,64], index: 2, kind: input, shape index: {}]
  %s3 = inlined_call_operand.vmem [shape: bf16[16,64], index: 3, kind: output, shape index: {}]
  %s4 = sld [smem:[#allocation0]]
  $region30: #{vanilla_transformer_forward.52} parent=0
    _
  %s6 = ssub.s32 1, %s4
  %s7 = scalar_select 0, %s6, %s4
  // Predicated region
  $region2: #{vanilla_transformer_forward.52} parent=0 // pred_check
    _
  $region3: #{vanilla_transformer_forward.52} parent=0 // pred_check_branch
    %9 = sbr.rel (0) target = $region5
  $region4: #{vanilla_transformer_forward.52} parent=0 // pred_region
    _
  $region5: #{vanilla_transformer_forward.52} parent=0 // pred_fallthru
    _
  // Predicated region
  $region6: #{vanilla_transformer_forward.52} parent=0 // pred_check
    _
  $region7: #{vanilla_transformer_forward.52} parent=0 // pred_check_branch
    %11 = sbr.rel (0) target = $region9
  $region8: #{vanilla_transformer_forward.52} parent=0 // pred_region
    _
  $region9: #{vanilla_transformer_forward.52} parent=0 // pred_fallthru
    _
  // Predicated region
  $region10: #{vanilla_transformer_forward.52} parent=0 // pred_check
    _
  $region11: #{vanilla_transformer_forward.52} parent=0 // pred_check_branch
    %13 = sbr.rel (0) target = $region13
  $region12: #{vanilla_transformer_forward.52} parent=0 // pred_region
    _
  $region13: #{vanilla_transformer_forward.52} parent=0 // pred_fallthru
    _
  %p15 = scmp.eq.s32.totalorder 0, 0
  // Predicated region
  $region14: #{vanilla_transformer_forward.52} parent=0 // pred_check
    %p16 = pneg %p15
  $region15: #{vanilla_transformer_forward.52} parent=0 // pred_check_branch
    %18 = sbr.rel (%p16) target = $region17
  $region16: #{vanilla_transformer_forward.52} parent=0 // pred_region
    %vm19 = vcmask 523264
    %20 = vst.msk [vmem:[#allocation2] sm:$0xff] %vm19, 0.0
    %21 = vst.msk [vmem:[#allocation2 + $0x8] sm:$0xff] %vm19, 0.0
  $region17: #{vanilla_transformer_forward.52} parent=0 // pred_fallthru
    _
  %v22 = vld [vmem:[#allocation2] sm:$0xff]
  %v23 = vld [vmem:[#allocation2 + $0x8] sm:$0xff]
  %v24 = vld [vmem:[%s0] sm:$0xf]
  %v25 = vld [vmem:[%s0 + $0x4] sm:$0xf]
  %v26 = vld [vmem:[%s1] sm:$0xf]
  %v27 = vld [vmem:[%s1 + $0x4] sm:$0xf]
  %v28 = vld [vmem:[%s1 + $0x8] sm:$0xf]
  %v29 = vld [vmem:[%s1 + $0xc] sm:$0xf]
  %v32 = vunpack.c.l.b16 %v24
  %v33 = vunpack.c.l.b16 %v25
  %v34 = vpack.c.b16 %v33, %v32
  %v39 = vunpack.c.l.b16 %v26
  %v40 = vunpack.c.l.b16 %v27
  %v41 = vunpack.c.l.b16 %v28
  %v42 = vunpack.c.l.b16 %v29
  %v43 = vpack.c.b16 %v40, %v39
  %v44 = vpack.c.b16 %v42, %v41
  %vm47 = vcmask 261120
  %v49 = vsel %vm47, %v34, 0
  %51 = vmatprep.subr.bf16.mxu0 0
  %52 = vmatpush1.bf16.msra.mxu0 %v43
  %53 = vmatprep.subr.bf16.mxu0 0
  %54 = vmatpush1.bf16.msra.mxu0 %v44
  %55 = vmatprep.subr.bf16.mxu0 0
  %56 = vmatpush1.bf16.msra.mxu0 0
  %57 = vmatprep.subr.bf16.mxu0 0
  %58 = vmatpush1.bf16.msra.mxu0 0
  %59 = vmatprep.subr.bf16.mxu0 0
  %60 = vmatpush1.bf16.msra.mxu0 0
  %61 = vmatprep.subr.bf16.mxu0 0
  %62 = vmatpush1.bf16.msra.mxu0 0
  %63 = vmatprep.subr.bf16.mxu0 0
  %64 = vmatpush1.bf16.msra.mxu0 0
  %65 = vmatprep.subr.bf16.mxu0 0
  %66 = vmatpush1.bf16.msra.mxu0 0
  %67 = vmatprep.subr.bf16.mxu0 0
  %68 = vmatpush1.bf16.msra.mxu0 0
  %69 = vmatprep.subr.bf16.mxu0 0
  %70 = vmatpush1.bf16.msra.mxu0 0
  %71 = vmatprep.subr.bf16.mxu0 0
  %72 = vmatpush1.bf16.msra.mxu0 0
  %73 = vmatprep.subr.bf16.mxu0 0
  %74 = vmatpush1.bf16.msra.mxu0 0
  %75 = vmatprep.subr.bf16.mxu0 0
  %76 = vmatpush1.bf16.msra.mxu0 0
  %77 = vmatprep.subr.bf16.mxu0 0
  %78 = vmatpush1.bf16.msra.mxu0 0
  %79 = vmatprep.subr.bf16.mxu0 0
  %80 = vmatpush1.bf16.msra.mxu0 0
  %81 = vmatprep.subr.bf16.mxu0 0
  %82 = vmatpush1.bf16.msra.mxu0 0
  %83 = vmatprep.mubr.bf16.mxu0 0
  %84 = vmatmul.mubr.bf16.gmra.mrb[0].mxu0 %v49
  %v85 = vpop.f32.mrb[0].mxu0
  %v86 = vadd.f32 0.0, %v85
  %v87 = vpop.f32.mrb[0].mxu0
  %v88 = vpop.f32.mrb[0].mxu0
  %v89 = vadd.f32 0.0, %v88
  %v90 = vpop.f32.mrb[0].mxu0
  %91 = vdwg.mxu0
  %v92 = vadd.f32 %v22, %v86
  %v93 = vadd.f32 %v23, %v89
  %vm94 = vcmask 523264
  %95 = vst.msk [vmem:[#allocation2] sm:$0xff] %vm94, %v92
  %96 = vst.msk [vmem:[#allocation2 + $0x8] sm:$0xff] %vm94, %v93
  // Predicated region
  $region18: #{vanilla_transformer_forward.52} parent=0 // pred_check
    %p97 = pneg %p15
  $region19: #{vanilla_transformer_forward.52} parent=0 // pred_check_branch
    %99 = sbr.rel (%p97) target = $region21
  $region20: #{vanilla_transformer_forward.52} parent=0 // pred_region
    %v100 = vld [vmem:[#allocation2] sm:$0xff]
    %v101 = vld [vmem:[#allocation2 + $0x8] sm:$0xff]
    %v102 = vld [vmem:[%s2] sm:$0x1]
    %v104 = vlaneseq
    %v105 = vshrl.u32 %v104, 7
    %v106 = vsub.s32 0, %v105
    %v107 = vrot.slane %v102, %v106
    %v109 = vadd.f32 %v100, %v107
    %v110 = vadd.f32 %v101, %v107
    %v111 = vpack.c.bf16 %v110, %v109
    %v113 = vunpack.c.l.b16 %v111
    %v114 = vunpack.c.h.b16 %v111
    %v115 = vpack.c.b16 %v113, %v113
    %v116 = vpack.c.b16 %v114, %v114
    %vm119 = vcmask 519168
    %120 = vst.msk [vmem:[%s3] sm:$0xf] %vm119, %v115
    %121 = vst.msk [vmem:[%s3 + $0x4] sm:$0xf] %vm119, %v116
  $region21: #{vanilla_transformer_forward.52} parent=0 // pred_fallthru
    _
  // Predicated region
  $region22: #{vanilla_transformer_forward.52} parent=0 // pred_check
    _
  $region23: #{vanilla_transformer_forward.52} parent=0 // pred_check_branch
    %123 = sbr.rel (0) target = $region25
  $region24: #{vanilla_transformer_forward.52} parent=0 // pred_region
    _
  $region25: #{vanilla_transformer_forward.52} parent=0 // pred_fallthru
    _
  // Predicated region
  $region26: #{vanilla_transformer_forward.52} parent=0 // pred_check
    _
  $region27: #{vanilla_transformer_forward.52} parent=0 // pred_check_branch
    %125 = sbr.rel (0) target = $region29
  $region28: #{vanilla_transformer_forward.52} parent=0 // pred_region
    _
  $region29: #{vanilla_transformer_forward.52} parent=0 // pred_fallthru
    _

// kernel: vanilla_transformer_forward.69
$region0: #{vanilla_transformer_forward.69}
  #allocation0 [shape = 'u32[]', space=smem, size = 0x4, offset = 0x4, fixed_abs, tag = 'smem constant byte address 0x4 - core index']
  #allocation1 [shape = 'u32[144,128]{1,0:T(1,128)}', space=vmem, size = 0x12000, scoped, tag = 'internal scratch']
  #allocation2 [shape = 'f32[16,40]{1,0:T(8,128)}', space=vmem, size = 0x2000, scoped, tag = 'scratch operand']
  %s0 = inlined_call_operand.vmem [shape: bf16[16,32], index: 0, kind: input, shape index: {}]
  %s1 = inlined_call_operand.vmem [shape: bf16[32,40], index: 1, kind: input, shape index: {}]
  %s2 = inlined_call_operand.vmem [shape: f32[1,40], index: 2, kind: input, shape index: {}]
  %s3 = inlined_call_operand.hbm [shape: f32[16,40], index: 3, kind: output, shape index: {}]
  %s4 = sld [smem:[#allocation0]]
  $region30: #{vanilla_transformer_forward.69} parent=0
    _
  %s6 = ssub.s32 1, %s4
  %s7 = scalar_select 0, %s6, %s4
  $region1: #{vanilla_transformer_forward.69} parent=0
    #allocation3 [shape = 'u8[8192]{0}', space=vmem, size = 0x2000, scoped, tag = 'output window, operand 0, single buffered']
    #allocation4 [shape = 's32[1]{0}', space=sflag, size = 0x4, scoped, tag = 'scoped memory for vanilla_transformer_forward.69']
    %8 = vsyncpa [#allocation4], 0
    // Predicated region
    $region2: #{vanilla_transformer_forward.69} parent=1 // pred_check
      _
    $region3: #{vanilla_transformer_forward.69} parent=1 // pred_check_branch
      %10 = sbr.rel (0) target = $region5
    $region4: #{vanilla_transformer_forward.69} parent=1 // pred_region
      _
    $region5: #{vanilla_transformer_forward.69} parent=1 // pred_fallthru
      _
    // Predicated region
    $region6: #{vanilla_transformer_forward.69} parent=1 // pred_check
      _
    $region7: #{vanilla_transformer_forward.69} parent=1 // pred_check_branch
      %12 = sbr.rel (0) target = $region9
    $region8: #{vanilla_transformer_forward.69} parent=1 // pred_region
      _
    $region9: #{vanilla_transformer_forward.69} parent=1 // pred_fallthru
      _
    // Predicated region
    $region10: #{vanilla_transformer_forward.69} parent=1 // pred_check
      _
    $region11: #{vanilla_transformer_forward.69} parent=1 // pred_check_branch
      %14 = sbr.rel (0) target = $region13
    $region12: #{vanilla_transformer_forward.69} parent=1 // pred_region
      _
    $region13: #{vanilla_transformer_forward.69} parent=1 // pred_fallthru
      _
    %p16 = scmp.eq.s32.totalorder 0, 0
    // Predicated region
    $region14: #{vanilla_transformer_forward.69} parent=1 // pred_check
      %p17 = pneg %p16
    $region15: #{vanilla_transformer_forward.69} parent=1 // pred_check_branch
      %19 = sbr.rel (%p17) target = $region17
    $region16: #{vanilla_transformer_forward.69} parent=1 // pred_region
      %vm20 = vcmask 326656
      %21 = vst.msk [vmem:[#allocation2] sm:$0xff] %vm20, 0.0
      %22 = vst.msk [vmem:[#allocation2 + $0x8] sm:$0xff] %vm20, 0.0
    $region17: #{vanilla_transformer_forward.69} parent=1 // pred_fallthru
      _
    %v23 = vld [vmem:[#allocation2] sm:$0xff]
    %v24 = vld [vmem:[#allocation2 + $0x8] sm:$0xff]
    %v25 = vld [vmem:[%s0] sm:$0xf]
    %v26 = vld [vmem:[%s0 + $0x4] sm:$0xf]
    %v27 = vld [vmem:[%s1] sm:$0xf]
    %v28 = vld [vmem:[%s1 + $0x4] sm:$0xf]
    %v29 = vld [vmem:[%s1 + $0x8] sm:$0xf]
    %v30 = vld [vmem:[%s1 + $0xc] sm:$0xf]
    %v33 = vunpack.c.l.b16 %v25
    %v34 = vunpack.c.l.b16 %v26
    %v35 = vpack.c.b16 %v34, %v33
    %v40 = vunpack.c.l.b16 %v27
    %v41 = vunpack.c.l.b16 %v28
    %v42 = vunpack.c.l.b16 %v29
    %v43 = vunpack.c.l.b16 %v30
    %v44 = vpack.c.b16 %v41, %v40
    %v45 = vpack.c.b16 %v43, %v42
    %vm48 = vcmask 261120
    %v50 = vsel %vm48, %v35, 0
    %52 = vmatprep.subr.bf16.mxu0 0
    %53 = vmatpush1.bf16.msra.mxu0 %v44
    %54 = vmatprep.subr.bf16.mxu0 0
    %55 = vmatpush1.bf16.msra.mxu0 %v45
    %56 = vmatprep.subr.bf16.mxu0 0
    %57 = vmatpush1.bf16.msra.mxu0 0
    %58 = vmatprep.subr.bf16.mxu0 0
    %59 = vmatpush1.bf16.msra.mxu0 0
    %60 = vmatprep.subr.bf16.mxu0 0
    %61 = vmatpush1.bf16.msra.mxu0 0
    %62 = vmatprep.subr.bf16.mxu0 0
    %63 = vmatpush1.bf16.msra.mxu0 0
    %64 = vmatprep.subr.bf16.mxu0 0
    %65 = vmatpush1.bf16.msra.mxu0 0
    %66 = vmatprep.subr.bf16.mxu0 0
    %67 = vmatpush1.bf16.msra.mxu0 0
    %68 = vmatprep.subr.bf16.mxu0 0
    %69 = vmatpush1.bf16.msra.mxu0 0
    %70 = vmatprep.subr.bf16.mxu0 0
    %71 = vmatpush1.bf16.msra.mxu0 0
    %72 = vmatprep.subr.bf16.mxu0 0
    %73 = vmatpush1.bf16.msra.mxu0 0
    %74 = vmatprep.subr.bf16.mxu0 0
    %75 = vmatpush1.bf16.msra.mxu0 0
    %76 = vmatprep.subr.bf16.mxu0 0
    %77 = vmatpush1.bf16.msra.mxu0 0
    %78 = vmatprep.subr.bf16.mxu0 0
    %79 = vmatpush1.bf16.msra.mxu0 0
    %80 = vmatprep.subr.bf16.mxu0 0
    %81 = vmatpush1.bf16.msra.mxu0 0
    %82 = vmatprep.subr.bf16.mxu0 0
    %83 = vmatpush1.bf16.msra.mxu0 0
    %84 = vmatprep.mubr.bf16.mxu0 0
    %85 = vmatmul.mubr.bf16.gmra.mrb[0].mxu0 %v50
    %v86 = vpop.f32.mrb[0].mxu0
    %v87 = vadd.f32 0.0, %v86
    %v88 = vpop.f32.mrb[0].mxu0
    %v89 = vpop.f32.mrb[0].mxu0
    %v90 = vadd.f32 0.0, %v89
    %v91 = vpop.f32.mrb[0].mxu0
    %92 = vdwg.mxu0
    %v93 = vadd.f32 %v23, %v87
    %v94 = vadd.f32 %v24, %v90
    %vm95 = vcmask 326656
    %96 = vst.msk [vmem:[#allocation2] sm:$0xff] %vm95, %v93
    %97 = vst.msk [vmem:[#allocation2 + $0x8] sm:$0xff] %vm95, %v94
    // Predicated region
    $region18: #{vanilla_transformer_forward.69} parent=1 // pred_check
      %p98 = pneg %p16
    $region19: #{vanilla_transformer_forward.69} parent=1 // pred_check_branch
      %100 = sbr.rel (%p98) target = $region21
    $region20: #{vanilla_transformer_forward.69} parent=1 // pred_region
      %v101 = vld [vmem:[#allocation2] sm:$0xff]
      %v102 = vld [vmem:[#allocation2 + $0x8] sm:$0xff]
      %v103 = vld [vmem:[%s2] sm:$0x1]
      %v105 = vlaneseq
      %v106 = vshrl.u32 %v105, 7
      %v107 = vsub.s32 0, %v106
      %v108 = vrot.slane %v103, %v107
      %v110 = vadd.f32 %v101, %v108
      %v111 = vadd.f32 %v102, %v108
      %112 = vst.msk [vmem:[#allocation3] sm:$0xff] %vm95, %v110
      %113 = vst.msk [vmem:[#allocation3 + $0x8] sm:$0xff] %vm95, %v111
    $region21: #{vanilla_transformer_forward.69} parent=1 // pred_fallthru
      _
    // Predicated region
    $region22: #{vanilla_transformer_forward.69} parent=1 // pred_check
      _
    $region23: #{vanilla_transformer_forward.69} parent=1 // pred_check_branch
      %115 = sbr.rel (0) target = $region25
    $region24: #{vanilla_transformer_forward.69} parent=1 // pred_region
      %s117 = ssub.s32 256, 256
      %118 = vsyncadd [#allocation4], %s117
      %s119 = sshll.u32 [#allocation3], 4
      %s120 = int_to_ptr.vmem [resolvable:$true] %s119
      %125 = dma.vmem_to_hbm [thread:$0]  %s120, 256, %s3, [#allocation4], 128, 128, 8
    $region25: #{vanilla_transformer_forward.69} parent=1 // pred_fallthru
      _
    // Predicated region
    $region26: #{vanilla_transformer_forward.69} parent=1 // pred_check
      _
    $region27: #{vanilla_transformer_forward.69} parent=1 // pred_check_branch
      %127 = sbr.rel (0) target = $region29
    $region28: #{vanilla_transformer_forward.69} parent=1 // pred_region
      %128 = dma.done [#allocation4], 256
    $region29: #{vanilla_transformer_forward.69} parent=1 // pred_fallthru
      _
    %129 = vsyncpa [#allocation4], 1

</llo_original>
